<compile_context>
chip_gen: v5e
topology: v5e:2x2
jax: 0.10.0
libtpu: 0.0.40
codegen_flags: <defaults>
</compile_context>

<pallas_src>
import functools

import jax
import jax.numpy as jnp
from jax.experimental import pallas as pl
from jax.experimental.pallas import tpu as pltpu


def _round_up(n, m=128):
    return ((n + m - 1) // m) * m


# -----------------------------------------------------------------------------
# Fused encoder kernel: 2-layer GRU recurrence + dense head + variational sampler.
# -----------------------------------------------------------------------------
def encoder_kernel(gi0_ref, whh_ref, wih1_ref, bih1_ref, bhn0_ref, bhn1_ref,
                   w1_ref, b1_ref, w2_ref, b2_ref, wmv_ref, bmv_ref, eps_ref,
                   mean_ref, logvar_ref, z_ref,
                   *, T, Bp, Hp, Lp):
    f32, bf16 = jnp.float32, jnp.bfloat16
    H2, H3 = 2 * Hp, 3 * Hp

    # Hoist loop-invariant weight loads and bias broadcasts out of the time
    # loop (JAX does not CSE broadcast_in_dim).
    whh = whh_ref[...]                                       # (2Hp, 6Hp) bf16
    wih1 = wih1_ref[...]                                     # (Hp, 3Hp)  bf16
    bih1 = jnp.broadcast_to(bih1_ref[...], (Bp, H3))         # b_ih1 + b_hh1[r,z]
    bhn0 = jnp.broadcast_to(bhn0_ref[...], (Bp, Hp))         # b_hh0[n]
    bhn1 = jnp.broadcast_to(bhn1_ref[...], (Bp, Hp))         # b_hh1[n]

    def gru_update(gi, gh, bhn, h_prev):
        # gi already contains b_ih (+ b_hh for the r/z slabs); gh is the raw
        # h @ W_hh product.  One sigmoid covers both r and z slabs; slices at
        # 128-lane boundaries are free.
        rz = jax.nn.sigmoid(gi[:, :H2] + gh[:, :H2])
        r, z = rz[:, :Hp], rz[:, Hp:]
        n = jnp.tanh(gi[:, H2:] + r * (gh[:, H2:] + bhn))
        return (1.0 - z) * n + z * h_prev

    def step(t, h01):
        # One fused hidden-to-hidden matmul for BOTH layers (block-diagonal
        # RHS): gh0 and gh1 depend only on the previous step's state.
        gh = jnp.dot(h01.astype(bf16), whh, preferred_element_type=f32)   # (Bp, 6Hp)
        h0 = gru_update(gi0_ref[t], gh[:, :H3], bhn0, h01[:, :Hp])
        gi1 = jnp.dot(h0.astype(bf16), wih1, preferred_element_type=f32) + bih1
        h1 = gru_update(gi1, gh[:, H3:], bhn1, h01[:, Hp:])
        return jnp.concatenate([h0, h1], axis=-1)                          # (Bp, 2Hp)

    h01 = jnp.zeros((Bp, H2), f32)
    if T <= 32:
        # Small T: static unroll -> full LLO scheduling visibility.
        for t in range(T):
            h01 = step(t, h01)
    else:
        # Large T: keep vreg live ranges bounded; gi0 is read per-step from VMEM.
        h01 = jax.lax.fori_loop(0, T, step, h01)

    # Fused dense head (eval-mode dropout = identity) + reparameterization.
    # [mean | logvar] come out of one matmul, split at lane Lp.
    d = jnp.dot(h01.astype(bf16), w1_ref[...], preferred_element_type=f32) + b1_ref[...]
    d = jnp.maximum(d, 0.0)
    d = jnp.dot(d.astype(bf16), w2_ref[...], preferred_element_type=f32) + b2_ref[...]
    d = jnp.maximum(d, 0.0)
    mv = jnp.dot(d.astype(bf16), wmv_ref[...], preferred_element_type=f32) + bmv_ref[...]
    mean, logvar = mv[:, :Lp], mv[:, Lp:]
    z = mean + jnp.exp(0.5 * logvar) * eps_ref[...]

    # Lane-dense (Bp, Lp=128) outputs -> unmasked vector stores.
    mean_ref[...] = mean
    logvar_ref[...] = logvar
    z_ref[...] = z


def run_encoder(gi0, pp, eps_p, *, T, Bp, Hp, Lp):
    out = jax.ShapeDtypeStruct((Bp, Lp), jnp.float32)
    vmem = pl.BlockSpec(memory_space=pltpu.MemorySpace.VMEM)
    kernel = functools.partial(encoder_kernel, T=T, Bp=Bp, Hp=Hp, Lp=Lp)
    return pl.pallas_call(
        kernel,
        out_shape=(out, out, out),
        in_specs=[vmem] * 13,
        out_specs=(vmem, vmem, vmem),
    )(gi0, pp["whh_bd"], pp["wih1"], pp["bih1"], pp["bhn0"], pp["bhn1"],
      pp["w1"], pp["b1"], pp["w2"], pp["b2"], pp["wmv"], pp["bmv"], eps_p)


# -----------------------------------------------------------------------------
# Parameter init (deterministic, synthetic — shapes match nn.Module __init__).
# Weights stored as (in_dim, out_dim); biases as (1, out_dim).
# -----------------------------------------------------------------------------
def init_params(key, L, hidden_size, alphabet_len, embedding_dim):
    H, E = hidden_size, embedding_dim
    keys = jax.random.split(key, 20)
    u = lambda k, shape, bound: jax.random.uniform(  # noqa: E731
        k, shape, jnp.float32, -bound, bound)
    bH = 1.0 / jnp.sqrt(H)
    b2H = 1.0 / jnp.sqrt(2.0 * H)
    bL = 1.0 / jnp.sqrt(L)
    return {
        "embed": jax.random.normal(keys[0], (alphabet_len, E), jnp.float32),
        # GRU layer 0
        "w_ih0": u(keys[1], (E, 3 * H), bH),
        "w_hh0": u(keys[2], (H, 3 * H), bH),
        "b_ih0": u(keys[3], (1, 3 * H), bH),
        "b_hh0": u(keys[4], (1, 3 * H), bH),
        # GRU layer 1
        "w_ih1": u(keys[5], (H, 3 * H), bH),
        "w_hh1": u(keys[6], (H, 3 * H), bH),
        "b_ih1": u(keys[7], (1, 3 * H), bH),
        "b_hh1": u(keys[8], (1, 3 * H), bH),
        # dense: Linear(2H, 2H) -> ReLU -> Linear(2H, L) -> ReLU
        "dense1_w": u(keys[9], (2 * H, 2 * H), b2H),
        "dense1_b": u(keys[10], (1, 2 * H), b2H),
        "dense2_w": u(keys[11], (2 * H, L), b2H),
        "dense2_b": u(keys[12], (1, L), b2H),
        # heads
        "zmean_w": u(keys[13], (L, L), bL),
        "zmean_b": u(keys[14], (1, L), bL),
        "zlogvar_w": u(keys[15], (L, L), bL),
        "zlogvar_b": u(keys[16], (1, L), bL),
    }


# -----------------------------------------------------------------------------
# One-time layout prep: pad every gate / head feature axis to 128-lane slabs,
# fold embed@W_ih0 (+ biases) into a gather table, build the block-diagonal
# hidden-to-hidden weight, fuse the mean/logvar head, cast MXU operands to bf16.
# -----------------------------------------------------------------------------
def _zero_pad2d(a, rows, cols):
    out = jnp.zeros((rows, cols), jnp.float32)
    return out.at[:a.shape[0], :a.shape[1]].set(a.astype(jnp.float32))


def _pad_gate_cols(w, H, Hp):
    """(rows, 3H) -> (rows, 3Hp): each gate gets its own 128-lane slab."""
    rows = w.shape[0]
    out = jnp.zeros((rows, 3 * Hp), jnp.float32)
    for g in range(3):
        out = out.at[:, g * Hp:g * Hp + H].set(
            w[:, g * H:(g + 1) * H].astype(jnp.float32))
    return out


def pad_params(params, L, hidden_size):
    H = hidden_size
    Hp, Lp, Dp = _round_up(H), _round_up(L), _round_up(2 * H)
    f32, bf16 = jnp.float32, jnp.bfloat16
    hi = jax.lax.Precision.HIGHEST

    # ---- layer 0: fold embedding with the input projection into a gather
    # table; also fold b_ih0 and the r/z parts of b_hh0 (the n part of b_hh is
    # multiplied by r, so it must stay separate).
    bhh0 = params["b_hh0"].astype(f32)
    gi0_tab = (jnp.dot(params["embed"].astype(f32), params["w_ih0"].astype(f32),
                       precision=hi)
               + params["b_ih0"].astype(f32))                       # (A, 3H)
    gi0_tab = _pad_gate_cols(gi0_tab, H, Hp)                        # (A, 3Hp)
    gi0_tab = gi0_tab + _pad_gate_cols(bhh0.at[:, 2 * H:].set(0.0), H, Hp)
    bhn0 = jnp.zeros((1, Hp), f32).at[:, :H].set(bhh0[:, 2 * H:])

    # ---- fused block-diagonal hidden-to-hidden weight: gh = [h0|h1] @ W_bd.
    whh0_p = _pad_gate_cols(params["w_hh0"].astype(f32), H, Hp)     # (H, 3Hp)
    whh1_p = _pad_gate_cols(params["w_hh1"].astype(f32), H, Hp)
    whh_bd = jnp.zeros((2 * Hp, 6 * Hp), f32)
    whh_bd = whh_bd.at[:H, :3 * Hp].set(whh0_p)
    whh_bd = whh_bd.at[Hp:Hp + H, 3 * Hp:].set(whh1_p)

    # ---- layer 1 input projection (input = padded h0); fold b_ih1 + b_hh1[r,z].
    bhh1 = params["b_hh1"].astype(f32)
    wih1_p = jnp.zeros((Hp, 3 * Hp), f32).at[:H].set(
        _pad_gate_cols(params["w_ih1"].astype(f32), H, Hp))
    bih1_f = (_pad_gate_cols(params["b_ih1"].astype(f32), H, Hp)
              + _pad_gate_cols(bhh1.at[:, 2 * H:].set(0.0), H, Hp))
    bhn1 = jnp.zeros((1, Hp), f32).at[:, :H].set(bhh1[:, 2 * H:])

    # ---- head: dense1 against the lane-concat [h0|h1] layout (h0 in lanes
    # 0:H of the first Hp slab, h1 in lanes Hp:Hp+H).
    w1 = jnp.zeros((2 * Hp, Dp), f32)
    w1 = w1.at[:H, :2 * H].set(params["dense1_w"][:H].astype(f32))
    w1 = w1.at[Hp:Hp + H, :2 * H].set(params["dense1_w"][H:].astype(f32))
    b1 = _zero_pad2d(params["dense1_b"], 1, Dp)
    w2 = _zero_pad2d(params["dense2_w"], Dp, Lp)
    b2 = _zero_pad2d(params["dense2_b"], 1, Lp)
    # fused [mean | logvar] head, split at lane Lp in-kernel.
    wmv = jnp.zeros((Lp, 2 * Lp), f32)
    wmv = wmv.at[:L, :L].set(params["zmean_w"].astype(f32))
    wmv = wmv.at[:L, Lp:Lp + L].set(params["zlogvar_w"].astype(f32))
    bmv = jnp.zeros((1, 2 * Lp), f32)
    bmv = bmv.at[:, :L].set(params["zmean_b"].astype(f32))
    bmv = bmv.at[:, Lp:Lp + L].set(params["zlogvar_b"].astype(f32))

    return {
        "gi0_table": gi0_tab,                  # f32: feeds gate math directly
        "whh_bd": whh_bd.astype(bf16),         # bf16 MXU operands
        "wih1": wih1_p.astype(bf16),
        "bih1": bih1_f, "bhn0": bhn0, "bhn1": bhn1,
        "w1": w1.astype(bf16), "b1": b1,
        "w2": w2.astype(bf16), "b2": b2,
        "wmv": wmv.astype(bf16), "bmv": bmv,
    }


# -----------------------------------------------------------------------------
# Forward wrapper: time-major gather of the pre-projected layer-0 gates
# (no activation transpose, no in-kernel input matmul) + fused kernel.
# -----------------------------------------------------------------------------
@functools.partial(jax.jit, static_argnames=("L",))
def encoder_forward(idx, pp, epsilon, L):
    B, T = idx.shape
    H3 = pp["gi0_table"].shape[1]
    Hp = H3 // 3
    Lp = pp["wmv"].shape[0]
    Bp = _round_up(B, 8)   # sublane-align the batch so gi0_ref[t] is a free read
    # Row (t, b) of gi0 = gi0_table[idx[b, t]]  (embedding + W_ih0 + biases folded).
    flat_idx = jnp.reshape(jnp.transpose(idx), (-1,))
    gi0 = jnp.take(pp["gi0_table"], flat_idx, axis=0).reshape(T, B, H3)
    gi0 = jnp.pad(gi0, ((0, 0), (0, Bp - B), (0, 0)))       # zero rows -> h stays 0
    eps_p = jnp.zeros((Bp, Lp), jnp.float32).at[:B, :L].set(epsilon)
    mean_p, logvar_p, z_p = run_encoder(gi0, pp, eps_p, T=T, Bp=Bp, Hp=Hp, Lp=Lp)
    return mean_p[:B, :L], logvar_p[:B, :L], z_p[:B, :L]


# -----------------------------------------------------------------------------
# Pure-JAX reference (unpadded params, HIGHEST precision) for correctness check.
# -----------------------------------------------------------------------------
def encoder_reference(idx, params, epsilon, L, hidden_size):
    H = hidden_size
    hi = jax.lax.Precision.HIGHEST
    x = jnp.take(params["embed"], idx, axis=0).astype(jnp.float32)  # (B, T, E)
    B, T, _ = x.shape

    def cell(x_t, h, w_ih, w_hh, b_ih, b_hh):
        gi = jnp.dot(x_t, w_ih, precision=hi) + b_ih
        gh = jnp.dot(h, w_hh, precision=hi) + b_hh
        r = jax.nn.sigmoid(gi[:, :H] + gh[:, :H])
        z = jax.nn.sigmoid(gi[:, H:2 * H] + gh[:, H:2 * H])
        n = jnp.tanh(gi[:, 2 * H:] + r * gh[:, 2 * H:])
        return (1.0 - z) * n + z * h

    h0 = jnp.zeros((B, H), jnp.float32)
    h1 = jnp.zeros((B, H), jnp.float32)
    for t in range(T):
        h0 = cell(x[:, t, :], h0, params["w_ih0"], params["w_hh0"],
                  params["b_ih0"], params["b_hh0"])
        h1 = cell(h0, h1, params["w_ih1"], params["w_hh1"],
                  params["b_ih1"], params["b_hh1"])
    hid = jnp.concatenate([h0, h1], axis=-1)
    d = jnp.maximum(jnp.dot(hid, params["dense1_w"], precision=hi)
                    + params["dense1_b"], 0.0)
    d = jnp.maximum(jnp.dot(d, params["dense2_w"], precision=hi)
                    + params["dense2_b"], 0.0)
    mean = jnp.dot(d, params["zmean_w"], precision=hi) + params["zmean_b"]
    logvar = jnp.dot(d, params["zlogvar_w"], precision=hi) + params["zlogvar_b"]
    z = mean + jnp.exp(0.5 * logvar) * epsilon
    return mean, logvar, z


if __name__ == "__main__":
    # Small shapes consistent with the module.
    B, T = 2, 8
    L, hidden_size, alphabet_len, embedding_dim = 16, 32, 32, 8

    root = jax.random.PRNGKey(0)
    k_params, k_idx, k_eps = jax.random.split(root, 3)

    params = init_params(k_params, L, hidden_size, alphabet_len, embedding_dim)
    idx = jax.random.randint(k_idx, (B, T), 0, alphabet_len, dtype=jnp.int32)
    eps = jax.random.normal(k_eps, (B, L), jnp.float32)

    padded = pad_params(params, L, hidden_size)

    mean, logvar, z = encoder_forward(idx, padded, eps, L)
    jax.block_until_ready((mean, logvar, z))

    assert mean.shape == (B, L) and logvar.shape == (B, L) and z.shape == (B, L)
    assert (bool(jnp.all(jnp.isfinite(mean))) and bool(jnp.all(jnp.isfinite(logvar)))
            and bool(jnp.all(jnp.isfinite(z))))

    # Correctness check against the pure-JAX reference.  The kernel uses bf16
    # MXU operands (f32 accumulation + f32 gate math): expected worst-case abs
    # error at these shapes is ~1e-2; structural/wiring bugs produce O(1)
    # errors, so 5e-2 still discriminates.
    mean_r, logvar_r, z_r = encoder_reference(idx, params, eps, L, hidden_size)
    err = max(float(jnp.max(jnp.abs(mean - mean_r))),
              float(jnp.max(jnp.abs(logvar - logvar_r))),
              float(jnp.max(jnp.abs(z - z_r))))
    assert err < 5e-2, f"max abs diff vs reference too large: {err}"

    print("KERNEL_OK")
</pallas_src>

<mosaic_0001>
module attributes {stable_mosaic.version = 11 : i64} {
  func.func @encoder_kernel(%arg0: memref<8x8x384xf32, #tpu.memory_space<vmem>>, %arg1: memref<256x768xbf16, #tpu.memory_space<vmem>>, %arg2: memref<128x384xbf16, #tpu.memory_space<vmem>>, %arg3: memref<1x384xf32, #tpu.memory_space<vmem>>, %arg4: memref<1x128xf32, #tpu.memory_space<vmem>>, %arg5: memref<1x128xf32, #tpu.memory_space<vmem>>, %arg6: memref<256x128xbf16, #tpu.memory_space<vmem>>, %arg7: memref<1x128xf32, #tpu.memory_space<vmem>>, %arg8: memref<128x128xbf16, #tpu.memory_space<vmem>>, %arg9: memref<1x128xf32, #tpu.memory_space<vmem>>, %arg10: memref<128x256xbf16, #tpu.memory_space<vmem>>, %arg11: memref<1x256xf32, #tpu.memory_space<vmem>>, %arg12: memref<8x128xf32, #tpu.memory_space<vmem>>, %arg13: memref<8x128xf32, #tpu.memory_space<vmem>>, %arg14: memref<8x128xf32, #tpu.memory_space<vmem>>, %arg15: memref<8x128xf32, #tpu.memory_space<vmem>>) attributes {dimension_semantics = [], scalar_prefetch = 0 : i64, scratch_operands = 0 : i64, tpu.core_type = #tpu.core_type<tc>} {
    %c0 = arith.constant 0 : index
    %c0_0 = arith.constant 0 : index
    %0 = vector.load %arg1[%c0, %c0_0] : memref<256x768xbf16, #tpu.memory_space<vmem>>, vector<256x768xbf16>
    %c0_1 = arith.constant 0 : index
    %c0_2 = arith.constant 0 : index
    %1 = vector.load %arg2[%c0_1, %c0_2] : memref<128x384xbf16, #tpu.memory_space<vmem>>, vector<128x384xbf16>
    %c0_3 = arith.constant 0 : index
    %c0_4 = arith.constant 0 : index
    %2 = vector.load %arg3[%c0_3, %c0_4] : memref<1x384xf32, #tpu.memory_space<vmem>>, vector<1x384xf32>
    %3 = vector.shape_cast %2 : vector<1x384xf32> to vector<1x384xf32>
    %4 = vector.broadcast %3 : vector<1x384xf32> to vector<8x384xf32>
    %c0_5 = arith.constant 0 : index
    %c0_6 = arith.constant 0 : index
    %5 = vector.load %arg4[%c0_5, %c0_6] : memref<1x128xf32, #tpu.memory_space<vmem>>, vector<1x128xf32>
    %6 = vector.shape_cast %5 : vector<1x128xf32> to vector<1x128xf32>
    %7 = vector.broadcast %6 : vector<1x128xf32> to vector<8x128xf32>
    %c0_7 = arith.constant 0 : index
    %c0_8 = arith.constant 0 : index
    %8 = vector.load %arg5[%c0_7, %c0_8] : memref<1x128xf32, #tpu.memory_space<vmem>>, vector<1x128xf32>
    %9 = vector.shape_cast %8 : vector<1x128xf32> to vector<1x128xf32>
    %10 = vector.broadcast %9 : vector<1x128xf32> to vector<8x128xf32>
    %cst = arith.constant 0.000000e+00 : f32
    %11 = vector.broadcast %cst : f32 to vector<8x256xf32>
    %12 = arith.truncf %11 : vector<8x256xf32> to vector<8x256xbf16>
    %cst_9 = arith.constant dense<0.000000e+00> : vector<8x768xf32>
    %13 = tpu.matmul %12, %0, %cst_9 {dimension_numbers = #tpu.dot_dimension_numbers<[1], [0], [0], [1], [0, 0, 1, 1], [], []>} : vector<8x256xbf16>, vector<256x768xbf16>, vector<8x768xf32> -> vector<8x768xf32>
    %c0_10 = arith.constant 0 : index
    %c0_11 = arith.constant 0 : index
    %c0_12 = arith.constant 0 : index
    %14 = vector.load %arg0[%c0_10, %c0_11, %c0_12] : memref<8x8x384xf32, #tpu.memory_space<vmem>>, vector<1x8x384xf32>
    %15 = vector.shape_cast %14 : vector<1x8x384xf32> to vector<8x384xf32>
    %16 = vector.extract_strided_slice %13 {offsets = [0, 0], sizes = [8, 384], strides = [1, 1]} : vector<8x768xf32> to vector<8x384xf32>
    %17 = vector.extract_strided_slice %11 {offsets = [0, 0], sizes = [8, 128], strides = [1, 1]} : vector<8x256xf32> to vector<8x128xf32>
    %18 = vector.extract_strided_slice %15 {offsets = [0, 0], sizes = [8, 256], strides = [1, 1]} : vector<8x384xf32> to vector<8x256xf32>
    %19 = vector.extract_strided_slice %16 {offsets = [0, 0], sizes = [8, 256], strides = [1, 1]} : vector<8x384xf32> to vector<8x256xf32>
    %20 = arith.addf %18, %19 : vector<8x256xf32>
    %21 = arith.negf %20 : vector<8x256xf32>
    %22 = math.exp %21 : vector<8x256xf32>
    %cst_13 = arith.constant 1.000000e+00 : f32
    %23 = vector.broadcast %cst_13 : f32 to vector<8x256xf32>
    %24 = arith.addf %23, %22 : vector<8x256xf32>
    %25 = arith.divf %23, %24 : vector<8x256xf32>
    %26 = vector.extract_strided_slice %25 {offsets = [0, 0], sizes = [8, 128], strides = [1, 1]} : vector<8x256xf32> to vector<8x128xf32>
    %27 = vector.extract_strided_slice %25 {offsets = [0, 128], sizes = [8, 128], strides = [1, 1]} : vector<8x256xf32> to vector<8x128xf32>
    %28 = vector.extract_strided_slice %15 {offsets = [0, 256], sizes = [8, 128], strides = [1, 1]} : vector<8x384xf32> to vector<8x128xf32>
    %29 = vector.extract_strided_slice %16 {offsets = [0, 256], sizes = [8, 128], strides = [1, 1]} : vector<8x384xf32> to vector<8x128xf32>
    %30 = arith.addf %29, %7 : vector<8x128xf32>
    %31 = arith.mulf %26, %30 : vector<8x128xf32>
    %32 = arith.addf %28, %31 : vector<8x128xf32>
    %33 = math.tanh %32 : vector<8x128xf32>
    %cst_14 = arith.constant 1.000000e+00 : f32
    %34 = vector.broadcast %cst_14 : f32 to vector<8x128xf32>
    %35 = arith.subf %34, %27 : vector<8x128xf32>
    %36 = arith.mulf %35, %33 : vector<8x128xf32>
    %37 = arith.mulf %27, %17 : vector<8x128xf32>
    %38 = arith.addf %36, %37 : vector<8x128xf32>
    %39 = arith.truncf %38 : vector<8x128xf32> to vector<8x128xbf16>
    %cst_15 = arith.constant dense<0.000000e+00> : vector<8x384xf32>
    %40 = tpu.matmul %39, %1, %cst_15 {dimension_numbers = #tpu.dot_dimension_numbers<[1], [0], [0], [1], [0, 0, 1, 1], [], []>} : vector<8x128xbf16>, vector<128x384xbf16>, vector<8x384xf32> -> vector<8x384xf32>
    %41 = arith.addf %40, %4 : vector<8x384xf32>
    %42 = vector.extract_strided_slice %13 {offsets = [0, 384], sizes = [8, 384], strides = [1, 1]} : vector<8x768xf32> to vector<8x384xf32>
    %43 = vector.extract_strided_slice %11 {offsets = [0, 128], sizes = [8, 128], strides = [1, 1]} : vector<8x256xf32> to vector<8x128xf32>
    %44 = vector.extract_strided_slice %41 {offsets = [0, 0], sizes = [8, 256], strides = [1, 1]} : vector<8x384xf32> to vector<8x256xf32>
    %45 = vector.extract_strided_slice %42 {offsets = [0, 0], sizes = [8, 256], strides = [1, 1]} : vector<8x384xf32> to vector<8x256xf32>
    %46 = arith.addf %44, %45 : vector<8x256xf32>
    %47 = arith.negf %46 : vector<8x256xf32>
    %48 = math.exp %47 : vector<8x256xf32>
    %cst_16 = arith.constant 1.000000e+00 : f32
    %49 = vector.broadcast %cst_16 : f32 to vector<8x256xf32>
    %50 = arith.addf %49, %48 : vector<8x256xf32>
    %51 = arith.divf %49, %50 : vector<8x256xf32>
    %52 = vector.extract_strided_slice %51 {offsets = [0, 0], sizes = [8, 128], strides = [1, 1]} : vector<8x256xf32> to vector<8x128xf32>
    %53 = vector.extract_strided_slice %51 {offsets = [0, 128], sizes = [8, 128], strides = [1, 1]} : vector<8x256xf32> to vector<8x128xf32>
    %54 = vector.extract_strided_slice %41 {offsets = [0, 256], sizes = [8, 128], strides = [1, 1]} : vector<8x384xf32> to vector<8x128xf32>
    %55 = vector.extract_strided_slice %42 {offsets = [0, 256], sizes = [8, 128], strides = [1, 1]} : vector<8x384xf32> to vector<8x128xf32>
    %56 = arith.addf %55, %10 : vector<8x128xf32>
    %57 = arith.mulf %52, %56 : vector<8x128xf32>
    %58 = arith.addf %54, %57 : vector<8x128xf32>
    %59 = math.tanh %58 : vector<8x128xf32>
    %cst_17 = arith.constant 1.000000e+00 : f32
    %60 = vector.broadcast %cst_17 : f32 to vector<8x128xf32>
    %61 = arith.subf %60, %53 : vector<8x128xf32>
    %62 = arith.mulf %61, %59 : vector<8x128xf32>
    %63 = arith.mulf %53, %43 : vector<8x128xf32>
    %64 = arith.addf %62, %63 : vector<8x128xf32>
    %65 = tpu.concatenate %38, %64 in 1 : vector<8x128xf32>, vector<8x128xf32> -> vector<8x256xf32>
    %66 = arith.truncf %65 : vector<8x256xf32> to vector<8x256xbf16>
    %cst_18 = arith.constant dense<0.000000e+00> : vector<8x768xf32>
    %67 = tpu.matmul %66, %0, %cst_18 {dimension_numbers = #tpu.dot_dimension_numbers<[1], [0], [0], [1], [0, 0, 1, 1], [], []>} : vector<8x256xbf16>, vector<256x768xbf16>, vector<8x768xf32> -> vector<8x768xf32>
    %c1 = arith.constant 1 : index
    %c0_19 = arith.constant 0 : index
    %c0_20 = arith.constant 0 : index
    %68 = vector.load %arg0[%c1, %c0_19, %c0_20] : memref<8x8x384xf32, #tpu.memory_space<vmem>>, vector<1x8x384xf32>
    %69 = vector.shape_cast %68 : vector<1x8x384xf32> to vector<8x384xf32>
    %70 = vector.extract_strided_slice %67 {offsets = [0, 0], sizes = [8, 384], strides = [1, 1]} : vector<8x768xf32> to vector<8x384xf32>
    %71 = vector.extract_strided_slice %65 {offsets = [0, 0], sizes = [8, 128], strides = [1, 1]} : vector<8x256xf32> to vector<8x128xf32>
    %72 = vector.extract_strided_slice %69 {offsets = [0, 0], sizes = [8, 256], strides = [1, 1]} : vector<8x384xf32> to vector<8x256xf32>
    %73 = vector.extract_strided_slice %70 {offsets = [0, 0], sizes = [8, 256], strides = [1, 1]} : vector<8x384xf32> to vector<8x256xf32>
    %74 = arith.addf %72, %73 : vector<8x256xf32>
    %75 = arith.negf %74 : vector<8x256xf32>
    %76 = math.exp %75 : vector<8x256xf32>
    %cst_21 = arith.constant 1.000000e+00 : f32
    %77 = vector.broadcast %cst_21 : f32 to vector<8x256xf32>
    %78 = arith.addf %77, %76 : vector<8x256xf32>
    %79 = arith.divf %77, %78 : vector<8x256xf32>
    %80 = vector.extract_strided_slice %79 {offsets = [0, 0], sizes = [8, 128], strides = [1, 1]} : vector<8x256xf32> to vector<8x128xf32>
    %81 = vector.extract_strided_slice %79 {offsets = [0, 128], sizes = [8, 128], strides = [1, 1]} : vector<8x256xf32> to vector<8x128xf32>
    %82 = vector.extract_strided_slice %69 {offsets = [0, 256], sizes = [8, 128], strides = [1, 1]} : vector<8x384xf32> to vector<8x128xf32>
    %83 = vector.extract_strided_slice %70 {offsets = [0, 256], sizes = [8, 128], strides = [1, 1]} : vector<8x384xf32> to vector<8x128xf32>
    %84 = arith.addf %83, %7 : vector<8x128xf32>
    %85 = arith.mulf %80, %84 : vector<8x128xf32>
    %86 = arith.addf %82, %85 : vector<8x128xf32>
    %87 = math.tanh %86 : vector<8x128xf32>
    %cst_22 = arith.constant 1.000000e+00 : f32
    %88 = vector.broadcast %cst_22 : f32 to vector<8x128xf32>
    %89 = arith.subf %88, %81 : vector<8x128xf32>
    %90 = arith.mulf %89, %87 : vector<8x128xf32>
    %91 = arith.mulf %81, %71 : vector<8x128xf32>
    %92 = arith.addf %90, %91 : vector<8x128xf32>
    %93 = arith.truncf %92 : vector<8x128xf32> to vector<8x128xbf16>
    %cst_23 = arith.constant dense<0.000000e+00> : vector<8x384xf32>
    %94 = tpu.matmul %93, %1, %cst_23 {dimension_numbers = #tpu.dot_dimension_numbers<[1], [0], [0], [1], [0, 0, 1, 1], [], []>} : vector<8x128xbf16>, vector<128x384xbf16>, vector<8x384xf32> -> vector<8x384xf32>
    %95 = arith.addf %94, %4 : vector<8x384xf32>
    %96 = vector.extract_strided_slice %67 {offsets = [0, 384], sizes = [8, 384], strides = [1, 1]} : vector<8x768xf32> to vector<8x384xf32>
    %97 = vector.extract_strided_slice %65 {offsets = [0, 128], sizes = [8, 128], strides = [1, 1]} : vector<8x256xf32> to vector<8x128xf32>
    %98 = vector.extract_strided_slice %95 {offsets = [0, 0], sizes = [8, 256], strides = [1, 1]} : vector<8x384xf32> to vector<8x256xf32>
    %99 = vector.extract_strided_slice %96 {offsets = [0, 0], sizes = [8, 256], strides = [1, 1]} : vector<8x384xf32> to vector<8x256xf32>
    %100 = arith.addf %98, %99 : vector<8x256xf32>
    %101 = arith.negf %100 : vector<8x256xf32>
    %102 = math.exp %101 : vector<8x256xf32>
    %cst_24 = arith.constant 1.000000e+00 : f32
    %103 = vector.broadcast %cst_24 : f32 to vector<8x256xf32>
    %104 = arith.addf %103, %102 : vector<8x256xf32>
    %105 = arith.divf %103, %104 : vector<8x256xf32>
    %106 = vector.extract_strided_slice %105 {offsets = [0, 0], sizes = [8, 128], strides = [1, 1]} : vector<8x256xf32> to vector<8x128xf32>
    %107 = vector.extract_strided_slice %105 {offsets = [0, 128], sizes = [8, 128], strides = [1, 1]} : vector<8x256xf32> to vector<8x128xf32>
    %108 = vector.extract_strided_slice %95 {offsets = [0, 256], sizes = [8, 128], strides = [1, 1]} : vector<8x384xf32> to vector<8x128xf32>
    %109 = vector.extract_strided_slice %96 {offsets = [0, 256], sizes = [8, 128], strides = [1, 1]} : vector<8x384xf32> to vector<8x128xf32>
    %110 = arith.addf %109, %10 : vector<8x128xf32>
    %111 = arith.mulf %106, %110 : vector<8x128xf32>
    %112 = arith.addf %108, %111 : vector<8x128xf32>
    %113 = math.tanh %112 : vector<8x128xf32>
    %cst_25 = arith.constant 1.000000e+00 : f32
    %114 = vector.broadcast %cst_25 : f32 to vector<8x128xf32>
    %115 = arith.subf %114, %107 : vector<8x128xf32>
    %116 = arith.mulf %115, %113 : vector<8x128xf32>
    %117 = arith.mulf %107, %97 : vector<8x128xf32>
    %118 = arith.addf %116, %117 : vector<8x128xf32>
    %119 = tpu.concatenate %92, %118 in 1 : vector<8x128xf32>, vector<8x128xf32> -> vector<8x256xf32>
    %120 = arith.truncf %119 : vector<8x256xf32> to vector<8x256xbf16>
    %cst_26 = arith.constant dense<0.000000e+00> : vector<8x768xf32>
    %121 = tpu.matmul %120, %0, %cst_26 {dimension_numbers = #tpu.dot_dimension_numbers<[1], [0], [0], [1], [0, 0, 1, 1], [], []>} : vector<8x256xbf16>, vector<256x768xbf16>, vector<8x768xf32> -> vector<8x768xf32>
    %c2 = arith.constant 2 : index
    %c0_27 = arith.constant 0 : index
    %c0_28 = arith.constant 0 : index
    %122 = vector.load %arg0[%c2, %c0_27, %c0_28] : memref<8x8x384xf32, #tpu.memory_space<vmem>>, vector<1x8x384xf32>
    %123 = vector.shape_cast %122 : vector<1x8x384xf32> to vector<8x384xf32>
    %124 = vector.extract_strided_slice %121 {offsets = [0, 0], sizes = [8, 384], strides = [1, 1]} : vector<8x768xf32> to vector<8x384xf32>
    %125 = vector.extract_strided_slice %119 {offsets = [0, 0], sizes = [8, 128], strides = [1, 1]} : vector<8x256xf32> to vector<8x128xf32>
    %126 = vector.extract_strided_slice %123 {offsets = [0, 0], sizes = [8, 256], strides = [1, 1]} : vector<8x384xf32> to vector<8x256xf32>
    %127 = vector.extract_strided_slice %124 {offsets = [0, 0], sizes = [8, 256], strides = [1, 1]} : vector<8x384xf32> to vector<8x256xf32>
    %128 = arith.addf %126, %127 : vector<8x256xf32>
    %129 = arith.negf %128 : vector<8x256xf32>
    %130 = math.exp %129 : vector<8x256xf32>
    %cst_29 = arith.constant 1.000000e+00 : f32
    %131 = vector.broadcast %cst_29 : f32 to vector<8x256xf32>
    %132 = arith.addf %131, %130 : vector<8x256xf32>
    %133 = arith.divf %131, %132 : vector<8x256xf32>
    %134 = vector.extract_strided_slice %133 {offsets = [0, 0], sizes = [8, 128], strides = [1, 1]} : vector<8x256xf32> to vector<8x128xf32>
    %135 = vector.extract_strided_slice %133 {offsets = [0, 128], sizes = [8, 128], strides = [1, 1]} : vector<8x256xf32> to vector<8x128xf32>
    %136 = vector.extract_strided_slice %123 {offsets = [0, 256], sizes = [8, 128], strides = [1, 1]} : vector<8x384xf32> to vector<8x128xf32>
    %137 = vector.extract_strided_slice %124 {offsets = [0, 256], sizes = [8, 128], strides = [1, 1]} : vector<8x384xf32> to vector<8x128xf32>
    %138 = arith.addf %137, %7 : vector<8x128xf32>
    %139 = arith.mulf %134, %138 : vector<8x128xf32>
    %140 = arith.addf %136, %139 : vector<8x128xf32>
    %141 = math.tanh %140 : vector<8x128xf32>
    %cst_30 = arith.constant 1.000000e+00 : f32
    %142 = vector.broadcast %cst_30 : f32 to vector<8x128xf32>
    %143 = arith.subf %142, %135 : vector<8x128xf32>
    %144 = arith.mulf %143, %141 : vector<8x128xf32>
    %145 = arith.mulf %135, %125 : vector<8x128xf32>
    %146 = arith.addf %144, %145 : vector<8x128xf32>
    %147 = arith.truncf %146 : vector<8x128xf32> to vector<8x128xbf16>
    %cst_31 = arith.constant dense<0.000000e+00> : vector<8x384xf32>
    %148 = tpu.matmul %147, %1, %cst_31 {dimension_numbers = #tpu.dot_dimension_numbers<[1], [0], [0], [1], [0, 0, 1, 1], [], []>} : vector<8x128xbf16>, vector<128x384xbf16>, vector<8x384xf32> -> vector<8x384xf32>
    %149 = arith.addf %148, %4 : vector<8x384xf32>
    %150 = vector.extract_strided_slice %121 {offsets = [0, 384], sizes = [8, 384], strides = [1, 1]} : vector<8x768xf32> to vector<8x384xf32>
    %151 = vector.extract_strided_slice %119 {offsets = [0, 128], sizes = [8, 128], strides = [1, 1]} : vector<8x256xf32> to vector<8x128xf32>
    %152 = vector.extract_strided_slice %149 {offsets = [0, 0], sizes = [8, 256], strides = [1, 1]} : vector<8x384xf32> to vector<8x256xf32>
    %153 = vector.extract_strided_slice %150 {offsets = [0, 0], sizes = [8, 256], strides = [1, 1]} : vector<8x384xf32> to vector<8x256xf32>
    %154 = arith.addf %152, %153 : vector<8x256xf32>
    %155 = arith.negf %154 : vector<8x256xf32>
    %156 = math.exp %155 : vector<8x256xf32>
    %cst_32 = arith.constant 1.000000e+00 : f32
    %157 = vector.broadcast %cst_32 : f32 to vector<8x256xf32>
    %158 = arith.addf %157, %156 : vector<8x256xf32>
    %159 = arith.divf %157, %158 : vector<8x256xf32>
    %160 = vector.extract_strided_slice %159 {offsets = [0, 0], sizes = [8, 128], strides = [1, 1]} : vector<8x256xf32> to vector<8x128xf32>
    %161 = vector.extract_strided_slice %159 {offsets = [0, 128], sizes = [8, 128], strides = [1, 1]} : vector<8x256xf32> to vector<8x128xf32>
    %162 = vector.extract_strided_slice %149 {offsets = [0, 256], sizes = [8, 128], strides = [1, 1]} : vector<8x384xf32> to vector<8x128xf32>
    %163 = vector.extract_strided_slice %150 {offsets = [0, 256], sizes = [8, 128], strides = [1, 1]} : vector<8x384xf32> to vector<8x128xf32>
    %164 = arith.addf %163, %10 : vector<8x128xf32>
    %165 = arith.mulf %160, %164 : vector<8x128xf32>
    %166 = arith.addf %162, %165 : vector<8x128xf32>
    %167 = math.tanh %166 : vector<8x128xf32>
    %cst_33 = arith.constant 1.000000e+00 : f32
    %168 = vector.broadcast %cst_33 : f32 to vector<8x128xf32>
    %169 = arith.subf %168, %161 : vector<8x128xf32>
    %170 = arith.mulf %169, %167 : vector<8x128xf32>
    %171 = arith.mulf %161, %151 : vector<8x128xf32>
    %172 = arith.addf %170, %171 : vector<8x128xf32>
    %173 = tpu.concatenate %146, %172 in 1 : vector<8x128xf32>, vector<8x128xf32> -> vector<8x256xf32>
    %174 = arith.truncf %173 : vector<8x256xf32> to vector<8x256xbf16>
    %cst_34 = arith.constant dense<0.000000e+00> : vector<8x768xf32>
    %175 = tpu.matmul %174, %0, %cst_34 {dimension_numbers = #tpu.dot_dimension_numbers<[1], [0], [0], [1], [0, 0, 1, 1], [], []>} : vector<8x256xbf16>, vector<256x768xbf16>, vector<8x768xf32> -> vector<8x768xf32>
    %c3 = arith.constant 3 : index
    %c0_35 = arith.constant 0 : index
    %c0_36 = arith.constant 0 : index
    %176 = vector.load %arg0[%c3, %c0_35, %c0_36] : memref<8x8x384xf32, #tpu.memory_space<vmem>>, vector<1x8x384xf32>
    %177 = vector.shape_cast %176 : vector<1x8x384xf32> to vector<8x384xf32>
    %178 = vector.extract_strided_slice %175 {offsets = [0, 0], sizes = [8, 384], strides = [1, 1]} : vector<8x768xf32> to vector<8x384xf32>
    %179 = vector.extract_strided_slice %173 {offsets = [0, 0], sizes = [8, 128], strides = [1, 1]} : vector<8x256xf32> to vector<8x128xf32>
    %180 = vector.extract_strided_slice %177 {offsets = [0, 0], sizes = [8, 256], strides = [1, 1]} : vector<8x384xf32> to vector<8x256xf32>
    %181 = vector.extract_strided_slice %178 {offsets = [0, 0], sizes = [8, 256], strides = [1, 1]} : vector<8x384xf32> to vector<8x256xf32>
    %182 = arith.addf %180, %181 : vector<8x256xf32>
    %183 = arith.negf %182 : vector<8x256xf32>
    %184 = math.exp %183 : vector<8x256xf32>
    %cst_37 = arith.constant 1.000000e+00 : f32
    %185 = vector.broadcast %cst_37 : f32 to vector<8x256xf32>
    %186 = arith.addf %185, %184 : vector<8x256xf32>
    %187 = arith.divf %185, %186 : vector<8x256xf32>
    %188 = vector.extract_strided_slice %187 {offsets = [0, 0], sizes = [8, 128], strides = [1, 1]} : vector<8x256xf32> to vector<8x128xf32>
    %189 = vector.extract_strided_slice %187 {offsets = [0, 128], sizes = [8, 128], strides = [1, 1]} : vector<8x256xf32> to vector<8x128xf32>
    %190 = vector.extract_strided_slice %177 {offsets = [0, 256], sizes = [8, 128], strides = [1, 1]} : vector<8x384xf32> to vector<8x128xf32>
    %191 = vector.extract_strided_slice %178 {offsets = [0, 256], sizes = [8, 128], strides = [1, 1]} : vector<8x384xf32> to vector<8x128xf32>
    %192 = arith.addf %191, %7 : vector<8x128xf32>
    %193 = arith.mulf %188, %192 : vector<8x128xf32>
    %194 = arith.addf %190, %193 : vector<8x128xf32>
    %195 = math.tanh %194 : vector<8x128xf32>
    %cst_38 = arith.constant 1.000000e+00 : f32
    %196 = vector.broadcast %cst_38 : f32 to vector<8x128xf32>
    %197 = arith.subf %196, %189 : vector<8x128xf32>
    %198 = arith.mulf %197, %195 : vector<8x128xf32>
    %199 = arith.mulf %189, %179 : vector<8x128xf32>
    %200 = arith.addf %198, %199 : vector<8x128xf32>
    %201 = arith.truncf %200 : vector<8x128xf32> to vector<8x128xbf16>
    %cst_39 = arith.constant dense<0.000000e+00> : vector<8x384xf32>
    %202 = tpu.matmul %201, %1, %cst_39 {dimension_numbers = #tpu.dot_dimension_numbers<[1], [0], [0], [1], [0, 0, 1, 1], [], []>} : vector<8x128xbf16>, vector<128x384xbf16>, vector<8x384xf32> -> vector<8x384xf32>
    %203 = arith.addf %202, %4 : vector<8x384xf32>
    %204 = vector.extract_strided_slice %175 {offsets = [0, 384], sizes = [8, 384], strides = [1, 1]} : vector<8x768xf32> to vector<8x384xf32>
    %205 = vector.extract_strided_slice %173 {offsets = [0, 128], sizes = [8, 128], strides = [1, 1]} : vector<8x256xf32> to vector<8x128xf32>
    %206 = vector.extract_strided_slice %203 {offsets = [0, 0], sizes = [8, 256], strides = [1, 1]} : vector<8x384xf32> to vector<8x256xf32>
    %207 = vector.extract_strided_slice %204 {offsets = [0, 0], sizes = [8, 256], strides = [1, 1]} : vector<8x384xf32> to vector<8x256xf32>
    %208 = arith.addf %206, %207 : vector<8x256xf32>
    %209 = arith.negf %208 : vector<8x256xf32>
    %210 = math.exp %209 : vector<8x256xf32>
    %cst_40 = arith.constant 1.000000e+00 : f32
    %211 = vector.broadcast %cst_40 : f32 to vector<8x256xf32>
    %212 = arith.addf %211, %210 : vector<8x256xf32>
    %213 = arith.divf %211, %212 : vector<8x256xf32>
    %214 = vector.extract_strided_slice %213 {offsets = [0, 0], sizes = [8, 128], strides = [1, 1]} : vector<8x256xf32> to vector<8x128xf32>
    %215 = vector.extract_strided_slice %213 {offsets = [0, 128], sizes = [8, 128], strides = [1, 1]} : vector<8x256xf32> to vector<8x128xf32>
    %216 = vector.extract_strided_slice %203 {offsets = [0, 256], sizes = [8, 128], strides = [1, 1]} : vector<8x384xf32> to vector<8x128xf32>
    %217 = vector.extract_strided_slice %204 {offsets = [0, 256], sizes = [8, 128], strides = [1, 1]} : vector<8x384xf32> to vector<8x128xf32>
    %218 = arith.addf %217, %10 : vector<8x128xf32>
    %219 = arith.mulf %214, %218 : vector<8x128xf32>
    %220 = arith.addf %216, %219 : vector<8x128xf32>
    %221 = math.tanh %220 : vector<8x128xf32>
    %cst_41 = arith.constant 1.000000e+00 : f32
    %222 = vector.broadcast %cst_41 : f32 to vector<8x128xf32>
    %223 = arith.subf %222, %215 : vector<8x128xf32>
    %224 = arith.mulf %223, %221 : vector<8x128xf32>
    %225 = arith.mulf %215, %205 : vector<8x128xf32>
    %226 = arith.addf %224, %225 : vector<8x128xf32>
    %227 = tpu.concatenate %200, %226 in 1 : vector<8x128xf32>, vector<8x128xf32> -> vector<8x256xf32>
    %228 = arith.truncf %227 : vector<8x256xf32> to vector<8x256xbf16>
    %cst_42 = arith.constant dense<0.000000e+00> : vector<8x768xf32>
    %229 = tpu.matmul %228, %0, %cst_42 {dimension_numbers = #tpu.dot_dimension_numbers<[1], [0], [0], [1], [0, 0, 1, 1], [], []>} : vector<8x256xbf16>, vector<256x768xbf16>, vector<8x768xf32> -> vector<8x768xf32>
    %c4 = arith.constant 4 : index
    %c0_43 = arith.constant 0 : index
    %c0_44 = arith.constant 0 : index
    %230 = vector.load %arg0[%c4, %c0_43, %c0_44] : memref<8x8x384xf32, #tpu.memory_space<vmem>>, vector<1x8x384xf32>
    %231 = vector.shape_cast %230 : vector<1x8x384xf32> to vector<8x384xf32>
    %232 = vector.extract_strided_slice %229 {offsets = [0, 0], sizes = [8, 384], strides = [1, 1]} : vector<8x768xf32> to vector<8x384xf32>
    %233 = vector.extract_strided_slice %227 {offsets = [0, 0], sizes = [8, 128], strides = [1, 1]} : vector<8x256xf32> to vector<8x128xf32>
    %234 = vector.extract_strided_slice %231 {offsets = [0, 0], sizes = [8, 256], strides = [1, 1]} : vector<8x384xf32> to vector<8x256xf32>
    %235 = vector.extract_strided_slice %232 {offsets = [0, 0], sizes = [8, 256], strides = [1, 1]} : vector<8x384xf32> to vector<8x256xf32>
    %236 = arith.addf %234, %235 : vector<8x256xf32>
    %237 = arith.negf %236 : vector<8x256xf32>
    %238 = math.exp %237 : vector<8x256xf32>
    %cst_45 = arith.constant 1.000000e+00 : f32
    %239 = vector.broadcast %cst_45 : f32 to vector<8x256xf32>
    %240 = arith.addf %239, %238 : vector<8x256xf32>
    %241 = arith.divf %239, %240 : vector<8x256xf32>
    %242 = vector.extract_strided_slice %241 {offsets = [0, 0], sizes = [8, 128], strides = [1, 1]} : vector<8x256xf32> to vector<8x128xf32>
    %243 = vector.extract_strided_slice %241 {offsets = [0, 128], sizes = [8, 128], strides = [1, 1]} : vector<8x256xf32> to vector<8x128xf32>
    %244 = vector.extract_strided_slice %231 {offsets = [0, 256], sizes = [8, 128], strides = [1, 1]} : vector<8x384xf32> to vector<8x128xf32>
    %245 = vector.extract_strided_slice %232 {offsets = [0, 256], sizes = [8, 128], strides = [1, 1]} : vector<8x384xf32> to vector<8x128xf32>
    %246 = arith.addf %245, %7 : vector<8x128xf32>
    %247 = arith.mulf %242, %246 : vector<8x128xf32>
    %248 = arith.addf %244, %247 : vector<8x128xf32>
    %249 = math.tanh %248 : vector<8x128xf32>
    %cst_46 = arith.constant 1.000000e+00 : f32
    %250 = vector.broadcast %cst_46 : f32 to vector<8x128xf32>
    %251 = arith.subf %250, %243 : vector<8x128xf32>
    %252 = arith.mulf %251, %249 : vector<8x128xf32>
    %253 = arith.mulf %243, %233 : vector<8x128xf32>
    %254 = arith.addf %252, %253 : vector<8x128xf32>
    %255 = arith.truncf %254 : vector<8x128xf32> to vector<8x128xbf16>
    %cst_47 = arith.constant dense<0.000000e+00> : vector<8x384xf32>
    %256 = tpu.matmul %255, %1, %cst_47 {dimension_numbers = #tpu.dot_dimension_numbers<[1], [0], [0], [1], [0, 0, 1, 1], [], []>} : vector<8x128xbf16>, vector<128x384xbf16>, vector<8x384xf32> -> vector<8x384xf32>
    %257 = arith.addf %256, %4 : vector<8x384xf32>
    %258 = vector.extract_strided_slice %229 {offsets = [0, 384], sizes = [8, 384], strides = [1, 1]} : vector<8x768xf32> to vector<8x384xf32>
    %259 = vector.extract_strided_slice %227 {offsets = [0, 128], sizes = [8, 128], strides = [1, 1]} : vector<8x256xf32> to vector<8x128xf32>
    %260 = vector.extract_strided_slice %257 {offsets = [0, 0], sizes = [8, 256], strides = [1, 1]} : vector<8x384xf32> to vector<8x256xf32>
    %261 = vector.extract_strided_slice %258 {offsets = [0, 0], sizes = [8, 256], strides = [1, 1]} : vector<8x384xf32> to vector<8x256xf32>
    %262 = arith.addf %260, %261 : vector<8x256xf32>
    %263 = arith.negf %262 : vector<8x256xf32>
    %264 = math.exp %263 : vector<8x256xf32>
    %cst_48 = arith.constant 1.000000e+00 : f32
    %265 = vector.broadcast %cst_48 : f32 to vector<8x256xf32>
    %266 = arith.addf %265, %264 : vector<8x256xf32>
    %267 = arith.divf %265, %266 : vector<8x256xf32>
    %268 = vector.extract_strided_slice %267 {offsets = [0, 0], sizes = [8, 128], strides = [1, 1]} : vector<8x256xf32> to vector<8x128xf32>
    %269 = vector.extract_strided_slice %267 {offsets = [0, 128], sizes = [8, 128], strides = [1, 1]} : vector<8x256xf32> to vector<8x128xf32>
    %270 = vector.extract_strided_slice %257 {offsets = [0, 256], sizes = [8, 128], strides = [1, 1]} : vector<8x384xf32> to vector<8x128xf32>
    %271 = vector.extract_strided_slice %258 {offsets = [0, 256], sizes = [8, 128], strides = [1, 1]} : vector<8x384xf32> to vector<8x128xf32>
    %272 = arith.addf %271, %10 : vector<8x128xf32>
    %273 = arith.mulf %268, %272 : vector<8x128xf32>
    %274 = arith.addf %270, %273 : vector<8x128xf32>
    %275 = math.tanh %274 : vector<8x128xf32>
    %cst_49 = arith.constant 1.000000e+00 : f32
    %276 = vector.broadcast %cst_49 : f32 to vector<8x128xf32>
    %277 = arith.subf %276, %269 : vector<8x128xf32>
    %278 = arith.mulf %277, %275 : vector<8x128xf32>
    %279 = arith.mulf %269, %259 : vector<8x128xf32>
    %280 = arith.addf %278, %279 : vector<8x128xf32>
    %281 = tpu.concatenate %254, %280 in 1 : vector<8x128xf32>, vector<8x128xf32> -> vector<8x256xf32>
    %282 = arith.truncf %281 : vector<8x256xf32> to vector<8x256xbf16>
    %cst_50 = arith.constant dense<0.000000e+00> : vector<8x768xf32>
    %283 = tpu.matmul %282, %0, %cst_50 {dimension_numbers = #tpu.dot_dimension_numbers<[1], [0], [0], [1], [0, 0, 1, 1], [], []>} : vector<8x256xbf16>, vector<256x768xbf16>, vector<8x768xf32> -> vector<8x768xf32>
    %c5 = arith.constant 5 : index
    %c0_51 = arith.constant 0 : index
    %c0_52 = arith.constant 0 : index
    %284 = vector.load %arg0[%c5, %c0_51, %c0_52] : memref<8x8x384xf32, #tpu.memory_space<vmem>>, vector<1x8x384xf32>
    %285 = vector.shape_cast %284 : vector<1x8x384xf32> to vector<8x384xf32>
    %286 = vector.extract_strided_slice %283 {offsets = [0, 0], sizes = [8, 384], strides = [1, 1]} : vector<8x768xf32> to vector<8x384xf32>
    %287 = vector.extract_strided_slice %281 {offsets = [0, 0], sizes = [8, 128], strides = [1, 1]} : vector<8x256xf32> to vector<8x128xf32>
    %288 = vector.extract_strided_slice %285 {offsets = [0, 0], sizes = [8, 256], strides = [1, 1]} : vector<8x384xf32> to vector<8x256xf32>
    %289 = vector.extract_strided_slice %286 {offsets = [0, 0], sizes = [8, 256], strides = [1, 1]} : vector<8x384xf32> to vector<8x256xf32>
    %290 = arith.addf %288, %289 : vector<8x256xf32>
    %291 = arith.negf %290 : vector<8x256xf32>
    %292 = math.exp %291 : vector<8x256xf32>
    %cst_53 = arith.constant 1.000000e+00 : f32
    %293 = vector.broadcast %cst_53 : f32 to vector<8x256xf32>
    %294 = arith.addf %293, %292 : vector<8x256xf32>
    %295 = arith.divf %293, %294 : vector<8x256xf32>
    %296 = vector.extract_strided_slice %295 {offsets = [0, 0], sizes = [8, 128], strides = [1, 1]} : vector<8x256xf32> to vector<8x128xf32>
    %297 = vector.extract_strided_slice %295 {offsets = [0, 128], sizes = [8, 128], strides = [1, 1]} : vector<8x256xf32> to vector<8x128xf32>
    %298 = vector.extract_strided_slice %285 {offsets = [0, 256], sizes = [8, 128], strides = [1, 1]} : vector<8x384xf32> to vector<8x128xf32>
    %299 = vector.extract_strided_slice %286 {offsets = [0, 256], sizes = [8, 128], strides = [1, 1]} : vector<8x384xf32> to vector<8x128xf32>
    %300 = arith.addf %299, %7 : vector<8x128xf32>
    %301 = arith.mulf %296, %300 : vector<8x128xf32>
    %302 = arith.addf %298, %301 : vector<8x128xf32>
    %303 = math.tanh %302 : vector<8x128xf32>
    %cst_54 = arith.constant 1.000000e+00 : f32
    %304 = vector.broadcast %cst_54 : f32 to vector<8x128xf32>
    %305 = arith.subf %304, %297 : vector<8x128xf32>
    %306 = arith.mulf %305, %303 : vector<8x128xf32>
    %307 = arith.mulf %297, %287 : vector<8x128xf32>
    %308 = arith.addf %306, %307 : vector<8x128xf32>
    %309 = arith.truncf %308 : vector<8x128xf32> to vector<8x128xbf16>
    %cst_55 = arith.constant dense<0.000000e+00> : vector<8x384xf32>
    %310 = tpu.matmul %309, %1, %cst_55 {dimension_numbers = #tpu.dot_dimension_numbers<[1], [0], [0], [1], [0, 0, 1, 1], [], []>} : vector<8x128xbf16>, vector<128x384xbf16>, vector<8x384xf32> -> vector<8x384xf32>
    %311 = arith.addf %310, %4 : vector<8x384xf32>
    %312 = vector.extract_strided_slice %283 {offsets = [0, 384], sizes = [8, 384], strides = [1, 1]} : vector<8x768xf32> to vector<8x384xf32>
    %313 = vector.extract_strided_slice %281 {offsets = [0, 128], sizes = [8, 128], strides = [1, 1]} : vector<8x256xf32> to vector<8x128xf32>
    %314 = vector.extract_strided_slice %311 {offsets = [0, 0], sizes = [8, 256], strides = [1, 1]} : vector<8x384xf32> to vector<8x256xf32>
    %315 = vector.extract_strided_slice %312 {offsets = [0, 0], sizes = [8, 256], strides = [1, 1]} : vector<8x384xf32> to vector<8x256xf32>
    %316 = arith.addf %314, %315 : vector<8x256xf32>
    %317 = arith.negf %316 : vector<8x256xf32>
    %318 = math.exp %317 : vector<8x256xf32>
    %cst_56 = arith.constant 1.000000e+00 : f32
    %319 = vector.broadcast %cst_56 : f32 to vector<8x256xf32>
    %320 = arith.addf %319, %318 : vector<8x256xf32>
    %321 = arith.divf %319, %320 : vector<8x256xf32>
    %322 = vector.extract_strided_slice %321 {offsets = [0, 0], sizes = [8, 128], strides = [1, 1]} : vector<8x256xf32> to vector<8x128xf32>
    %323 = vector.extract_strided_slice %321 {offsets = [0, 128], sizes = [8, 128], strides = [1, 1]} : vector<8x256xf32> to vector<8x128xf32>
    %324 = vector.extract_strided_slice %311 {offsets = [0, 256], sizes = [8, 128], strides = [1, 1]} : vector<8x384xf32> to vector<8x128xf32>
    %325 = vector.extract_strided_slice %312 {offsets = [0, 256], sizes = [8, 128], strides = [1, 1]} : vector<8x384xf32> to vector<8x128xf32>
    %326 = arith.addf %325, %10 : vector<8x128xf32>
    %327 = arith.mulf %322, %326 : vector<8x128xf32>
    %328 = arith.addf %324, %327 : vector<8x128xf32>
    %329 = math.tanh %328 : vector<8x128xf32>
    %cst_57 = arith.constant 1.000000e+00 : f32
    %330 = vector.broadcast %cst_57 : f32 to vector<8x128xf32>
    %331 = arith.subf %330, %323 : vector<8x128xf32>
    %332 = arith.mulf %331, %329 : vector<8x128xf32>
    %333 = arith.mulf %323, %313 : vector<8x128xf32>
    %334 = arith.addf %332, %333 : vector<8x128xf32>
    %335 = tpu.concatenate %308, %334 in 1 : vector<8x128xf32>, vector<8x128xf32> -> vector<8x256xf32>
    %336 = arith.truncf %335 : vector<8x256xf32> to vector<8x256xbf16>
    %cst_58 = arith.constant dense<0.000000e+00> : vector<8x768xf32>
    %337 = tpu.matmul %336, %0, %cst_58 {dimension_numbers = #tpu.dot_dimension_numbers<[1], [0], [0], [1], [0, 0, 1, 1], [], []>} : vector<8x256xbf16>, vector<256x768xbf16>, vector<8x768xf32> -> vector<8x768xf32>
    %c6 = arith.constant 6 : index
    %c0_59 = arith.constant 0 : index
    %c0_60 = arith.constant 0 : index
    %338 = vector.load %arg0[%c6, %c0_59, %c0_60] : memref<8x8x384xf32, #tpu.memory_space<vmem>>, vector<1x8x384xf32>
    %339 = vector.shape_cast %338 : vector<1x8x384xf32> to vector<8x384xf32>
    %340 = vector.extract_strided_slice %337 {offsets = [0, 0], sizes = [8, 384], strides = [1, 1]} : vector<8x768xf32> to vector<8x384xf32>
    %341 = vector.extract_strided_slice %335 {offsets = [0, 0], sizes = [8, 128], strides = [1, 1]} : vector<8x256xf32> to vector<8x128xf32>
    %342 = vector.extract_strided_slice %339 {offsets = [0, 0], sizes = [8, 256], strides = [1, 1]} : vector<8x384xf32> to vector<8x256xf32>
    %343 = vector.extract_strided_slice %340 {offsets = [0, 0], sizes = [8, 256], strides = [1, 1]} : vector<8x384xf32> to vector<8x256xf32>
    %344 = arith.addf %342, %343 : vector<8x256xf32>
    %345 = arith.negf %344 : vector<8x256xf32>
    %346 = math.exp %345 : vector<8x256xf32>
    %cst_61 = arith.constant 1.000000e+00 : f32
    %347 = vector.broadcast %cst_61 : f32 to vector<8x256xf32>
    %348 = arith.addf %347, %346 : vector<8x256xf32>
    %349 = arith.divf %347, %348 : vector<8x256xf32>
    %350 = vector.extract_strided_slice %349 {offsets = [0, 0], sizes = [8, 128], strides = [1, 1]} : vector<8x256xf32> to vector<8x128xf32>
    %351 = vector.extract_strided_slice %349 {offsets = [0, 128], sizes = [8, 128], strides = [1, 1]} : vector<8x256xf32> to vector<8x128xf32>
    %352 = vector.extract_strided_slice %339 {offsets = [0, 256], sizes = [8, 128], strides = [1, 1]} : vector<8x384xf32> to vector<8x128xf32>
    %353 = vector.extract_strided_slice %340 {offsets = [0, 256], sizes = [8, 128], strides = [1, 1]} : vector<8x384xf32> to vector<8x128xf32>
    %354 = arith.addf %353, %7 : vector<8x128xf32>
    %355 = arith.mulf %350, %354 : vector<8x128xf32>
    %356 = arith.addf %352, %355 : vector<8x128xf32>
    %357 = math.tanh %356 : vector<8x128xf32>
    %cst_62 = arith.constant 1.000000e+00 : f32
    %358 = vector.broadcast %cst_62 : f32 to vector<8x128xf32>
    %359 = arith.subf %358, %351 : vector<8x128xf32>
    %360 = arith.mulf %359, %357 : vector<8x128xf32>
    %361 = arith.mulf %351, %341 : vector<8x128xf32>
    %362 = arith.addf %360, %361 : vector<8x128xf32>
    %363 = arith.truncf %362 : vector<8x128xf32> to vector<8x128xbf16>
    %cst_63 = arith.constant dense<0.000000e+00> : vector<8x384xf32>
    %364 = tpu.matmul %363, %1, %cst_63 {dimension_numbers = #tpu.dot_dimension_numbers<[1], [0], [0], [1], [0, 0, 1, 1], [], []>} : vector<8x128xbf16>, vector<128x384xbf16>, vector<8x384xf32> -> vector<8x384xf32>
    %365 = arith.addf %364, %4 : vector<8x384xf32>
    %366 = vector.extract_strided_slice %337 {offsets = [0, 384], sizes = [8, 384], strides = [1, 1]} : vector<8x768xf32> to vector<8x384xf32>
    %367 = vector.extract_strided_slice %335 {offsets = [0, 128], sizes = [8, 128], strides = [1, 1]} : vector<8x256xf32> to vector<8x128xf32>
    %368 = vector.extract_strided_slice %365 {offsets = [0, 0], sizes = [8, 256], strides = [1, 1]} : vector<8x384xf32> to vector<8x256xf32>
    %369 = vector.extract_strided_slice %366 {offsets = [0, 0], sizes = [8, 256], strides = [1, 1]} : vector<8x384xf32> to vector<8x256xf32>
    %370 = arith.addf %368, %369 : vector<8x256xf32>
    %371 = arith.negf %370 : vector<8x256xf32>
    %372 = math.exp %371 : vector<8x256xf32>
    %cst_64 = arith.constant 1.000000e+00 : f32
    %373 = vector.broadcast %cst_64 : f32 to vector<8x256xf32>
    %374 = arith.addf %373, %372 : vector<8x256xf32>
    %375 = arith.divf %373, %374 : vector<8x256xf32>
    %376 = vector.extract_strided_slice %375 {offsets = [0, 0], sizes = [8, 128], strides = [1, 1]} : vector<8x256xf32> to vector<8x128xf32>
    %377 = vector.extract_strided_slice %375 {offsets = [0, 128], sizes = [8, 128], strides = [1, 1]} : vector<8x256xf32> to vector<8x128xf32>
    %378 = vector.extract_strided_slice %365 {offsets = [0, 256], sizes = [8, 128], strides = [1, 1]} : vector<8x384xf32> to vector<8x128xf32>
    %379 = vector.extract_strided_slice %366 {offsets = [0, 256], sizes = [8, 128], strides = [1, 1]} : vector<8x384xf32> to vector<8x128xf32>
    %380 = arith.addf %379, %10 : vector<8x128xf32>
    %381 = arith.mulf %376, %380 : vector<8x128xf32>
    %382 = arith.addf %378, %381 : vector<8x128xf32>
    %383 = math.tanh %382 : vector<8x128xf32>
    %cst_65 = arith.constant 1.000000e+00 : f32
    %384 = vector.broadcast %cst_65 : f32 to vector<8x128xf32>
    %385 = arith.subf %384, %377 : vector<8x128xf32>
    %386 = arith.mulf %385, %383 : vector<8x128xf32>
    %387 = arith.mulf %377, %367 : vector<8x128xf32>
    %388 = arith.addf %386, %387 : vector<8x128xf32>
    %389 = tpu.concatenate %362, %388 in 1 : vector<8x128xf32>, vector<8x128xf32> -> vector<8x256xf32>
    %390 = arith.truncf %389 : vector<8x256xf32> to vector<8x256xbf16>
    %cst_66 = arith.constant dense<0.000000e+00> : vector<8x768xf32>
    %391 = tpu.matmul %390, %0, %cst_66 {dimension_numbers = #tpu.dot_dimension_numbers<[1], [0], [0], [1], [0, 0, 1, 1], [], []>} : vector<8x256xbf16>, vector<256x768xbf16>, vector<8x768xf32> -> vector<8x768xf32>
    %c7 = arith.constant 7 : index
    %c0_67 = arith.constant 0 : index
    %c0_68 = arith.constant 0 : index
    %392 = vector.load %arg0[%c7, %c0_67, %c0_68] : memref<8x8x384xf32, #tpu.memory_space<vmem>>, vector<1x8x384xf32>
    %393 = vector.shape_cast %392 : vector<1x8x384xf32> to vector<8x384xf32>
    %394 = vector.extract_strided_slice %391 {offsets = [0, 0], sizes = [8, 384], strides = [1, 1]} : vector<8x768xf32> to vector<8x384xf32>
    %395 = vector.extract_strided_slice %389 {offsets = [0, 0], sizes = [8, 128], strides = [1, 1]} : vector<8x256xf32> to vector<8x128xf32>
    %396 = vector.extract_strided_slice %393 {offsets = [0, 0], sizes = [8, 256], strides = [1, 1]} : vector<8x384xf32> to vector<8x256xf32>
    %397 = vector.extract_strided_slice %394 {offsets = [0, 0], sizes = [8, 256], strides = [1, 1]} : vector<8x384xf32> to vector<8x256xf32>
    %398 = arith.addf %396, %397 : vector<8x256xf32>
    %399 = arith.negf %398 : vector<8x256xf32>
    %400 = math.exp %399 : vector<8x256xf32>
    %cst_69 = arith.constant 1.000000e+00 : f32
    %401 = vector.broadcast %cst_69 : f32 to vector<8x256xf32>
    %402 = arith.addf %401, %400 : vector<8x256xf32>
    %403 = arith.divf %401, %402 : vector<8x256xf32>
    %404 = vector.extract_strided_slice %403 {offsets = [0, 0], sizes = [8, 128], strides = [1, 1]} : vector<8x256xf32> to vector<8x128xf32>
    %405 = vector.extract_strided_slice %403 {offsets = [0, 128], sizes = [8, 128], strides = [1, 1]} : vector<8x256xf32> to vector<8x128xf32>
    %406 = vector.extract_strided_slice %393 {offsets = [0, 256], sizes = [8, 128], strides = [1, 1]} : vector<8x384xf32> to vector<8x128xf32>
    %407 = vector.extract_strided_slice %394 {offsets = [0, 256], sizes = [8, 128], strides = [1, 1]} : vector<8x384xf32> to vector<8x128xf32>
    %408 = arith.addf %407, %7 : vector<8x128xf32>
    %409 = arith.mulf %404, %408 : vector<8x128xf32>
    %410 = arith.addf %406, %409 : vector<8x128xf32>
    %411 = math.tanh %410 : vector<8x128xf32>
    %cst_70 = arith.constant 1.000000e+00 : f32
    %412 = vector.broadcast %cst_70 : f32 to vector<8x128xf32>
    %413 = arith.subf %412, %405 : vector<8x128xf32>
    %414 = arith.mulf %413, %411 : vector<8x128xf32>
    %415 = arith.mulf %405, %395 : vector<8x128xf32>
    %416 = arith.addf %414, %415 : vector<8x128xf32>
    %417 = arith.truncf %416 : vector<8x128xf32> to vector<8x128xbf16>
    %cst_71 = arith.constant dense<0.000000e+00> : vector<8x384xf32>
    %418 = tpu.matmul %417, %1, %cst_71 {dimension_numbers = #tpu.dot_dimension_numbers<[1], [0], [0], [1], [0, 0, 1, 1], [], []>} : vector<8x128xbf16>, vector<128x384xbf16>, vector<8x384xf32> -> vector<8x384xf32>
    %419 = arith.addf %418, %4 : vector<8x384xf32>
    %420 = vector.extract_strided_slice %391 {offsets = [0, 384], sizes = [8, 384], strides = [1, 1]} : vector<8x768xf32> to vector<8x384xf32>
    %421 = vector.extract_strided_slice %389 {offsets = [0, 128], sizes = [8, 128], strides = [1, 1]} : vector<8x256xf32> to vector<8x128xf32>
    %422 = vector.extract_strided_slice %419 {offsets = [0, 0], sizes = [8, 256], strides = [1, 1]} : vector<8x384xf32> to vector<8x256xf32>
    %423 = vector.extract_strided_slice %420 {offsets = [0, 0], sizes = [8, 256], strides = [1, 1]} : vector<8x384xf32> to vector<8x256xf32>
    %424 = arith.addf %422, %423 : vector<8x256xf32>
    %425 = arith.negf %424 : vector<8x256xf32>
    %426 = math.exp %425 : vector<8x256xf32>
    %cst_72 = arith.constant 1.000000e+00 : f32
    %427 = vector.broadcast %cst_72 : f32 to vector<8x256xf32>
    %428 = arith.addf %427, %426 : vector<8x256xf32>
    %429 = arith.divf %427, %428 : vector<8x256xf32>
    %430 = vector.extract_strided_slice %429 {offsets = [0, 0], sizes = [8, 128], strides = [1, 1]} : vector<8x256xf32> to vector<8x128xf32>
    %431 = vector.extract_strided_slice %429 {offsets = [0, 128], sizes = [8, 128], strides = [1, 1]} : vector<8x256xf32> to vector<8x128xf32>
    %432 = vector.extract_strided_slice %419 {offsets = [0, 256], sizes = [8, 128], strides = [1, 1]} : vector<8x384xf32> to vector<8x128xf32>
    %433 = vector.extract_strided_slice %420 {offsets = [0, 256], sizes = [8, 128], strides = [1, 1]} : vector<8x384xf32> to vector<8x128xf32>
    %434 = arith.addf %433, %10 : vector<8x128xf32>
    %435 = arith.mulf %430, %434 : vector<8x128xf32>
    %436 = arith.addf %432, %435 : vector<8x128xf32>
    %437 = math.tanh %436 : vector<8x128xf32>
    %cst_73 = arith.constant 1.000000e+00 : f32
    %438 = vector.broadcast %cst_73 : f32 to vector<8x128xf32>
    %439 = arith.subf %438, %431 : vector<8x128xf32>
    %440 = arith.mulf %439, %437 : vector<8x128xf32>
    %441 = arith.mulf %431, %421 : vector<8x128xf32>
    %442 = arith.addf %440, %441 : vector<8x128xf32>
    %443 = tpu.concatenate %416, %442 in 1 : vector<8x128xf32>, vector<8x128xf32> -> vector<8x256xf32>
    %444 = arith.truncf %443 : vector<8x256xf32> to vector<8x256xbf16>
    %c0_74 = arith.constant 0 : index
    %c0_75 = arith.constant 0 : index
    %445 = vector.load %arg6[%c0_74, %c0_75] : memref<256x128xbf16, #tpu.memory_space<vmem>>, vector<256x128xbf16>
    %cst_76 = arith.constant dense<0.000000e+00> : vector<8x128xf32>
    %446 = tpu.matmul %444, %445, %cst_76 {dimension_numbers = #tpu.dot_dimension_numbers<[1], [0], [0], [1], [0, 0, 1, 1], [], []>} : vector<8x256xbf16>, vector<256x128xbf16>, vector<8x128xf32> -> vector<8x128xf32>
    %c0_77 = arith.constant 0 : index
    %c0_78 = arith.constant 0 : index
    %447 = vector.load %arg7[%c0_77, %c0_78] : memref<1x128xf32, #tpu.memory_space<vmem>>, vector<1x128xf32>
    %448 = vector.broadcast %447 : vector<1x128xf32> to vector<8x128xf32>
    %449 = arith.addf %446, %448 : vector<8x128xf32>
    %cst_79 = arith.constant 0.000000e+00 : f32
    %450 = vector.broadcast %cst_79 : f32 to vector<8x128xf32>
    %451 = arith.maximumf %449, %450 : vector<8x128xf32>
    %452 = arith.truncf %451 : vector<8x128xf32> to vector<8x128xbf16>
    %c0_80 = arith.constant 0 : index
    %c0_81 = arith.constant 0 : index
    %453 = vector.load %arg8[%c0_80, %c0_81] : memref<128x128xbf16, #tpu.memory_space<vmem>>, vector<128x128xbf16>
    %cst_82 = arith.constant dense<0.000000e+00> : vector<8x128xf32>
    %454 = tpu.matmul %452, %453, %cst_82 {dimension_numbers = #tpu.dot_dimension_numbers<[1], [0], [0], [1], [0, 0, 1, 1], [], []>} : vector<8x128xbf16>, vector<128x128xbf16>, vector<8x128xf32> -> vector<8x128xf32>
    %c0_83 = arith.constant 0 : index
    %c0_84 = arith.constant 0 : index
    %455 = vector.load %arg9[%c0_83, %c0_84] : memref<1x128xf32, #tpu.memory_space<vmem>>, vector<1x128xf32>
    %456 = vector.broadcast %455 : vector<1x128xf32> to vector<8x128xf32>
    %457 = arith.addf %454, %456 : vector<8x128xf32>
    %cst_85 = arith.constant 0.000000e+00 : f32
    %458 = vector.broadcast %cst_85 : f32 to vector<8x128xf32>
    %459 = arith.maximumf %457, %458 : vector<8x128xf32>
    %460 = arith.truncf %459 : vector<8x128xf32> to vector<8x128xbf16>
    %c0_86 = arith.constant 0 : index
    %c0_87 = arith.constant 0 : index
    %461 = vector.load %arg10[%c0_86, %c0_87] : memref<128x256xbf16, #tpu.memory_space<vmem>>, vector<128x256xbf16>
    %cst_88 = arith.constant dense<0.000000e+00> : vector<8x256xf32>
    %462 = tpu.matmul %460, %461, %cst_88 {dimension_numbers = #tpu.dot_dimension_numbers<[1], [0], [0], [1], [0, 0, 1, 1], [], []>} : vector<8x128xbf16>, vector<128x256xbf16>, vector<8x256xf32> -> vector<8x256xf32>
    %c0_89 = arith.constant 0 : index
    %c0_90 = arith.constant 0 : index
    %463 = vector.load %arg11[%c0_89, %c0_90] : memref<1x256xf32, #tpu.memory_space<vmem>>, vector<1x256xf32>
    %464 = vector.broadcast %463 : vector<1x256xf32> to vector<8x256xf32>
    %465 = arith.addf %462, %464 : vector<8x256xf32>
    %466 = vector.extract_strided_slice %465 {offsets = [0, 0], sizes = [8, 128], strides = [1, 1]} : vector<8x256xf32> to vector<8x128xf32>
    %467 = vector.extract_strided_slice %465 {offsets = [0, 128], sizes = [8, 128], strides = [1, 1]} : vector<8x256xf32> to vector<8x128xf32>
    %cst_91 = arith.constant 5.000000e-01 : f32
    %468 = vector.broadcast %cst_91 : f32 to vector<8x128xf32>
    %469 = arith.mulf %468, %467 : vector<8x128xf32>
    %470 = math.exp %469 : vector<8x128xf32>
    %c0_92 = arith.constant 0 : index
    %c0_93 = arith.constant 0 : index
    %471 = vector.load %arg12[%c0_92, %c0_93] : memref<8x128xf32, #tpu.memory_space<vmem>>, vector<8x128xf32>
    %472 = arith.mulf %470, %471 : vector<8x128xf32>
    %473 = arith.addf %466, %472 : vector<8x128xf32>
    %c0_94 = arith.constant 0 : index
    %c0_95 = arith.constant 0 : index
    %474 = vector.load %arg13[%c0_94, %c0_95] : memref<8x128xf32, #tpu.memory_space<vmem>>, vector<8x128xf32>
    tpu.vector_store %arg13[%c0_94, %c0_95], %466 {strides = array<i32>} : memref<8x128xf32, #tpu.memory_space<vmem>>, vector<8x128xf32>,
    %c0_96 = arith.constant 0 : index
    %c0_97 = arith.constant 0 : index
    %475 = vector.load %arg14[%c0_96, %c0_97] : memref<8x128xf32, #tpu.memory_space<vmem>>, vector<8x128xf32>
    tpu.vector_store %arg14[%c0_96, %c0_97], %467 {strides = array<i32>} : memref<8x128xf32, #tpu.memory_space<vmem>>, vector<8x128xf32>,
    %c0_98 = arith.constant 0 : index
    %c0_99 = arith.constant 0 : index
    %476 = vector.load %arg15[%c0_98, %c0_99] : memref<8x128xf32, #tpu.memory_space<vmem>>, vector<8x128xf32>
    tpu.vector_store %arg15[%c0_98, %c0_99], %473 {strides = array<i32>} : memref<8x128xf32, #tpu.memory_space<vmem>>, vector<8x128xf32>,
    return
  }
}

</mosaic_0001>

<llo_original>
// kernel: encoder_forward.1
$region0: #{encoder_forward.1}
  #allocation0 [shape = 'u32[]', space=smem, size = 0x4, offset = 0x4, fixed_abs, tag = 'smem constant byte address 0x4 - core index']
  #allocation1 [shape = 'u32[72,128]{1,0:T(1,128)}', space=vmem, size = 0x9000, scoped, tag = 'internal scratch']
  %s0 = inlined_call_operand.vmem [shape: f32[8,8,384], index: 0, kind: input, shape index: {}]
  %s1 = inlined_call_operand.vmem [shape: bf16[256,768], index: 1, kind: input, shape index: {}]
  %s2 = inlined_call_operand.hbm [shape: bf16[128,384], index: 2, kind: input, shape index: {}]
  %s3 = inlined_call_operand.vmem [shape: f32[1,384], index: 3, kind: input, shape index: {}]
  %s4 = inlined_call_operand.vmem [shape: f32[1,128], index: 4, kind: input, shape index: {}]
  %s5 = inlined_call_operand.vmem [shape: f32[1,128], index: 5, kind: input, shape index: {}]
  %s6 = inlined_call_operand.vmem [shape: bf16[256,128], index: 6, kind: input, shape index: {}]
  %s7 = inlined_call_operand.vmem [shape: f32[1,128], index: 7, kind: input, shape index: {}]
  %s8 = inlined_call_operand.hbm [shape: bf16[128,128], index: 8, kind: input, shape index: {}]
  %s9 = inlined_call_operand.vmem [shape: f32[1,128], index: 9, kind: input, shape index: {}]
  %s10 = inlined_call_operand.hbm [shape: bf16[128,256], index: 10, kind: input, shape index: {}]
  %s11 = inlined_call_operand.vmem [shape: f32[1,256], index: 11, kind: input, shape index: {}]
  %s12 = inlined_call_operand.vmem [shape: f32[8,128], index: 12, kind: input, shape index: {}]
  %s13 = inlined_call_operand.vmem [shape: f32[8,128], index: 13, kind: output, shape index: {0}]
  %s14 = inlined_call_operand.vmem [shape: f32[8,128], index: 14, kind: output, shape index: {1}]
  %s15 = inlined_call_operand.vmem [shape: f32[8,128], index: 15, kind: output, shape index: {2}]
  %16 = xla_tuple %s13, %s14, %s15
  %s17 = sld [smem:[#allocation0]]
  $region90: #{encoder_forward.1} parent=0
    _
  %s19 = ssub.s32 1, %s17
  %s20 = scalar_select 0, %s19, %s17
  $region1: #{encoder_forward.1} parent=0
    #allocation2 [shape = 'u8[98304]{0}', space=vmem, size = 0x18000, scoped, tag = 'input window, operand 2, single buffered']
    #allocation3 [shape = 's32[1]{0}', space=sflag, size = 0x4, scoped, tag = 'scoped memory for encoder_forward.1']
    #allocation4 [shape = 'u8[32768]{0}', space=vmem, size = 0x8000, scoped, tag = 'input window, operand 8, single buffered']
    #allocation5 [shape = 's32[1]{0}', space=sflag, size = 0x4, scoped, tag = 'scoped memory for encoder_forward.1']
    #allocation6 [shape = 'u8[65536]{0}', space=vmem, size = 0x10000, scoped, tag = 'input window, operand 10, single buffered']
    %21 = vsyncpa [#allocation3], 0
    %22 = vsyncpa [#allocation5], 0
    // Predicated region
    $region2: #{encoder_forward.1} parent=1 // pred_check
      _
    $region3: #{encoder_forward.1} parent=1 // pred_check_branch
      %24 = sbr.rel (0) target = $region5
    $region4: #{encoder_forward.1} parent=1 // pred_region
      _
    $region5: #{encoder_forward.1} parent=1 // pred_fallthru
      _
    // Predicated region
    $region6: #{encoder_forward.1} parent=1 // pred_check
      _
    $region7: #{encoder_forward.1} parent=1 // pred_check_branch
      %26 = sbr.rel (0) target = $region9
    $region8: #{encoder_forward.1} parent=1 // pred_region
      _
    $region9: #{encoder_forward.1} parent=1 // pred_fallthru
      _
    // Predicated region
    $region10: #{encoder_forward.1} parent=1 // pred_check
      _
    $region11: #{encoder_forward.1} parent=1 // pred_check_branch
      %28 = sbr.rel (0) target = $region13
    $region12: #{encoder_forward.1} parent=1 // pred_region
      %30 = vsyncadd [#allocation3], 0
      %s31 = sshll.u32 %s2, 4
      %s32 = int_to_ptr.hbm [resolvable:$true] %s31
      %s33 = sshll.u32 [#allocation2], 4
      %s34 = int_to_ptr.vmem [resolvable:$true] %s33
      %39 = dma.hbm_to_vmem [thread:$0]  %s32, 3072, %s34, [#allocation3], 192, 192, 12
    $region13: #{encoder_forward.1} parent=1 // pred_fallthru
      _
    // Predicated region
    $region14: #{encoder_forward.1} parent=1 // pred_check
      _
    $region15: #{encoder_forward.1} parent=1 // pred_check_branch
      %41 = sbr.rel (0) target = $region17
    $region16: #{encoder_forward.1} parent=1 // pred_region
      _
    $region17: #{encoder_forward.1} parent=1 // pred_fallthru
      _
    // Predicated region
    $region18: #{encoder_forward.1} parent=1 // pred_check
      _
    $region19: #{encoder_forward.1} parent=1 // pred_check_branch
      %43 = sbr.rel (0) target = $region21
    $region20: #{encoder_forward.1} parent=1 // pred_region
      _
    $region21: #{encoder_forward.1} parent=1 // pred_fallthru
      _
    // Predicated region
    $region22: #{encoder_forward.1} parent=1 // pred_check
      _
    $region23: #{encoder_forward.1} parent=1 // pred_check_branch
      %45 = sbr.rel (0) target = $region25
    $region24: #{encoder_forward.1} parent=1 // pred_region
      _
    $region25: #{encoder_forward.1} parent=1 // pred_fallthru
      _
    // Predicated region
    $region26: #{encoder_forward.1} parent=1 // pred_check
      _
    $region27: #{encoder_forward.1} parent=1 // pred_check_branch
      %47 = sbr.rel (0) target = $region29
    $region28: #{encoder_forward.1} parent=1 // pred_region
      _
    $region29: #{encoder_forward.1} parent=1 // pred_fallthru
      _
    // Predicated region
    $region30: #{encoder_forward.1} parent=1 // pred_check
      _
    $region31: #{encoder_forward.1} parent=1 // pred_check_branch
      %49 = sbr.rel (0) target = $region33
    $region32: #{encoder_forward.1} parent=1 // pred_region
      _
    $region33: #{encoder_forward.1} parent=1 // pred_fallthru
      _
    // Predicated region
    $region34: #{encoder_forward.1} parent=1 // pred_check
      _
    $region35: #{encoder_forward.1} parent=1 // pred_check_branch
      %51 = sbr.rel (0) target = $region37
    $region36: #{encoder_forward.1} parent=1 // pred_region
      %53 = vsyncadd [#allocation5], 0
      %s54 = sshll.u32 %s8, 4
      %s55 = int_to_ptr.hbm [resolvable:$true] %s54
      %s56 = sshll.u32 [#allocation4], 4
      %s57 = int_to_ptr.vmem [resolvable:$true] %s56
      %62 = dma.hbm_to_vmem [thread:$0]  %s55, 1024, %s57, [#allocation5], 64, 64, 4
    $region37: #{encoder_forward.1} parent=1 // pred_fallthru
      _
    // Predicated region
    $region38: #{encoder_forward.1} parent=1 // pred_check
      _
    $region39: #{encoder_forward.1} parent=1 // pred_check_branch
      %64 = sbr.rel (0) target = $region41
    $region40: #{encoder_forward.1} parent=1 // pred_region
      _
    $region41: #{encoder_forward.1} parent=1 // pred_fallthru
      _
    // Predicated region
    $region42: #{encoder_forward.1} parent=1 // pred_check
      _
    $region43: #{encoder_forward.1} parent=1 // pred_check_branch
      %66 = sbr.rel (0) target = $region45
    $region44: #{encoder_forward.1} parent=1 // pred_region
      %68 = vsyncadd [#allocation5], 0
      %s69 = sshll.u32 %s10, 4
      %s70 = int_to_ptr.hbm [resolvable:$true] %s69
      %s71 = sshll.u32 [#allocation6], 4
      %s72 = int_to_ptr.vmem [resolvable:$true] %s71
      %77 = dma.hbm_to_vmem [thread:$0]  %s70, 2048, %s72, [#allocation5], 128, 128, 8
    $region45: #{encoder_forward.1} parent=1 // pred_fallthru
      _
    // Predicated region
    $region46: #{encoder_forward.1} parent=1 // pred_check
      _
    $region47: #{encoder_forward.1} parent=1 // pred_check_branch
      %79 = sbr.rel (0) target = $region49
    $region48: #{encoder_forward.1} parent=1 // pred_region
      _
    $region49: #{encoder_forward.1} parent=1 // pred_fallthru
      _
    // Predicated region
    $region50: #{encoder_forward.1} parent=1 // pred_check
      _
    $region51: #{encoder_forward.1} parent=1 // pred_check_branch
      %81 = sbr.rel (0) target = $region53
    $region52: #{encoder_forward.1} parent=1 // pred_region
      _
    $region53: #{encoder_forward.1} parent=1 // pred_fallthru
      _
    // Predicated region
    $region54: #{encoder_forward.1} parent=1 // pred_check
      _
    $region55: #{encoder_forward.1} parent=1 // pred_check_branch
      %83 = sbr.rel (0) target = $region57
    $region56: #{encoder_forward.1} parent=1 // pred_region
      %85 = dma.done [#allocation3], 3072
    $region57: #{encoder_forward.1} parent=1 // pred_fallthru
      _
    // Predicated region
    $region58: #{encoder_forward.1} parent=1 // pred_check
      _
    $region59: #{encoder_forward.1} parent=1 // pred_check_branch
      %87 = sbr.rel (0) target = $region61
    $region60: #{encoder_forward.1} parent=1 // pred_region
      %89 = dma.done [#allocation5], 1024
    $region61: #{encoder_forward.1} parent=1 // pred_fallthru
      _
    // Predicated region
    $region62: #{encoder_forward.1} parent=1 // pred_check
      _
    $region63: #{encoder_forward.1} parent=1 // pred_check_branch
      %91 = sbr.rel (0) target = $region65
    $region64: #{encoder_forward.1} parent=1 // pred_region
      %93 = dma.done [#allocation5], 2048
    $region65: #{encoder_forward.1} parent=1 // pred_fallthru
      _
    %v95 = vld [vmem:[%s1] sm:$0xff]
    %v96 = vld [vmem:[%s1 + $0x8] sm:$0xff]
    %v97 = vld [vmem:[%s1 + $0x10] sm:$0xff]
    %v98 = vld [vmem:[%s1 + $0x18] sm:$0xff]
    %v99 = vld [vmem:[%s1 + $0x20] sm:$0xff]
    %v100 = vld [vmem:[%s1 + $0x28] sm:$0xff]
    %v101 = vld [vmem:[%s1 + $0x30] sm:$0xff]
    %v102 = vld [vmem:[%s1 + $0x38] sm:$0xff]
    %v103 = vld [vmem:[%s1 + $0x40] sm:$0xff]
    %v104 = vld [vmem:[%s1 + $0x48] sm:$0xff]
    %v105 = vld [vmem:[%s1 + $0x50] sm:$0xff]
    %v106 = vld [vmem:[%s1 + $0x58] sm:$0xff]
    %v107 = vld [vmem:[%s1 + $0x60] sm:$0xff]
    %v108 = vld [vmem:[%s1 + $0x68] sm:$0xff]
    %v109 = vld [vmem:[%s1 + $0x70] sm:$0xff]
    %v110 = vld [vmem:[%s1 + $0x78] sm:$0xff]
    %v111 = vld [vmem:[%s1 + $0x80] sm:$0xff]
    %v112 = vld [vmem:[%s1 + $0x88] sm:$0xff]
    %v113 = vld [vmem:[%s1 + $0x90] sm:$0xff]
    %v114 = vld [vmem:[%s1 + $0x98] sm:$0xff]
    %v115 = vld [vmem:[%s1 + $0xa0] sm:$0xff]
    %v116 = vld [vmem:[%s1 + $0xa8] sm:$0xff]
    %v117 = vld [vmem:[%s1 + $0xb0] sm:$0xff]
    %v118 = vld [vmem:[%s1 + $0xb8] sm:$0xff]
    %v119 = vld [vmem:[%s1 + $0xc0] sm:$0xff]
    %v120 = vld [vmem:[%s1 + $0xc8] sm:$0xff]
    %v121 = vld [vmem:[%s1 + $0xd0] sm:$0xff]
    %v122 = vld [vmem:[%s1 + $0xd8] sm:$0xff]
    %v123 = vld [vmem:[%s1 + $0xe0] sm:$0xff]
    %v124 = vld [vmem:[%s1 + $0xe8] sm:$0xff]
    %v125 = vld [vmem:[%s1 + $0xf0] sm:$0xff]
    %v126 = vld [vmem:[%s1 + $0xf8] sm:$0xff]
    %v127 = vld [vmem:[%s1 + $0x100] sm:$0xff]
    %v128 = vld [vmem:[%s1 + $0x108] sm:$0xff]
    %v129 = vld [vmem:[%s1 + $0x110] sm:$0xff]
    %v130 = vld [vmem:[%s1 + $0x118] sm:$0xff]
    %v131 = vld [vmem:[%s1 + $0x120] sm:$0xff]
    %v132 = vld [vmem:[%s1 + $0x128] sm:$0xff]
    %v133 = vld [vmem:[%s1 + $0x130] sm:$0xff]
    %v134 = vld [vmem:[%s1 + $0x138] sm:$0xff]
    %v135 = vld [vmem:[%s1 + $0x140] sm:$0xff]
    %v136 = vld [vmem:[%s1 + $0x148] sm:$0xff]
    %v137 = vld [vmem:[%s1 + $0x150] sm:$0xff]
    %v138 = vld [vmem:[%s1 + $0x158] sm:$0xff]
    %v139 = vld [vmem:[%s1 + $0x160] sm:$0xff]
    %v140 = vld [vmem:[%s1 + $0x168] sm:$0xff]
    %v141 = vld [vmem:[%s1 + $0x170] sm:$0xff]
    %v142 = vld [vmem:[%s1 + $0x178] sm:$0xff]
    %v143 = vld [vmem:[%s1 + $0x180] sm:$0xff]
    %v144 = vld [vmem:[%s1 + $0x188] sm:$0xff]
    %v145 = vld [vmem:[%s1 + $0x190] sm:$0xff]
    %v146 = vld [vmem:[%s1 + $0x198] sm:$0xff]
    %v147 = vld [vmem:[%s1 + $0x1a0] sm:$0xff]
    %v148 = vld [vmem:[%s1 + $0x1a8] sm:$0xff]
    %v149 = vld [vmem:[%s1 + $0x1b0] sm:$0xff]
    %v150 = vld [vmem:[%s1 + $0x1b8] sm:$0xff]
    %v151 = vld [vmem:[%s1 + $0x1c0] sm:$0xff]
    %v152 = vld [vmem:[%s1 + $0x1c8] sm:$0xff]
    %v153 = vld [vmem:[%s1 + $0x1d0] sm:$0xff]
    %v154 = vld [vmem:[%s1 + $0x1d8] sm:$0xff]
    %v155 = vld [vmem:[%s1 + $0x1e0] sm:$0xff]
    %v156 = vld [vmem:[%s1 + $0x1e8] sm:$0xff]
    %v157 = vld [vmem:[%s1 + $0x1f0] sm:$0xff]
    %v158 = vld [vmem:[%s1 + $0x1f8] sm:$0xff]
    %v159 = vld [vmem:[%s1 + $0x200] sm:$0xff]
    %v160 = vld [vmem:[%s1 + $0x208] sm:$0xff]
    %v161 = vld [vmem:[%s1 + $0x210] sm:$0xff]
    %v162 = vld [vmem:[%s1 + $0x218] sm:$0xff]
    %v163 = vld [vmem:[%s1 + $0x220] sm:$0xff]
    %v164 = vld [vmem:[%s1 + $0x228] sm:$0xff]
    %v165 = vld [vmem:[%s1 + $0x230] sm:$0xff]
    %v166 = vld [vmem:[%s1 + $0x238] sm:$0xff]
    %v167 = vld [vmem:[%s1 + $0x240] sm:$0xff]
    %v168 = vld [vmem:[%s1 + $0x248] sm:$0xff]
    %v169 = vld [vmem:[%s1 + $0x250] sm:$0xff]
    %v170 = vld [vmem:[%s1 + $0x258] sm:$0xff]
    %v171 = vld [vmem:[%s1 + $0x260] sm:$0xff]
    %v172 = vld [vmem:[%s1 + $0x268] sm:$0xff]
    %v173 = vld [vmem:[%s1 + $0x270] sm:$0xff]
    %v174 = vld [vmem:[%s1 + $0x278] sm:$0xff]
    %v175 = vld [vmem:[%s1 + $0x280] sm:$0xff]
    %v176 = vld [vmem:[%s1 + $0x288] sm:$0xff]
    %v177 = vld [vmem:[%s1 + $0x290] sm:$0xff]
    %v178 = vld [vmem:[%s1 + $0x298] sm:$0xff]
    %v179 = vld [vmem:[%s1 + $0x2a0] sm:$0xff]
    %v180 = vld [vmem:[%s1 + $0x2a8] sm:$0xff]
    %v181 = vld [vmem:[%s1 + $0x2b0] sm:$0xff]
    %v182 = vld [vmem:[%s1 + $0x2b8] sm:$0xff]
    %v183 = vld [vmem:[%s1 + $0x2c0] sm:$0xff]
    %v184 = vld [vmem:[%s1 + $0x2c8] sm:$0xff]
    %v185 = vld [vmem:[%s1 + $0x2d0] sm:$0xff]
    %v186 = vld [vmem:[%s1 + $0x2d8] sm:$0xff]
    %v187 = vld [vmem:[%s1 + $0x2e0] sm:$0xff]
    %v188 = vld [vmem:[%s1 + $0x2e8] sm:$0xff]
    %v189 = vld [vmem:[%s1 + $0x2f0] sm:$0xff]
    %v190 = vld [vmem:[%s1 + $0x2f8] sm:$0xff]
    %v191 = vld [vmem:[#allocation2] sm:$0xff]
    %v192 = vld [vmem:[#allocation2 + $0x8] sm:$0xf]
    %v193 = vld [vmem:[#allocation2 + $0xc] sm:$0xff]
    %v194 = vld [vmem:[#allocation2 + $0x14] sm:$0xf]
    %v195 = vld [vmem:[#allocation2 + $0x18] sm:$0xff]
    %v196 = vld [vmem:[#allocation2 + $0x20] sm:$0xf]
    %v197 = vld [vmem:[#allocation2 + $0x24] sm:$0xff]
    %v198 = vld [vmem:[#allocation2 + $0x2c] sm:$0xf]
    %v199 = vld [vmem:[#allocation2 + $0x30] sm:$0xff]
    %v200 = vld [vmem:[#allocation2 + $0x38] sm:$0xf]
    %v201 = vld [vmem:[#allocation2 + $0x3c] sm:$0xff]
    %v202 = vld [vmem:[#allocation2 + $0x44] sm:$0xf]
    %v203 = vld [vmem:[#allocation2 + $0x48] sm:$0xff]
    %v204 = vld [vmem:[#allocation2 + $0x50] sm:$0xf]
    %v205 = vld [vmem:[#allocation2 + $0x54] sm:$0xff]
    %v206 = vld [vmem:[#allocation2 + $0x5c] sm:$0xf]
    %v207 = vld [vmem:[#allocation2 + $0x60] sm:$0xff]
    %v208 = vld [vmem:[#allocation2 + $0x68] sm:$0xf]
    %v209 = vld [vmem:[#allocation2 + $0x6c] sm:$0xff]
    %v210 = vld [vmem:[#allocation2 + $0x74] sm:$0xf]
    %v211 = vld [vmem:[#allocation2 + $0x78] sm:$0xff]
    %v212 = vld [vmem:[#allocation2 + $0x80] sm:$0xf]
    %v213 = vld [vmem:[#allocation2 + $0x84] sm:$0xff]
    %v214 = vld [vmem:[#allocation2 + $0x8c] sm:$0xf]
    %v215 = vld [vmem:[#allocation2 + $0x90] sm:$0xff]
    %v216 = vld [vmem:[#allocation2 + $0x98] sm:$0xf]
    %v217 = vld [vmem:[#allocation2 + $0x9c] sm:$0xff]
    %v218 = vld [vmem:[#allocation2 + $0xa4] sm:$0xf]
    %v219 = vld [vmem:[#allocation2 + $0xa8] sm:$0xff]
    %v220 = vld [vmem:[#allocation2 + $0xb0] sm:$0xf]
    %v221 = vld [vmem:[#allocation2 + $0xb4] sm:$0xff]
    %v222 = vld [vmem:[#allocation2 + $0xbc] sm:$0xf]
    %v223 = vld [vmem:[%s3] sm:$0x7]
    %v225 = vperm.slane %v223, 0
    %v226 = vperm.slane %v223, 1
    %v227 = vperm.slane %v223, 2
    %v231 = vld [vmem:[%s4] sm:$0x1]
    %v233 = vperm.slane %v231, 0
    %v235 = vld [vmem:[%s5] sm:$0x1]
    %v237 = vperm.slane %v235, 0
    %v335 = vunpack.c.l.b16 %v95
    %v336 = vunpack.c.h.b16 %v95
    %v337 = vunpack.c.l.b16 %v96
    %v338 = vunpack.c.h.b16 %v96
    %v339 = vunpack.c.l.b16 %v97
    %v340 = vunpack.c.h.b16 %v97
    %v341 = vunpack.c.l.b16 %v98
    %v342 = vunpack.c.h.b16 %v98
    %v343 = vunpack.c.l.b16 %v99
    %v344 = vunpack.c.h.b16 %v99
    %v345 = vunpack.c.l.b16 %v100
    %v346 = vunpack.c.h.b16 %v100
    %v347 = vunpack.c.l.b16 %v101
    %v348 = vunpack.c.h.b16 %v101
    %v349 = vunpack.c.l.b16 %v102
    %v350 = vunpack.c.h.b16 %v102
    %v351 = vunpack.c.l.b16 %v103
    %v352 = vunpack.c.h.b16 %v103
    %v353 = vunpack.c.l.b16 %v104
    %v354 = vunpack.c.h.b16 %v104
    %v355 = vunpack.c.l.b16 %v105
    %v356 = vunpack.c.h.b16 %v105
    %v357 = vunpack.c.l.b16 %v106
    %v358 = vunpack.c.h.b16 %v106
    %v359 = vunpack.c.l.b16 %v107
    %v360 = vunpack.c.h.b16 %v107
    %v361 = vunpack.c.l.b16 %v108
    %v362 = vunpack.c.h.b16 %v108
    %v363 = vunpack.c.l.b16 %v109
    %v364 = vunpack.c.h.b16 %v109
    %v365 = vunpack.c.l.b16 %v110
    %v366 = vunpack.c.h.b16 %v110
    %v367 = vunpack.c.l.b16 %v111
    %v368 = vunpack.c.h.b16 %v111
    %v369 = vunpack.c.l.b16 %v112
    %v370 = vunpack.c.h.b16 %v112
    %v371 = vunpack.c.l.b16 %v113
    %v372 = vunpack.c.h.b16 %v113
    %v373 = vunpack.c.l.b16 %v114
    %v374 = vunpack.c.h.b16 %v114
    %v375 = vunpack.c.l.b16 %v115
    %v376 = vunpack.c.h.b16 %v115
    %v377 = vunpack.c.l.b16 %v116
    %v378 = vunpack.c.h.b16 %v116
    %v379 = vunpack.c.l.b16 %v117
    %v380 = vunpack.c.h.b16 %v117
    %v381 = vunpack.c.l.b16 %v118
    %v382 = vunpack.c.h.b16 %v118
    %v383 = vunpack.c.l.b16 %v119
    %v384 = vunpack.c.h.b16 %v119
    %v385 = vunpack.c.l.b16 %v120
    %v386 = vunpack.c.h.b16 %v120
    %v387 = vunpack.c.l.b16 %v121
    %v388 = vunpack.c.h.b16 %v121
    %v389 = vunpack.c.l.b16 %v122
    %v390 = vunpack.c.h.b16 %v122
    %v391 = vunpack.c.l.b16 %v123
    %v392 = vunpack.c.h.b16 %v123
    %v393 = vunpack.c.l.b16 %v124
    %v394 = vunpack.c.h.b16 %v124
    %v395 = vunpack.c.l.b16 %v125
    %v396 = vunpack.c.h.b16 %v125
    %v397 = vunpack.c.l.b16 %v126
    %v398 = vunpack.c.h.b16 %v126
    %v399 = vunpack.c.l.b16 %v127
    %v400 = vunpack.c.h.b16 %v127
    %v401 = vunpack.c.l.b16 %v128
    %v402 = vunpack.c.h.b16 %v128
    %v403 = vunpack.c.l.b16 %v129
    %v404 = vunpack.c.h.b16 %v129
    %v405 = vunpack.c.l.b16 %v130
    %v406 = vunpack.c.h.b16 %v130
    %v407 = vunpack.c.l.b16 %v131
    %v408 = vunpack.c.h.b16 %v131
    %v409 = vunpack.c.l.b16 %v132
    %v410 = vunpack.c.h.b16 %v132
    %v411 = vunpack.c.l.b16 %v133
    %v412 = vunpack.c.h.b16 %v133
    %v413 = vunpack.c.l.b16 %v134
    %v414 = vunpack.c.h.b16 %v134
    %v415 = vunpack.c.l.b16 %v135
    %v416 = vunpack.c.h.b16 %v135
    %v417 = vunpack.c.l.b16 %v136
    %v418 = vunpack.c.h.b16 %v136
    %v419 = vunpack.c.l.b16 %v137
    %v420 = vunpack.c.h.b16 %v137
    %v421 = vunpack.c.l.b16 %v138
    %v422 = vunpack.c.h.b16 %v138
    %v423 = vunpack.c.l.b16 %v139
    %v424 = vunpack.c.h.b16 %v139
    %v425 = vunpack.c.l.b16 %v140
    %v426 = vunpack.c.h.b16 %v140
    %v427 = vunpack.c.l.b16 %v141
    %v428 = vunpack.c.h.b16 %v141
    %v429 = vunpack.c.l.b16 %v142
    %v430 = vunpack.c.h.b16 %v142
    %v431 = vunpack.c.l.b16 %v143
    %v432 = vunpack.c.h.b16 %v143
    %v433 = vunpack.c.l.b16 %v144
    %v434 = vunpack.c.h.b16 %v144
    %v435 = vunpack.c.l.b16 %v145
    %v436 = vunpack.c.h.b16 %v145
    %v437 = vunpack.c.l.b16 %v146
    %v438 = vunpack.c.h.b16 %v146
    %v439 = vunpack.c.l.b16 %v147
    %v440 = vunpack.c.h.b16 %v147
    %v441 = vunpack.c.l.b16 %v148
    %v442 = vunpack.c.h.b16 %v148
    %v443 = vunpack.c.l.b16 %v149
    %v444 = vunpack.c.h.b16 %v149
    %v445 = vunpack.c.l.b16 %v150
    %v446 = vunpack.c.h.b16 %v150
    %v447 = vunpack.c.l.b16 %v151
    %v448 = vunpack.c.h.b16 %v151
    %v449 = vunpack.c.l.b16 %v152
    %v450 = vunpack.c.h.b16 %v152
    %v451 = vunpack.c.l.b16 %v153
    %v452 = vunpack.c.h.b16 %v153
    %v453 = vunpack.c.l.b16 %v154
    %v454 = vunpack.c.h.b16 %v154
    %v455 = vunpack.c.l.b16 %v155
    %v456 = vunpack.c.h.b16 %v155
    %v457 = vunpack.c.l.b16 %v156
    %v458 = vunpack.c.h.b16 %v156
    %v459 = vunpack.c.l.b16 %v157
    %v460 = vunpack.c.h.b16 %v157
    %v461 = vunpack.c.l.b16 %v158
    %v462 = vunpack.c.h.b16 %v158
    %v463 = vunpack.c.l.b16 %v159
    %v464 = vunpack.c.h.b16 %v159
    %v465 = vunpack.c.l.b16 %v160
    %v466 = vunpack.c.h.b16 %v160
    %v467 = vunpack.c.l.b16 %v161
    %v468 = vunpack.c.h.b16 %v161
    %v469 = vunpack.c.l.b16 %v162
    %v470 = vunpack.c.h.b16 %v162
    %v471 = vunpack.c.l.b16 %v163
    %v472 = vunpack.c.h.b16 %v163
    %v473 = vunpack.c.l.b16 %v164
    %v474 = vunpack.c.h.b16 %v164
    %v475 = vunpack.c.l.b16 %v165
    %v476 = vunpack.c.h.b16 %v165
    %v477 = vunpack.c.l.b16 %v166
    %v478 = vunpack.c.h.b16 %v166
    %v479 = vunpack.c.l.b16 %v167
    %v480 = vunpack.c.h.b16 %v167
    %v481 = vunpack.c.l.b16 %v168
    %v482 = vunpack.c.h.b16 %v168
    %v483 = vunpack.c.l.b16 %v169
    %v484 = vunpack.c.h.b16 %v169
    %v485 = vunpack.c.l.b16 %v170
    %v486 = vunpack.c.h.b16 %v170
    %v487 = vunpack.c.l.b16 %v171
    %v488 = vunpack.c.h.b16 %v171
    %v489 = vunpack.c.l.b16 %v172
    %v490 = vunpack.c.h.b16 %v172
    %v491 = vunpack.c.l.b16 %v173
    %v492 = vunpack.c.h.b16 %v173
    %v493 = vunpack.c.l.b16 %v174
    %v494 = vunpack.c.h.b16 %v174
    %v495 = vunpack.c.l.b16 %v175
    %v496 = vunpack.c.h.b16 %v175
    %v497 = vunpack.c.l.b16 %v176
    %v498 = vunpack.c.h.b16 %v176
    %v499 = vunpack.c.l.b16 %v177
    %v500 = vunpack.c.h.b16 %v177
    %v501 = vunpack.c.l.b16 %v178
    %v502 = vunpack.c.h.b16 %v178
    %v503 = vunpack.c.l.b16 %v179
    %v504 = vunpack.c.h.b16 %v179
    %v505 = vunpack.c.l.b16 %v180
    %v506 = vunpack.c.h.b16 %v180
    %v507 = vunpack.c.l.b16 %v181
    %v508 = vunpack.c.h.b16 %v181
    %v509 = vunpack.c.l.b16 %v182
    %v510 = vunpack.c.h.b16 %v182
    %v511 = vunpack.c.l.b16 %v183
    %v512 = vunpack.c.h.b16 %v183
    %v513 = vunpack.c.l.b16 %v184
    %v514 = vunpack.c.h.b16 %v184
    %v515 = vunpack.c.l.b16 %v185
    %v516 = vunpack.c.h.b16 %v185
    %v517 = vunpack.c.l.b16 %v186
    %v518 = vunpack.c.h.b16 %v186
    %v519 = vunpack.c.l.b16 %v187
    %v520 = vunpack.c.h.b16 %v187
    %v521 = vunpack.c.l.b16 %v188
    %v522 = vunpack.c.h.b16 %v188
    %v523 = vunpack.c.l.b16 %v189
    %v524 = vunpack.c.h.b16 %v189
    %v525 = vunpack.c.l.b16 %v190
    %v526 = vunpack.c.h.b16 %v190
    %v527 = vpack.c.b16 %v341, %v335
    %v528 = vpack.c.b16 %v342, %v336
    %v529 = vpack.c.b16 %v343, %v337
    %v530 = vpack.c.b16 %v344, %v338
    %v531 = vpack.c.b16 %v345, %v339
    %v532 = vpack.c.b16 %v346, %v340
    %v533 = vpack.c.b16 %v353, %v347
    %v534 = vpack.c.b16 %v354, %v348
    %v535 = vpack.c.b16 %v355, %v349
    %v536 = vpack.c.b16 %v356, %v350
    %v537 = vpack.c.b16 %v357, %v351
    %v538 = vpack.c.b16 %v358, %v352
    %v539 = vpack.c.b16 %v365, %v359
    %v540 = vpack.c.b16 %v366, %v360
    %v541 = vpack.c.b16 %v367, %v361
    %v542 = vpack.c.b16 %v368, %v362
    %v543 = vpack.c.b16 %v369, %v363
    %v544 = vpack.c.b16 %v370, %v364
    %v545 = vpack.c.b16 %v377, %v371
    %v546 = vpack.c.b16 %v378, %v372
    %v547 = vpack.c.b16 %v379, %v373
    %v548 = vpack.c.b16 %v380, %v374
    %v549 = vpack.c.b16 %v381, %v375
    %v550 = vpack.c.b16 %v382, %v376
    %v551 = vpack.c.b16 %v389, %v383
    %v552 = vpack.c.b16 %v390, %v384
    %v553 = vpack.c.b16 %v391, %v385
    %v554 = vpack.c.b16 %v392, %v386
    %v555 = vpack.c.b16 %v393, %v387
    %v556 = vpack.c.b16 %v394, %v388
    %v557 = vpack.c.b16 %v401, %v395
    %v558 = vpack.c.b16 %v402, %v396
    %v559 = vpack.c.b16 %v403, %v397
    %v560 = vpack.c.b16 %v404, %v398
    %v561 = vpack.c.b16 %v405, %v399
    %v562 = vpack.c.b16 %v406, %v400
    %v563 = vpack.c.b16 %v413, %v407
    %v564 = vpack.c.b16 %v414, %v408
    %v565 = vpack.c.b16 %v415, %v409
    %v566 = vpack.c.b16 %v416, %v410
    %v567 = vpack.c.b16 %v417, %v411
    %v568 = vpack.c.b16 %v418, %v412
    %v569 = vpack.c.b16 %v425, %v419
    %v570 = vpack.c.b16 %v426, %v420
    %v571 = vpack.c.b16 %v427, %v421
    %v572 = vpack.c.b16 %v428, %v422
    %v573 = vpack.c.b16 %v429, %v423
    %v574 = vpack.c.b16 %v430, %v424
    %v575 = vpack.c.b16 %v437, %v431
    %v576 = vpack.c.b16 %v438, %v432
    %v577 = vpack.c.b16 %v439, %v433
    %v578 = vpack.c.b16 %v440, %v434
    %v579 = vpack.c.b16 %v441, %v435
    %v580 = vpack.c.b16 %v442, %v436
    %v581 = vpack.c.b16 %v449, %v443
    %v582 = vpack.c.b16 %v450, %v444
    %v583 = vpack.c.b16 %v451, %v445
    %v584 = vpack.c.b16 %v452, %v446
    %v585 = vpack.c.b16 %v453, %v447
    %v586 = vpack.c.b16 %v454, %v448
    %v587 = vpack.c.b16 %v461, %v455
    %v588 = vpack.c.b16 %v462, %v456
    %v589 = vpack.c.b16 %v463, %v457
    %v590 = vpack.c.b16 %v464, %v458
    %v591 = vpack.c.b16 %v465, %v459
    %v592 = vpack.c.b16 %v466, %v460
    %v593 = vpack.c.b16 %v473, %v467
    %v594 = vpack.c.b16 %v474, %v468
    %v595 = vpack.c.b16 %v475, %v469
    %v596 = vpack.c.b16 %v476, %v470
    %v597 = vpack.c.b16 %v477, %v471
    %v598 = vpack.c.b16 %v478, %v472
    %v599 = vpack.c.b16 %v485, %v479
    %v600 = vpack.c.b16 %v486, %v480
    %v601 = vpack.c.b16 %v487, %v481
    %v602 = vpack.c.b16 %v488, %v482
    %v603 = vpack.c.b16 %v489, %v483
    %v604 = vpack.c.b16 %v490, %v484
    %v605 = vpack.c.b16 %v497, %v491
    %v606 = vpack.c.b16 %v498, %v492
    %v607 = vpack.c.b16 %v499, %v493
    %v608 = vpack.c.b16 %v500, %v494
    %v609 = vpack.c.b16 %v501, %v495
    %v610 = vpack.c.b16 %v502, %v496
    %v611 = vpack.c.b16 %v509, %v503
    %v612 = vpack.c.b16 %v510, %v504
    %v613 = vpack.c.b16 %v511, %v505
    %v614 = vpack.c.b16 %v512, %v506
    %v615 = vpack.c.b16 %v513, %v507
    %v616 = vpack.c.b16 %v514, %v508
    %v617 = vpack.c.b16 %v521, %v515
    %v618 = vpack.c.b16 %v522, %v516
    %v619 = vpack.c.b16 %v523, %v517
    %v620 = vpack.c.b16 %v524, %v518
    %v621 = vpack.c.b16 %v525, %v519
    %v622 = vpack.c.b16 %v526, %v520
    %719 = vmatpush.bf16.msra.mxu0 %v569
    %720 = vmatpush.bf16.msra.mxu0 %v563
    %721 = vmatpush.bf16.msra.mxu0 %v557
    %722 = vmatpush.bf16.msra.mxu0 %v551
    %723 = vmatpush.bf16.msra.mxu0 %v545
    %724 = vmatpush.bf16.msra.mxu0 %v539
    %725 = vmatpush.bf16.msra.mxu0 %v533
    %726 = vmatpush.bf16.msra.mxu0 %v527
    %727 = vmatmul.bf16.gmra.mxu0 0
    %v728 = vpop.f32.mrf.mxu0
    %v729 = vadd.f32 0.0, %v728
    %v730 = vpop.f32.mrf.mxu0
    %731 = vdwg.mxu0
    %732 = vmatpush.bf16.msra.mxu0 %v617
    %733 = vmatpush.bf16.msra.mxu0 %v611
    %734 = vmatpush.bf16.msra.mxu0 %v605
    %735 = vmatpush.bf16.msra.mxu0 %v599
    %736 = vmatpush.bf16.msra.mxu0 %v593
    %737 = vmatpush.bf16.msra.mxu0 %v587
    %738 = vmatpush.bf16.msra.mxu0 %v581
    %739 = vmatpush.bf16.msra.mxu0 %v575
    %740 = vmatmul.bf16.gmra.mxu0 0
    %v741 = vpop.f32.mrf.mxu0
    %v742 = vadd.f32 %v729, %v741
    %v743 = vpop.f32.mrf.mxu0
    %744 = vdwg.mxu0
    %745 = vmatpush.bf16.msra.mxu0 %v570
    %746 = vmatpush.bf16.msra.mxu0 %v564
    %747 = vmatpush.bf16.msra.mxu0 %v558
    %748 = vmatpush.bf16.msra.mxu0 %v552
    %749 = vmatpush.bf16.msra.mxu0 %v546
    %750 = vmatpush.bf16.msra.mxu0 %v540
    %751 = vmatpush.bf16.msra.mxu0 %v534
    %752 = vmatpush.bf16.msra.mxu0 %v528
    %753 = vmatmul.bf16.gmra.mxu0 0
    %v754 = vpop.f32.mrf.mxu0
    %v755 = vadd.f32 0.0, %v754
    %v756 = vpop.f32.mrf.mxu0
    %757 = vdwg.mxu0
    %758 = vmatpush.bf16.msra.mxu0 %v618
    %759 = vmatpush.bf16.msra.mxu0 %v612
    %760 = vmatpush.bf16.msra.mxu0 %v606
    %761 = vmatpush.bf16.msra.mxu0 %v600
    %762 = vmatpush.bf16.msra.mxu0 %v594
    %763 = vmatpush.bf16.msra.mxu0 %v588
    %764 = vmatpush.bf16.msra.mxu0 %v582
    %765 = vmatpush.bf16.msra.mxu0 %v576
    %766 = vmatmul.bf16.gmra.mxu0 0
    %v767 = vpop.f32.mrf.mxu0
    %v768 = vadd.f32 %v755, %v767
    %v769 = vpop.f32.mrf.mxu0
    %770 = vdwg.mxu0
    %771 = vmatpush.bf16.msra.mxu0 %v571
    %772 = vmatpush.bf16.msra.mxu0 %v565
    %773 = vmatpush.bf16.msra.mxu0 %v559
    %774 = vmatpush.bf16.msra.mxu0 %v553
    %775 = vmatpush.bf16.msra.mxu0 %v547
    %776 = vmatpush.bf16.msra.mxu0 %v541
    %777 = vmatpush.bf16.msra.mxu0 %v535
    %778 = vmatpush.bf16.msra.mxu0 %v529
    %779 = vmatmul.bf16.gmra.mxu0 0
    %v780 = vpop.f32.mrf.mxu0
    %v781 = vadd.f32 0.0, %v780
    %v782 = vpop.f32.mrf.mxu0
    %783 = vdwg.mxu0
    %784 = vmatpush.bf16.msra.mxu0 %v619
    %785 = vmatpush.bf16.msra.mxu0 %v613
    %786 = vmatpush.bf16.msra.mxu0 %v607
    %787 = vmatpush.bf16.msra.mxu0 %v601
    %788 = vmatpush.bf16.msra.mxu0 %v595
    %789 = vmatpush.bf16.msra.mxu0 %v589
    %790 = vmatpush.bf16.msra.mxu0 %v583
    %791 = vmatpush.bf16.msra.mxu0 %v577
    %792 = vmatmul.bf16.gmra.mxu0 0
    %v793 = vpop.f32.mrf.mxu0
    %v794 = vadd.f32 %v781, %v793
    %v795 = vpop.f32.mrf.mxu0
    %796 = vdwg.mxu0
    %797 = vmatpush.bf16.msra.mxu0 %v572
    %798 = vmatpush.bf16.msra.mxu0 %v566
    %799 = vmatpush.bf16.msra.mxu0 %v560
    %800 = vmatpush.bf16.msra.mxu0 %v554
    %801 = vmatpush.bf16.msra.mxu0 %v548
    %802 = vmatpush.bf16.msra.mxu0 %v542
    %803 = vmatpush.bf16.msra.mxu0 %v536
    %804 = vmatpush.bf16.msra.mxu0 %v530
    %805 = vmatmul.bf16.gmra.mxu0 0
    %v806 = vpop.f32.mrf.mxu0
    %v807 = vadd.f32 0.0, %v806
    %v808 = vpop.f32.mrf.mxu0
    %809 = vdwg.mxu0
    %810 = vmatpush.bf16.msra.mxu0 %v620
    %811 = vmatpush.bf16.msra.mxu0 %v614
    %812 = vmatpush.bf16.msra.mxu0 %v608
    %813 = vmatpush.bf16.msra.mxu0 %v602
    %814 = vmatpush.bf16.msra.mxu0 %v596
    %815 = vmatpush.bf16.msra.mxu0 %v590
    %816 = vmatpush.bf16.msra.mxu0 %v584
    %817 = vmatpush.bf16.msra.mxu0 %v578
    %818 = vmatmul.bf16.gmra.mxu0 0
    %v819 = vpop.f32.mrf.mxu0
    %v820 = vadd.f32 %v807, %v819
    %v821 = vpop.f32.mrf.mxu0
    %822 = vdwg.mxu0
    %823 = vmatpush.bf16.msra.mxu0 %v573
    %824 = vmatpush.bf16.msra.mxu0 %v567
    %825 = vmatpush.bf16.msra.mxu0 %v561
    %826 = vmatpush.bf16.msra.mxu0 %v555
    %827 = vmatpush.bf16.msra.mxu0 %v549
    %828 = vmatpush.bf16.msra.mxu0 %v543
    %829 = vmatpush.bf16.msra.mxu0 %v537
    %830 = vmatpush.bf16.msra.mxu0 %v531
    %831 = vmatmul.bf16.gmra.mxu0 0
    %v832 = vpop.f32.mrf.mxu0
    %v833 = vadd.f32 0.0, %v832
    %v834 = vpop.f32.mrf.mxu0
    %835 = vdwg.mxu0
    %836 = vmatpush.bf16.msra.mxu0 %v621
    %837 = vmatpush.bf16.msra.mxu0 %v615
    %838 = vmatpush.bf16.msra.mxu0 %v609
    %839 = vmatpush.bf16.msra.mxu0 %v603
    %840 = vmatpush.bf16.msra.mxu0 %v597
    %841 = vmatpush.bf16.msra.mxu0 %v591
    %842 = vmatpush.bf16.msra.mxu0 %v585
    %843 = vmatpush.bf16.msra.mxu0 %v579
    %844 = vmatmul.bf16.gmra.mxu0 0
    %v845 = vpop.f32.mrf.mxu0
    %v846 = vadd.f32 %v833, %v845
    %v847 = vpop.f32.mrf.mxu0
    %848 = vdwg.mxu0
    %849 = vmatpush.bf16.msra.mxu0 %v574
    %850 = vmatpush.bf16.msra.mxu0 %v568
    %851 = vmatpush.bf16.msra.mxu0 %v562
    %852 = vmatpush.bf16.msra.mxu0 %v556
    %853 = vmatpush.bf16.msra.mxu0 %v550
    %854 = vmatpush.bf16.msra.mxu0 %v544
    %855 = vmatpush.bf16.msra.mxu0 %v538
    %856 = vmatpush.bf16.msra.mxu0 %v532
    %857 = vmatmul.bf16.gmra.mxu0 0
    %v858 = vpop.f32.mrf.mxu0
    %v859 = vadd.f32 0.0, %v858
    %v860 = vpop.f32.mrf.mxu0
    %861 = vdwg.mxu0
    %862 = vmatpush.bf16.msra.mxu0 %v622
    %863 = vmatpush.bf16.msra.mxu0 %v616
    %864 = vmatpush.bf16.msra.mxu0 %v610
    %865 = vmatpush.bf16.msra.mxu0 %v604
    %866 = vmatpush.bf16.msra.mxu0 %v598
    %867 = vmatpush.bf16.msra.mxu0 %v592
    %868 = vmatpush.bf16.msra.mxu0 %v586
    %869 = vmatpush.bf16.msra.mxu0 %v580
    %870 = vmatmul.bf16.gmra.mxu0 0
    %v871 = vpop.f32.mrf.mxu0
    %v872 = vadd.f32 %v859, %v871
    %v873 = vpop.f32.mrf.mxu0
    %874 = vdwg.mxu0
    %v875 = vld [vmem:[%s0] sm:$0xff]
    %v876 = vld [vmem:[%s0 + $0x8] sm:$0xff]
    %v877 = vld [vmem:[%s0 + $0x10] sm:$0xff]
    %v878 = vadd.f32 %v875, %v742
    %v879 = vadd.f32 %v876, %v768
    %v880 = vxor.u32 %v878, 2147483648
    %v881 = vxor.u32 %v879, 2147483648
    %v882 = vmul.f32 %v880, 1.442695
    %v883 = vpow.pop %v882
    %v884 = vmul.f32 %v881, 1.442695
    %v885 = vpow.pop %v884
    %v886 = vadd.f32 %v883, 1.0
    %v887 = vadd.f32 %v885, 1.0
    %v888 = vrcp.pop %v886
    %v889 = vmul.f32 %v886, %v888
    %v890 = vsub.f32 1.0, %v889
    %v891 = vmul.f32 %v888, %v890
    %v892 = vadd.f32 %v888, %v891
    %vm893 = vweird.f32 %v886
    %vm894 = vweird.f32 %v888
    %vm895 = vmor %vm893, %vm894
    %v896 = vsel %vm895, %v888, %v892
    %v897 = vand.u32 2147483647, %v886
    %vm898 = vcmp.eq.f32.partialorder %v897, 8.507059e+37
    %v899 = vand.u32 %v886, 2147483648
    %v900 = vor.u32 1.1754944e-38, %v899
    %v901 = vsel %vm898, %v900, %v896
    %v902 = vmul.f32 1.0, %v901
    %v903 = vrcp.pop %v887
    %v904 = vmul.f32 %v887, %v903
    %v905 = vsub.f32 1.0, %v904
    %v906 = vmul.f32 %v903, %v905
    %v907 = vadd.f32 %v903, %v906
    %vm908 = vweird.f32 %v887
    %vm909 = vweird.f32 %v903
    %vm910 = vmor %vm908, %vm909
    %v911 = vsel %vm910, %v903, %v907
    %v912 = vand.u32 2147483647, %v887
    %vm913 = vcmp.eq.f32.partialorder %v912, 8.507059e+37
    %v914 = vand.u32 %v887, 2147483648
    %v915 = vor.u32 1.1754944e-38, %v914
    %v916 = vsel %vm913, %v915, %v911
    %v917 = vmul.f32 1.0, %v916
    %v918 = vadd.f32 %v794, %v233
    %v919 = vmul.f32 %v902, %v918
    %v920 = vadd.f32 %v877, %v919
    %v921 = vtanh.pop %v920
    %v922 = vsub.f32 1.0, %v917
    %v923 = vmul.f32 %v922, %v921
    %v924 = vmul.f32 %v917, 0.0
    %v925 = vadd.f32 %v923, %v924
    %v926 = vpack.c.bf16 %v925, %v925
    %v959 = vunpack.c.l.b16 %v191
    %v960 = vunpack.c.h.b16 %v191
    %v961 = vunpack.c.l.b16 %v192
    %v962 = vunpack.c.l.b16 %v193
    %v963 = vunpack.c.h.b16 %v193
    %v964 = vunpack.c.l.b16 %v194
    %v965 = vunpack.c.l.b16 %v195
    %v966 = vunpack.c.h.b16 %v195
    %v967 = vunpack.c.l.b16 %v196
    %v968 = vunpack.c.l.b16 %v197
    %v969 = vunpack.c.h.b16 %v197
    %v970 = vunpack.c.l.b16 %v198
    %v971 = vunpack.c.l.b16 %v199
    %v972 = vunpack.c.h.b16 %v199
    %v973 = vunpack.c.l.b16 %v200
    %v974 = vunpack.c.l.b16 %v201
    %v975 = vunpack.c.h.b16 %v201
    %v976 = vunpack.c.l.b16 %v202
    %v977 = vunpack.c.l.b16 %v203
    %v978 = vunpack.c.h.b16 %v203
    %v979 = vunpack.c.l.b16 %v204
    %v980 = vunpack.c.l.b16 %v205
    %v981 = vunpack.c.h.b16 %v205
    %v982 = vunpack.c.l.b16 %v206
    %v983 = vunpack.c.l.b16 %v207
    %v984 = vunpack.c.h.b16 %v207
    %v985 = vunpack.c.l.b16 %v208
    %v986 = vunpack.c.l.b16 %v209
    %v987 = vunpack.c.h.b16 %v209
    %v988 = vunpack.c.l.b16 %v210
    %v989 = vunpack.c.l.b16 %v211
    %v990 = vunpack.c.h.b16 %v211
    %v991 = vunpack.c.l.b16 %v212
    %v992 = vunpack.c.l.b16 %v213
    %v993 = vunpack.c.h.b16 %v213
    %v994 = vunpack.c.l.b16 %v214
    %v995 = vunpack.c.l.b16 %v215
    %v996 = vunpack.c.h.b16 %v215
    %v997 = vunpack.c.l.b16 %v216
    %v998 = vunpack.c.l.b16 %v217
    %v999 = vunpack.c.h.b16 %v217
    %v1000 = vunpack.c.l.b16 %v218
    %v1001 = vunpack.c.l.b16 %v219
    %v1002 = vunpack.c.h.b16 %v219
    %v1003 = vunpack.c.l.b16 %v220
    %v1004 = vunpack.c.l.b16 %v221
    %v1005 = vunpack.c.h.b16 %v221
    %v1006 = vunpack.c.l.b16 %v222
    %v1007 = vpack.c.b16 %v962, %v959
    %v1008 = vpack.c.b16 %v963, %v960
    %v1009 = vpack.c.b16 %v964, %v961
    %v1010 = vpack.c.b16 %v968, %v965
    %v1011 = vpack.c.b16 %v969, %v966
    %v1012 = vpack.c.b16 %v970, %v967
    %v1013 = vpack.c.b16 %v974, %v971
    %v1014 = vpack.c.b16 %v975, %v972
    %v1015 = vpack.c.b16 %v976, %v973
    %v1016 = vpack.c.b16 %v980, %v977
    %v1017 = vpack.c.b16 %v981, %v978
    %v1018 = vpack.c.b16 %v982, %v979
    %v1019 = vpack.c.b16 %v986, %v983
    %v1020 = vpack.c.b16 %v987, %v984
    %v1021 = vpack.c.b16 %v988, %v985
    %v1022 = vpack.c.b16 %v992, %v989
    %v1023 = vpack.c.b16 %v993, %v990
    %v1024 = vpack.c.b16 %v994, %v991
    %v1025 = vpack.c.b16 %v998, %v995
    %v1026 = vpack.c.b16 %v999, %v996
    %v1027 = vpack.c.b16 %v1000, %v997
    %v1028 = vpack.c.b16 %v1004, %v1001
    %v1029 = vpack.c.b16 %v1005, %v1002
    %v1030 = vpack.c.b16 %v1006, %v1003
    %1055 = vmatpush.bf16.msra.mxu0 %v1028
    %1056 = vmatpush.bf16.msra.mxu0 %v1025
    %1057 = vmatpush.bf16.msra.mxu0 %v1022
    %1058 = vmatpush.bf16.msra.mxu0 %v1019
    %1059 = vmatpush.bf16.msra.mxu0 %v1016
    %1060 = vmatpush.bf16.msra.mxu0 %v1013
    %1061 = vmatpush.bf16.msra.mxu0 %v1010
    %1062 = vmatpush.bf16.msra.mxu0 %v1007
    %1063 = vmatmul.bf16.gmra.mxu0 %v926
    %v1064 = vpop.f32.mrf.mxu0
    %v1065 = vadd.f32 %v225, %v1064
    %v1066 = vpop.f32.mrf.mxu0
    %1067 = vdwg.mxu0
    %1068 = vmatpush.bf16.msra.mxu0 %v1029
    %1069 = vmatpush.bf16.msra.mxu0 %v1026
    %1070 = vmatpush.bf16.msra.mxu0 %v1023
    %1071 = vmatpush.bf16.msra.mxu0 %v1020
    %1072 = vmatpush.bf16.msra.mxu0 %v1017
    %1073 = vmatpush.bf16.msra.mxu0 %v1014
    %1074 = vmatpush.bf16.msra.mxu0 %v1011
    %1075 = vmatpush.bf16.msra.mxu0 %v1008
    %1076 = vmatmul.bf16.gmra.mxu0 %v926
    %v1077 = vpop.f32.mrf.mxu0
    %v1078 = vadd.f32 %v226, %v1077
    %v1079 = vpop.f32.mrf.mxu0
    %1080 = vdwg.mxu0
    %1081 = vmatpush.bf16.msra.mxu0 %v1030
    %1082 = vmatpush.bf16.msra.mxu0 %v1027
    %1083 = vmatpush.bf16.msra.mxu0 %v1024
    %1084 = vmatpush.bf16.msra.mxu0 %v1021
    %1085 = vmatpush.bf16.msra.mxu0 %v1018
    %1086 = vmatpush.bf16.msra.mxu0 %v1015
    %1087 = vmatpush.bf16.msra.mxu0 %v1012
    %1088 = vmatpush.bf16.msra.mxu0 %v1009
    %1089 = vmatmul.bf16.gmra.mxu0 %v926
    %v1090 = vpop.f32.mrf.mxu0
    %v1091 = vadd.f32 %v227, %v1090
    %v1092 = vpop.f32.mrf.mxu0
    %1093 = vdwg.mxu0
    %v1094 = vadd.f32 %v1065, %v820
    %v1095 = vadd.f32 %v1078, %v846
    %v1096 = vxor.u32 %v1094, 2147483648
    %v1097 = vxor.u32 %v1095, 2147483648
    %v1098 = vmul.f32 %v1096, 1.442695
    %v1099 = vpow.pop %v1098
    %v1100 = vmul.f32 %v1097, 1.442695
    %v1101 = vpow.pop %v1100
    %v1102 = vadd.f32 %v1099, 1.0
    %v1103 = vadd.f32 %v1101, 1.0
    %v1104 = vrcp.pop %v1102
    %v1105 = vmul.f32 %v1102, %v1104
    %v1106 = vsub.f32 1.0, %v1105
    %v1107 = vmul.f32 %v1104, %v1106
    %v1108 = vadd.f32 %v1104, %v1107
    %vm1109 = vweird.f32 %v1102
    %vm1110 = vweird.f32 %v1104
    %vm1111 = vmor %vm1109, %vm1110
    %v1112 = vsel %vm1111, %v1104, %v1108
    %v1113 = vand.u32 2147483647, %v1102
    %vm1114 = vcmp.eq.f32.partialorder %v1113, 8.507059e+37
    %v1115 = vand.u32 %v1102, 2147483648
    %v1116 = vor.u32 1.1754944e-38, %v1115
    %v1117 = vsel %vm1114, %v1116, %v1112
    %v1118 = vmul.f32 1.0, %v1117
    %v1119 = vrcp.pop %v1103
    %v1120 = vmul.f32 %v1103, %v1119
    %v1121 = vsub.f32 1.0, %v1120
    %v1122 = vmul.f32 %v1119, %v1121
    %v1123 = vadd.f32 %v1119, %v1122
    %vm1124 = vweird.f32 %v1103
    %vm1125 = vweird.f32 %v1119
    %vm1126 = vmor %vm1124, %vm1125
    %v1127 = vsel %vm1126, %v1119, %v1123
    %v1128 = vand.u32 2147483647, %v1103
    %vm1129 = vcmp.eq.f32.partialorder %v1128, 8.507059e+37
    %v1130 = vand.u32 %v1103, 2147483648
    %v1131 = vor.u32 1.1754944e-38, %v1130
    %v1132 = vsel %vm1129, %v1131, %v1127
    %v1133 = vmul.f32 1.0, %v1132
    %v1134 = vadd.f32 %v872, %v237
    %v1135 = vmul.f32 %v1118, %v1134
    %v1136 = vadd.f32 %v1091, %v1135
    %v1137 = vtanh.pop %v1136
    %v1138 = vsub.f32 1.0, %v1133
    %v1139 = vmul.f32 %v1138, %v1137
    %v1140 = vmul.f32 %v1133, 0.0
    %v1141 = vadd.f32 %v1139, %v1140
    %v1142 = vpack.c.bf16 %v1141, %v1141
    %1143 = vmatpush.bf16.msra.mxu0 %v569
    %1144 = vmatpush.bf16.msra.mxu0 %v563
    %1145 = vmatpush.bf16.msra.mxu0 %v557
    %1146 = vmatpush.bf16.msra.mxu0 %v551
    %1147 = vmatpush.bf16.msra.mxu0 %v545
    %1148 = vmatpush.bf16.msra.mxu0 %v539
    %1149 = vmatpush.bf16.msra.mxu0 %v533
    %1150 = vmatpush.bf16.msra.mxu0 %v527
    %1151 = vmatmul.bf16.gmra.mxu0 %v926
    %v1152 = vpop.f32.mrf.mxu0
    %v1153 = vadd.f32 0.0, %v1152
    %v1154 = vpop.f32.mrf.mxu0
    %1155 = vdwg.mxu0
    %1156 = vmatpush.bf16.msra.mxu0 %v617
    %1157 = vmatpush.bf16.msra.mxu0 %v611
    %1158 = vmatpush.bf16.msra.mxu0 %v605
    %1159 = vmatpush.bf16.msra.mxu0 %v599
    %1160 = vmatpush.bf16.msra.mxu0 %v593
    %1161 = vmatpush.bf16.msra.mxu0 %v587
    %1162 = vmatpush.bf16.msra.mxu0 %v581
    %1163 = vmatpush.bf16.msra.mxu0 %v575
    %1164 = vmatmul.bf16.gmra.mxu0 %v1142
    %v1165 = vpop.f32.mrf.mxu0
    %v1166 = vadd.f32 %v1153, %v1165
    %v1167 = vpop.f32.mrf.mxu0
    %1168 = vdwg.mxu0
    %1169 = vmatpush.bf16.msra.mxu0 %v570
    %1170 = vmatpush.bf16.msra.mxu0 %v564
    %1171 = vmatpush.bf16.msra.mxu0 %v558
    %1172 = vmatpush.bf16.msra.mxu0 %v552
    %1173 = vmatpush.bf16.msra.mxu0 %v546
    %1174 = vmatpush.bf16.msra.mxu0 %v540
    %1175 = vmatpush.bf16.msra.mxu0 %v534
    %1176 = vmatpush.bf16.msra.mxu0 %v528
    %1177 = vmatmul.bf16.gmra.mxu0 %v926
    %v1178 = vpop.f32.mrf.mxu0
    %v1179 = vadd.f32 0.0, %v1178
    %v1180 = vpop.f32.mrf.mxu0
    %1181 = vdwg.mxu0
    %1182 = vmatpush.bf16.msra.mxu0 %v618
    %1183 = vmatpush.bf16.msra.mxu0 %v612
    %1184 = vmatpush.bf16.msra.mxu0 %v606
    %1185 = vmatpush.bf16.msra.mxu0 %v600
    %1186 = vmatpush.bf16.msra.mxu0 %v594
    %1187 = vmatpush.bf16.msra.mxu0 %v588
    %1188 = vmatpush.bf16.msra.mxu0 %v582
    %1189 = vmatpush.bf16.msra.mxu0 %v576
    %1190 = vmatmul.bf16.gmra.mxu0 %v1142
    %v1191 = vpop.f32.mrf.mxu0
    %v1192 = vadd.f32 %v1179, %v1191
    %v1193 = vpop.f32.mrf.mxu0
    %1194 = vdwg.mxu0
    %1195 = vmatpush.bf16.msra.mxu0 %v571
    %1196 = vmatpush.bf16.msra.mxu0 %v565
    %1197 = vmatpush.bf16.msra.mxu0 %v559
    %1198 = vmatpush.bf16.msra.mxu0 %v553
    %1199 = vmatpush.bf16.msra.mxu0 %v547
    %1200 = vmatpush.bf16.msra.mxu0 %v541
    %1201 = vmatpush.bf16.msra.mxu0 %v535
    %1202 = vmatpush.bf16.msra.mxu0 %v529
    %1203 = vmatmul.bf16.gmra.mxu0 %v926
    %v1204 = vpop.f32.mrf.mxu0
    %v1205 = vadd.f32 0.0, %v1204
    %v1206 = vpop.f32.mrf.mxu0
    %1207 = vdwg.mxu0
    %1208 = vmatpush.bf16.msra.mxu0 %v619
    %1209 = vmatpush.bf16.msra.mxu0 %v613
    %1210 = vmatpush.bf16.msra.mxu0 %v607
    %1211 = vmatpush.bf16.msra.mxu0 %v601
    %1212 = vmatpush.bf16.msra.mxu0 %v595
    %1213 = vmatpush.bf16.msra.mxu0 %v589
    %1214 = vmatpush.bf16.msra.mxu0 %v583
    %1215 = vmatpush.bf16.msra.mxu0 %v577
    %1216 = vmatmul.bf16.gmra.mxu0 %v1142
    %v1217 = vpop.f32.mrf.mxu0
    %v1218 = vadd.f32 %v1205, %v1217
    %v1219 = vpop.f32.mrf.mxu0
    %1220 = vdwg.mxu0
    %1221 = vmatpush.bf16.msra.mxu0 %v572
    %1222 = vmatpush.bf16.msra.mxu0 %v566
    %1223 = vmatpush.bf16.msra.mxu0 %v560
    %1224 = vmatpush.bf16.msra.mxu0 %v554
    %1225 = vmatpush.bf16.msra.mxu0 %v548
    %1226 = vmatpush.bf16.msra.mxu0 %v542
    %1227 = vmatpush.bf16.msra.mxu0 %v536
    %1228 = vmatpush.bf16.msra.mxu0 %v530
    %1229 = vmatmul.bf16.gmra.mxu0 %v926
    %v1230 = vpop.f32.mrf.mxu0
    %v1231 = vadd.f32 0.0, %v1230
    %v1232 = vpop.f32.mrf.mxu0
    %1233 = vdwg.mxu0
    %1234 = vmatpush.bf16.msra.mxu0 %v620
    %1235 = vmatpush.bf16.msra.mxu0 %v614
    %1236 = vmatpush.bf16.msra.mxu0 %v608
    %1237 = vmatpush.bf16.msra.mxu0 %v602
    %1238 = vmatpush.bf16.msra.mxu0 %v596
    %1239 = vmatpush.bf16.msra.mxu0 %v590
    %1240 = vmatpush.bf16.msra.mxu0 %v584
    %1241 = vmatpush.bf16.msra.mxu0 %v578
    %1242 = vmatmul.bf16.gmra.mxu0 %v1142
    %v1243 = vpop.f32.mrf.mxu0
    %v1244 = vadd.f32 %v1231, %v1243
    %v1245 = vpop.f32.mrf.mxu0
    %1246 = vdwg.mxu0
    %1247 = vmatpush.bf16.msra.mxu0 %v573
    %1248 = vmatpush.bf16.msra.mxu0 %v567
    %1249 = vmatpush.bf16.msra.mxu0 %v561
    %1250 = vmatpush.bf16.msra.mxu0 %v555
    %1251 = vmatpush.bf16.msra.mxu0 %v549
    %1252 = vmatpush.bf16.msra.mxu0 %v543
    %1253 = vmatpush.bf16.msra.mxu0 %v537
    %1254 = vmatpush.bf16.msra.mxu0 %v531
    %1255 = vmatmul.bf16.gmra.mxu0 %v926
    %v1256 = vpop.f32.mrf.mxu0
    %v1257 = vadd.f32 0.0, %v1256
    %v1258 = vpop.f32.mrf.mxu0
    %1259 = vdwg.mxu0
    %1260 = vmatpush.bf16.msra.mxu0 %v621
    %1261 = vmatpush.bf16.msra.mxu0 %v615
    %1262 = vmatpush.bf16.msra.mxu0 %v609
    %1263 = vmatpush.bf16.msra.mxu0 %v603
    %1264 = vmatpush.bf16.msra.mxu0 %v597
    %1265 = vmatpush.bf16.msra.mxu0 %v591
    %1266 = vmatpush.bf16.msra.mxu0 %v585
    %1267 = vmatpush.bf16.msra.mxu0 %v579
    %1268 = vmatmul.bf16.gmra.mxu0 %v1142
    %v1269 = vpop.f32.mrf.mxu0
    %v1270 = vadd.f32 %v1257, %v1269
    %v1271 = vpop.f32.mrf.mxu0
    %1272 = vdwg.mxu0
    %1273 = vmatpush.bf16.msra.mxu0 %v574
    %1274 = vmatpush.bf16.msra.mxu0 %v568
    %1275 = vmatpush.bf16.msra.mxu0 %v562
    %1276 = vmatpush.bf16.msra.mxu0 %v556
    %1277 = vmatpush.bf16.msra.mxu0 %v550
    %1278 = vmatpush.bf16.msra.mxu0 %v544
    %1279 = vmatpush.bf16.msra.mxu0 %v538
    %1280 = vmatpush.bf16.msra.mxu0 %v532
    %1281 = vmatmul.bf16.gmra.mxu0 %v926
    %v1282 = vpop.f32.mrf.mxu0
    %v1283 = vadd.f32 0.0, %v1282
    %v1284 = vpop.f32.mrf.mxu0
    %1285 = vdwg.mxu0
    %1286 = vmatpush.bf16.msra.mxu0 %v622
    %1287 = vmatpush.bf16.msra.mxu0 %v616
    %1288 = vmatpush.bf16.msra.mxu0 %v610
    %1289 = vmatpush.bf16.msra.mxu0 %v604
    %1290 = vmatpush.bf16.msra.mxu0 %v598
    %1291 = vmatpush.bf16.msra.mxu0 %v592
    %1292 = vmatpush.bf16.msra.mxu0 %v586
    %1293 = vmatpush.bf16.msra.mxu0 %v580
    %1294 = vmatmul.bf16.gmra.mxu0 %v1142
    %v1295 = vpop.f32.mrf.mxu0
    %v1296 = vadd.f32 %v1283, %v1295
    %v1297 = vpop.f32.mrf.mxu0
    %1298 = vdwg.mxu0
    %s1299 = scalar_lea.vmem %s0, 24
    %v1300 = vld [vmem:[%s1299] sm:$0xff]
    %v1301 = vld [vmem:[%s1299 + $0x8] sm:$0xff]
    %v1302 = vld [vmem:[%s1299 + $0x10] sm:$0xff]
    %v1303 = vadd.f32 %v1300, %v1166
    %v1304 = vadd.f32 %v1301, %v1192
    %v1305 = vxor.u32 %v1303, 2147483648
    %v1306 = vxor.u32 %v1304, 2147483648
    %v1307 = vmul.f32 %v1305, 1.442695
    %v1308 = vpow.pop %v1307
    %v1309 = vmul.f32 %v1306, 1.442695
    %v1310 = vpow.pop %v1309
    %v1311 = vadd.f32 %v1308, 1.0
    %v1312 = vadd.f32 %v1310, 1.0
    %v1313 = vrcp.pop %v1311
    %v1314 = vmul.f32 %v1311, %v1313
    %v1315 = vsub.f32 1.0, %v1314
    %v1316 = vmul.f32 %v1313, %v1315
    %v1317 = vadd.f32 %v1313, %v1316
    %vm1318 = vweird.f32 %v1311
    %vm1319 = vweird.f32 %v1313
    %vm1320 = vmor %vm1318, %vm1319
    %v1321 = vsel %vm1320, %v1313, %v1317
    %v1322 = vand.u32 2147483647, %v1311
    %vm1323 = vcmp.eq.f32.partialorder %v1322, 8.507059e+37
    %v1324 = vand.u32 %v1311, 2147483648
    %v1325 = vor.u32 1.1754944e-38, %v1324
    %v1326 = vsel %vm1323, %v1325, %v1321
    %v1327 = vmul.f32 1.0, %v1326
    %v1328 = vrcp.pop %v1312
    %v1329 = vmul.f32 %v1312, %v1328
    %v1330 = vsub.f32 1.0, %v1329
    %v1331 = vmul.f32 %v1328, %v1330
    %v1332 = vadd.f32 %v1328, %v1331
    %vm1333 = vweird.f32 %v1312
    %vm1334 = vweird.f32 %v1328
    %vm1335 = vmor %vm1333, %vm1334
    %v1336 = vsel %vm1335, %v1328, %v1332
    %v1337 = vand.u32 2147483647, %v1312
    %vm1338 = vcmp.eq.f32.partialorder %v1337, 8.507059e+37
    %v1339 = vand.u32 %v1312, 2147483648
    %v1340 = vor.u32 1.1754944e-38, %v1339
    %v1341 = vsel %vm1338, %v1340, %v1336
    %v1342 = vmul.f32 1.0, %v1341
    %v1343 = vadd.f32 %v1218, %v233
    %v1344 = vmul.f32 %v1327, %v1343
    %v1345 = vadd.f32 %v1302, %v1344
    %v1346 = vtanh.pop %v1345
    %v1347 = vsub.f32 1.0, %v1342
    %v1348 = vmul.f32 %v1347, %v1346
    %v1349 = vmul.f32 %v1342, %v925
    %v1350 = vadd.f32 %v1348, %v1349
    %v1351 = vpack.c.bf16 %v1350, %v1350
    %1352 = vmatpush.bf16.msra.mxu0 %v1028
    %1353 = vmatpush.bf16.msra.mxu0 %v1025
    %1354 = vmatpush.bf16.msra.mxu0 %v1022
    %1355 = vmatpush.bf16.msra.mxu0 %v1019
    %1356 = vmatpush.bf16.msra.mxu0 %v1016
    %1357 = vmatpush.bf16.msra.mxu0 %v1013
    %1358 = vmatpush.bf16.msra.mxu0 %v1010
    %1359 = vmatpush.bf16.msra.mxu0 %v1007
    %1360 = vmatmul.bf16.gmra.mxu0 %v1351
    %v1361 = vpop.f32.mrf.mxu0
    %v1362 = vadd.f32 %v225, %v1361
    %v1363 = vpop.f32.mrf.mxu0
    %1364 = vdwg.mxu0
    %1365 = vmatpush.bf16.msra.mxu0 %v1029
    %1366 = vmatpush.bf16.msra.mxu0 %v1026
    %1367 = vmatpush.bf16.msra.mxu0 %v1023
    %1368 = vmatpush.bf16.msra.mxu0 %v1020
    %1369 = vmatpush.bf16.msra.mxu0 %v1017
    %1370 = vmatpush.bf16.msra.mxu0 %v1014
    %1371 = vmatpush.bf16.msra.mxu0 %v1011
    %1372 = vmatpush.bf16.msra.mxu0 %v1008
    %1373 = vmatmul.bf16.gmra.mxu0 %v1351
    %v1374 = vpop.f32.mrf.mxu0
    %v1375 = vadd.f32 %v226, %v1374
    %v1376 = vpop.f32.mrf.mxu0
    %1377 = vdwg.mxu0
    %1378 = vmatpush.bf16.msra.mxu0 %v1030
    %1379 = vmatpush.bf16.msra.mxu0 %v1027
    %1380 = vmatpush.bf16.msra.mxu0 %v1024
    %1381 = vmatpush.bf16.msra.mxu0 %v1021
    %1382 = vmatpush.bf16.msra.mxu0 %v1018
    %1383 = vmatpush.bf16.msra.mxu0 %v1015
    %1384 = vmatpush.bf16.msra.mxu0 %v1012
    %1385 = vmatpush.bf16.msra.mxu0 %v1009
    %1386 = vmatmul.bf16.gmra.mxu0 %v1351
    %v1387 = vpop.f32.mrf.mxu0
    %v1388 = vadd.f32 %v227, %v1387
    %v1389 = vpop.f32.mrf.mxu0
    %1390 = vdwg.mxu0
    %v1391 = vadd.f32 %v1362, %v1244
    %v1392 = vadd.f32 %v1375, %v1270
    %v1393 = vxor.u32 %v1391, 2147483648
    %v1394 = vxor.u32 %v1392, 2147483648
    %v1395 = vmul.f32 %v1393, 1.442695
    %v1396 = vpow.pop %v1395
    %v1397 = vmul.f32 %v1394, 1.442695
    %v1398 = vpow.pop %v1397
    %v1399 = vadd.f32 %v1396, 1.0
    %v1400 = vadd.f32 %v1398, 1.0
    %v1401 = vrcp.pop %v1399
    %v1402 = vmul.f32 %v1399, %v1401
    %v1403 = vsub.f32 1.0, %v1402
    %v1404 = vmul.f32 %v1401, %v1403
    %v1405 = vadd.f32 %v1401, %v1404
    %vm1406 = vweird.f32 %v1399
    %vm1407 = vweird.f32 %v1401
    %vm1408 = vmor %vm1406, %vm1407
    %v1409 = vsel %vm1408, %v1401, %v1405
    %v1410 = vand.u32 2147483647, %v1399
    %vm1411 = vcmp.eq.f32.partialorder %v1410, 8.507059e+37
    %v1412 = vand.u32 %v1399, 2147483648
    %v1413 = vor.u32 1.1754944e-38, %v1412
    %v1414 = vsel %vm1411, %v1413, %v1409
    %v1415 = vmul.f32 1.0, %v1414
    %v1416 = vrcp.pop %v1400
    %v1417 = vmul.f32 %v1400, %v1416
    %v1418 = vsub.f32 1.0, %v1417
    %v1419 = vmul.f32 %v1416, %v1418
    %v1420 = vadd.f32 %v1416, %v1419
    %vm1421 = vweird.f32 %v1400
    %vm1422 = vweird.f32 %v1416
    %vm1423 = vmor %vm1421, %vm1422
    %v1424 = vsel %vm1423, %v1416, %v1420
    %v1425 = vand.u32 2147483647, %v1400
    %vm1426 = vcmp.eq.f32.partialorder %v1425, 8.507059e+37
    %v1427 = vand.u32 %v1400, 2147483648
    %v1428 = vor.u32 1.1754944e-38, %v1427
    %v1429 = vsel %vm1426, %v1428, %v1424
    %v1430 = vmul.f32 1.0, %v1429
    %v1431 = vadd.f32 %v1296, %v237
    %v1432 = vmul.f32 %v1415, %v1431
    %v1433 = vadd.f32 %v1388, %v1432
    %v1434 = vtanh.pop %v1433
    %v1435 = vsub.f32 1.0, %v1430
    %v1436 = vmul.f32 %v1435, %v1434
    %v1437 = vmul.f32 %v1430, %v1141
    %v1438 = vadd.f32 %v1436, %v1437
    %v1439 = vpack.c.bf16 %v1438, %v1438
    %1440 = vmatpush.bf16.msra.mxu0 %v569
    %1441 = vmatpush.bf16.msra.mxu0 %v563
    %1442 = vmatpush.bf16.msra.mxu0 %v557
    %1443 = vmatpush.bf16.msra.mxu0 %v551
    %1444 = vmatpush.bf16.msra.mxu0 %v545
    %1445 = vmatpush.bf16.msra.mxu0 %v539
    %1446 = vmatpush.bf16.msra.mxu0 %v533
    %1447 = vmatpush.bf16.msra.mxu0 %v527
    %1448 = vmatmul.bf16.gmra.mxu0 %v1351
    %v1449 = vpop.f32.mrf.mxu0
    %v1450 = vadd.f32 0.0, %v1449
    %v1451 = vpop.f32.mrf.mxu0
    %1452 = vdwg.mxu0
    %1453 = vmatpush.bf16.msra.mxu0 %v617
    %1454 = vmatpush.bf16.msra.mxu0 %v611
    %1455 = vmatpush.bf16.msra.mxu0 %v605
    %1456 = vmatpush.bf16.msra.mxu0 %v599
    %1457 = vmatpush.bf16.msra.mxu0 %v593
    %1458 = vmatpush.bf16.msra.mxu0 %v587
    %1459 = vmatpush.bf16.msra.mxu0 %v581
    %1460 = vmatpush.bf16.msra.mxu0 %v575
    %1461 = vmatmul.bf16.gmra.mxu0 %v1439
    %v1462 = vpop.f32.mrf.mxu0
    %v1463 = vadd.f32 %v1450, %v1462
    %v1464 = vpop.f32.mrf.mxu0
    %1465 = vdwg.mxu0
    %1466 = vmatpush.bf16.msra.mxu0 %v570
    %1467 = vmatpush.bf16.msra.mxu0 %v564
    %1468 = vmatpush.bf16.msra.mxu0 %v558
    %1469 = vmatpush.bf16.msra.mxu0 %v552
    %1470 = vmatpush.bf16.msra.mxu0 %v546
    %1471 = vmatpush.bf16.msra.mxu0 %v540
    %1472 = vmatpush.bf16.msra.mxu0 %v534
    %1473 = vmatpush.bf16.msra.mxu0 %v528
    %1474 = vmatmul.bf16.gmra.mxu0 %v1351
    %v1475 = vpop.f32.mrf.mxu0
    %v1476 = vadd.f32 0.0, %v1475
    %v1477 = vpop.f32.mrf.mxu0
    %1478 = vdwg.mxu0
    %1479 = vmatpush.bf16.msra.mxu0 %v618
    %1480 = vmatpush.bf16.msra.mxu0 %v612
    %1481 = vmatpush.bf16.msra.mxu0 %v606
    %1482 = vmatpush.bf16.msra.mxu0 %v600
    %1483 = vmatpush.bf16.msra.mxu0 %v594
    %1484 = vmatpush.bf16.msra.mxu0 %v588
    %1485 = vmatpush.bf16.msra.mxu0 %v582
    %1486 = vmatpush.bf16.msra.mxu0 %v576
    %1487 = vmatmul.bf16.gmra.mxu0 %v1439
    %v1488 = vpop.f32.mrf.mxu0
    %v1489 = vadd.f32 %v1476, %v1488
    %v1490 = vpop.f32.mrf.mxu0
    %1491 = vdwg.mxu0
    %1492 = vmatpush.bf16.msra.mxu0 %v571
    %1493 = vmatpush.bf16.msra.mxu0 %v565
    %1494 = vmatpush.bf16.msra.mxu0 %v559
    %1495 = vmatpush.bf16.msra.mxu0 %v553
    %1496 = vmatpush.bf16.msra.mxu0 %v547
    %1497 = vmatpush.bf16.msra.mxu0 %v541
    %1498 = vmatpush.bf16.msra.mxu0 %v535
    %1499 = vmatpush.bf16.msra.mxu0 %v529
    %1500 = vmatmul.bf16.gmra.mxu0 %v1351
    %v1501 = vpop.f32.mrf.mxu0
    %v1502 = vadd.f32 0.0, %v1501
    %v1503 = vpop.f32.mrf.mxu0
    %1504 = vdwg.mxu0
    %1505 = vmatpush.bf16.msra.mxu0 %v619
    %1506 = vmatpush.bf16.msra.mxu0 %v613
    %1507 = vmatpush.bf16.msra.mxu0 %v607
    %1508 = vmatpush.bf16.msra.mxu0 %v601
    %1509 = vmatpush.bf16.msra.mxu0 %v595
    %1510 = vmatpush.bf16.msra.mxu0 %v589
    %1511 = vmatpush.bf16.msra.mxu0 %v583
    %1512 = vmatpush.bf16.msra.mxu0 %v577
    %1513 = vmatmul.bf16.gmra.mxu0 %v1439
    %v1514 = vpop.f32.mrf.mxu0
    %v1515 = vadd.f32 %v1502, %v1514
    %v1516 = vpop.f32.mrf.mxu0
    %1517 = vdwg.mxu0
    %1518 = vmatpush.bf16.msra.mxu0 %v572
    %1519 = vmatpush.bf16.msra.mxu0 %v566
    %1520 = vmatpush.bf16.msra.mxu0 %v560
    %1521 = vmatpush.bf16.msra.mxu0 %v554
    %1522 = vmatpush.bf16.msra.mxu0 %v548
    %1523 = vmatpush.bf16.msra.mxu0 %v542
    %1524 = vmatpush.bf16.msra.mxu0 %v536
    %1525 = vmatpush.bf16.msra.mxu0 %v530
    %1526 = vmatmul.bf16.gmra.mxu0 %v1351
    %v1527 = vpop.f32.mrf.mxu0
    %v1528 = vadd.f32 0.0, %v1527
    %v1529 = vpop.f32.mrf.mxu0
    %1530 = vdwg.mxu0
    %1531 = vmatpush.bf16.msra.mxu0 %v620
    %1532 = vmatpush.bf16.msra.mxu0 %v614
    %1533 = vmatpush.bf16.msra.mxu0 %v608
    %1534 = vmatpush.bf16.msra.mxu0 %v602
    %1535 = vmatpush.bf16.msra.mxu0 %v596
    %1536 = vmatpush.bf16.msra.mxu0 %v590
    %1537 = vmatpush.bf16.msra.mxu0 %v584
    %1538 = vmatpush.bf16.msra.mxu0 %v578
    %1539 = vmatmul.bf16.gmra.mxu0 %v1439
    %v1540 = vpop.f32.mrf.mxu0
    %v1541 = vadd.f32 %v1528, %v1540
    %v1542 = vpop.f32.mrf.mxu0
    %1543 = vdwg.mxu0
    %1544 = vmatpush.bf16.msra.mxu0 %v573
    %1545 = vmatpush.bf16.msra.mxu0 %v567
    %1546 = vmatpush.bf16.msra.mxu0 %v561
    %1547 = vmatpush.bf16.msra.mxu0 %v555
    %1548 = vmatpush.bf16.msra.mxu0 %v549
    %1549 = vmatpush.bf16.msra.mxu0 %v543
    %1550 = vmatpush.bf16.msra.mxu0 %v537
    %1551 = vmatpush.bf16.msra.mxu0 %v531
    %1552 = vmatmul.bf16.gmra.mxu0 %v1351
    %v1553 = vpop.f32.mrf.mxu0
    %v1554 = vadd.f32 0.0, %v1553
    %v1555 = vpop.f32.mrf.mxu0
    %1556 = vdwg.mxu0
    %1557 = vmatpush.bf16.msra.mxu0 %v621
    %1558 = vmatpush.bf16.msra.mxu0 %v615
    %1559 = vmatpush.bf16.msra.mxu0 %v609
    %1560 = vmatpush.bf16.msra.mxu0 %v603
    %1561 = vmatpush.bf16.msra.mxu0 %v597
    %1562 = vmatpush.bf16.msra.mxu0 %v591
    %1563 = vmatpush.bf16.msra.mxu0 %v585
    %1564 = vmatpush.bf16.msra.mxu0 %v579
    %1565 = vmatmul.bf16.gmra.mxu0 %v1439
    %v1566 = vpop.f32.mrf.mxu0
    %v1567 = vadd.f32 %v1554, %v1566
    %v1568 = vpop.f32.mrf.mxu0
    %1569 = vdwg.mxu0
    %1570 = vmatpush.bf16.msra.mxu0 %v574
    %1571 = vmatpush.bf16.msra.mxu0 %v568
    %1572 = vmatpush.bf16.msra.mxu0 %v562
    %1573 = vmatpush.bf16.msra.mxu0 %v556
    %1574 = vmatpush.bf16.msra.mxu0 %v550
    %1575 = vmatpush.bf16.msra.mxu0 %v544
    %1576 = vmatpush.bf16.msra.mxu0 %v538
    %1577 = vmatpush.bf16.msra.mxu0 %v532
    %1578 = vmatmul.bf16.gmra.mxu0 %v1351
    %v1579 = vpop.f32.mrf.mxu0
    %v1580 = vadd.f32 0.0, %v1579
    %v1581 = vpop.f32.mrf.mxu0
    %1582 = vdwg.mxu0
    %1583 = vmatpush.bf16.msra.mxu0 %v622
    %1584 = vmatpush.bf16.msra.mxu0 %v616
    %1585 = vmatpush.bf16.msra.mxu0 %v610
    %1586 = vmatpush.bf16.msra.mxu0 %v604
    %1587 = vmatpush.bf16.msra.mxu0 %v598
    %1588 = vmatpush.bf16.msra.mxu0 %v592
    %1589 = vmatpush.bf16.msra.mxu0 %v586
    %1590 = vmatpush.bf16.msra.mxu0 %v580
    %1591 = vmatmul.bf16.gmra.mxu0 %v1439
    %v1592 = vpop.f32.mrf.mxu0
    %v1593 = vadd.f32 %v1580, %v1592
    %v1594 = vpop.f32.mrf.mxu0
    %1595 = vdwg.mxu0
    %s1596 = scalar_lea.vmem %s0, 48
    %v1597 = vld [vmem:[%s1596] sm:$0xff]
    %v1598 = vld [vmem:[%s1596 + $0x8] sm:$0xff]
    %v1599 = vld [vmem:[%s1596 + $0x10] sm:$0xff]
    %v1600 = vadd.f32 %v1597, %v1463
    %v1601 = vadd.f32 %v1598, %v1489
    %v1602 = vxor.u32 %v1600, 2147483648
    %v1603 = vxor.u32 %v1601, 2147483648
    %v1604 = vmul.f32 %v1602, 1.442695
    %v1605 = vpow.pop %v1604
    %v1606 = vmul.f32 %v1603, 1.442695
    %v1607 = vpow.pop %v1606
    %v1608 = vadd.f32 %v1605, 1.0
    %v1609 = vadd.f32 %v1607, 1.0
    %v1610 = vrcp.pop %v1608
    %v1611 = vmul.f32 %v1608, %v1610
    %v1612 = vsub.f32 1.0, %v1611
    %v1613 = vmul.f32 %v1610, %v1612
    %v1614 = vadd.f32 %v1610, %v1613
    %vm1615 = vweird.f32 %v1608
    %vm1616 = vweird.f32 %v1610
    %vm1617 = vmor %vm1615, %vm1616
    %v1618 = vsel %vm1617, %v1610, %v1614
    %v1619 = vand.u32 2147483647, %v1608
    %vm1620 = vcmp.eq.f32.partialorder %v1619, 8.507059e+37
    %v1621 = vand.u32 %v1608, 2147483648
    %v1622 = vor.u32 1.1754944e-38, %v1621
    %v1623 = vsel %vm1620, %v1622, %v1618
    %v1624 = vmul.f32 1.0, %v1623
    %v1625 = vrcp.pop %v1609
    %v1626 = vmul.f32 %v1609, %v1625
    %v1627 = vsub.f32 1.0, %v1626
    %v1628 = vmul.f32 %v1625, %v1627
    %v1629 = vadd.f32 %v1625, %v1628
    %vm1630 = vweird.f32 %v1609
    %vm1631 = vweird.f32 %v1625
    %vm1632 = vmor %vm1630, %vm1631
    %v1633 = vsel %vm1632, %v1625, %v1629
    %v1634 = vand.u32 2147483647, %v1609
    %vm1635 = vcmp.eq.f32.partialorder %v1634, 8.507059e+37
    %v1636 = vand.u32 %v1609, 2147483648
    %v1637 = vor.u32 1.1754944e-38, %v1636
    %v1638 = vsel %vm1635, %v1637, %v1633
    %v1639 = vmul.f32 1.0, %v1638
    %v1640 = vadd.f32 %v1515, %v233
    %v1641 = vmul.f32 %v1624, %v1640
    %v1642 = vadd.f32 %v1599, %v1641
    %v1643 = vtanh.pop %v1642
    %v1644 = vsub.f32 1.0, %v1639
    %v1645 = vmul.f32 %v1644, %v1643
    %v1646 = vmul.f32 %v1639, %v1350
    %v1647 = vadd.f32 %v1645, %v1646
    %v1648 = vpack.c.bf16 %v1647, %v1647
    %1649 = vmatpush.bf16.msra.mxu0 %v1028
    %1650 = vmatpush.bf16.msra.mxu0 %v1025
    %1651 = vmatpush.bf16.msra.mxu0 %v1022
    %1652 = vmatpush.bf16.msra.mxu0 %v1019
    %1653 = vmatpush.bf16.msra.mxu0 %v1016
    %1654 = vmatpush.bf16.msra.mxu0 %v1013
    %1655 = vmatpush.bf16.msra.mxu0 %v1010
    %1656 = vmatpush.bf16.msra.mxu0 %v1007
    %1657 = vmatmul.bf16.gmra.mxu0 %v1648
    %v1658 = vpop.f32.mrf.mxu0
    %v1659 = vadd.f32 %v225, %v1658
    %v1660 = vpop.f32.mrf.mxu0
    %1661 = vdwg.mxu0
    %1662 = vmatpush.bf16.msra.mxu0 %v1029
    %1663 = vmatpush.bf16.msra.mxu0 %v1026
    %1664 = vmatpush.bf16.msra.mxu0 %v1023
    %1665 = vmatpush.bf16.msra.mxu0 %v1020
    %1666 = vmatpush.bf16.msra.mxu0 %v1017
    %1667 = vmatpush.bf16.msra.mxu0 %v1014
    %1668 = vmatpush.bf16.msra.mxu0 %v1011
    %1669 = vmatpush.bf16.msra.mxu0 %v1008
    %1670 = vmatmul.bf16.gmra.mxu0 %v1648
    %v1671 = vpop.f32.mrf.mxu0
    %v1672 = vadd.f32 %v226, %v1671
    %v1673 = vpop.f32.mrf.mxu0
    %1674 = vdwg.mxu0
    %1675 = vmatpush.bf16.msra.mxu0 %v1030
    %1676 = vmatpush.bf16.msra.mxu0 %v1027
    %1677 = vmatpush.bf16.msra.mxu0 %v1024
    %1678 = vmatpush.bf16.msra.mxu0 %v1021
    %1679 = vmatpush.bf16.msra.mxu0 %v1018
    %1680 = vmatpush.bf16.msra.mxu0 %v1015
    %1681 = vmatpush.bf16.msra.mxu0 %v1012
    %1682 = vmatpush.bf16.msra.mxu0 %v1009
    %1683 = vmatmul.bf16.gmra.mxu0 %v1648
    %v1684 = vpop.f32.mrf.mxu0
    %v1685 = vadd.f32 %v227, %v1684
    %v1686 = vpop.f32.mrf.mxu0
    %1687 = vdwg.mxu0
    %v1688 = vadd.f32 %v1659, %v1541
    %v1689 = vadd.f32 %v1672, %v1567
    %v1690 = vxor.u32 %v1688, 2147483648
    %v1691 = vxor.u32 %v1689, 2147483648
    %v1692 = vmul.f32 %v1690, 1.442695
    %v1693 = vpow.pop %v1692
    %v1694 = vmul.f32 %v1691, 1.442695
    %v1695 = vpow.pop %v1694
    %v1696 = vadd.f32 %v1693, 1.0
    %v1697 = vadd.f32 %v1695, 1.0
    %v1698 = vrcp.pop %v1696
    %v1699 = vmul.f32 %v1696, %v1698
    %v1700 = vsub.f32 1.0, %v1699
    %v1701 = vmul.f32 %v1698, %v1700
    %v1702 = vadd.f32 %v1698, %v1701
    %vm1703 = vweird.f32 %v1696
    %vm1704 = vweird.f32 %v1698
    %vm1705 = vmor %vm1703, %vm1704
    %v1706 = vsel %vm1705, %v1698, %v1702
    %v1707 = vand.u32 2147483647, %v1696
    %vm1708 = vcmp.eq.f32.partialorder %v1707, 8.507059e+37
    %v1709 = vand.u32 %v1696, 2147483648
    %v1710 = vor.u32 1.1754944e-38, %v1709
    %v1711 = vsel %vm1708, %v1710, %v1706
    %v1712 = vmul.f32 1.0, %v1711
    %v1713 = vrcp.pop %v1697
    %v1714 = vmul.f32 %v1697, %v1713
    %v1715 = vsub.f32 1.0, %v1714
    %v1716 = vmul.f32 %v1713, %v1715
    %v1717 = vadd.f32 %v1713, %v1716
    %vm1718 = vweird.f32 %v1697
    %vm1719 = vweird.f32 %v1713
    %vm1720 = vmor %vm1718, %vm1719
    %v1721 = vsel %vm1720, %v1713, %v1717
    %v1722 = vand.u32 2147483647, %v1697
    %vm1723 = vcmp.eq.f32.partialorder %v1722, 8.507059e+37
    %v1724 = vand.u32 %v1697, 2147483648
    %v1725 = vor.u32 1.1754944e-38, %v1724
    %v1726 = vsel %vm1723, %v1725, %v1721
    %v1727 = vmul.f32 1.0, %v1726
    %v1728 = vadd.f32 %v1593, %v237
    %v1729 = vmul.f32 %v1712, %v1728
    %v1730 = vadd.f32 %v1685, %v1729
    %v1731 = vtanh.pop %v1730
    %v1732 = vsub.f32 1.0, %v1727
    %v1733 = vmul.f32 %v1732, %v1731
    %v1734 = vmul.f32 %v1727, %v1438
    %v1735 = vadd.f32 %v1733, %v1734
    %v1736 = vpack.c.bf16 %v1735, %v1735
    %1737 = vmatpush.bf16.msra.mxu0 %v569
    %1738 = vmatpush.bf16.msra.mxu0 %v563
    %1739 = vmatpush.bf16.msra.mxu0 %v557
    %1740 = vmatpush.bf16.msra.mxu0 %v551
    %1741 = vmatpush.bf16.msra.mxu0 %v545
    %1742 = vmatpush.bf16.msra.mxu0 %v539
    %1743 = vmatpush.bf16.msra.mxu0 %v533
    %1744 = vmatpush.bf16.msra.mxu0 %v527
    %1745 = vmatmul.bf16.gmra.mxu0 %v1648
    %v1746 = vpop.f32.mrf.mxu0
    %v1747 = vadd.f32 0.0, %v1746
    %v1748 = vpop.f32.mrf.mxu0
    %1749 = vdwg.mxu0
    %1750 = vmatpush.bf16.msra.mxu0 %v617
    %1751 = vmatpush.bf16.msra.mxu0 %v611
    %1752 = vmatpush.bf16.msra.mxu0 %v605
    %1753 = vmatpush.bf16.msra.mxu0 %v599
    %1754 = vmatpush.bf16.msra.mxu0 %v593
    %1755 = vmatpush.bf16.msra.mxu0 %v587
    %1756 = vmatpush.bf16.msra.mxu0 %v581
    %1757 = vmatpush.bf16.msra.mxu0 %v575
    %1758 = vmatmul.bf16.gmra.mxu0 %v1736
    %v1759 = vpop.f32.mrf.mxu0
    %v1760 = vadd.f32 %v1747, %v1759
    %v1761 = vpop.f32.mrf.mxu0
    %1762 = vdwg.mxu0
    %1763 = vmatpush.bf16.msra.mxu0 %v570
    %1764 = vmatpush.bf16.msra.mxu0 %v564
    %1765 = vmatpush.bf16.msra.mxu0 %v558
    %1766 = vmatpush.bf16.msra.mxu0 %v552
    %1767 = vmatpush.bf16.msra.mxu0 %v546
    %1768 = vmatpush.bf16.msra.mxu0 %v540
    %1769 = vmatpush.bf16.msra.mxu0 %v534
    %1770 = vmatpush.bf16.msra.mxu0 %v528
    %1771 = vmatmul.bf16.gmra.mxu0 %v1648
    %v1772 = vpop.f32.mrf.mxu0
    %v1773 = vadd.f32 0.0, %v1772
    %v1774 = vpop.f32.mrf.mxu0
    %1775 = vdwg.mxu0
    %1776 = vmatpush.bf16.msra.mxu0 %v618
    %1777 = vmatpush.bf16.msra.mxu0 %v612
    %1778 = vmatpush.bf16.msra.mxu0 %v606
    %1779 = vmatpush.bf16.msra.mxu0 %v600
    %1780 = vmatpush.bf16.msra.mxu0 %v594
    %1781 = vmatpush.bf16.msra.mxu0 %v588
    %1782 = vmatpush.bf16.msra.mxu0 %v582
    %1783 = vmatpush.bf16.msra.mxu0 %v576
    %1784 = vmatmul.bf16.gmra.mxu0 %v1736
    %v1785 = vpop.f32.mrf.mxu0
    %v1786 = vadd.f32 %v1773, %v1785
    %v1787 = vpop.f32.mrf.mxu0
    %1788 = vdwg.mxu0
    %1789 = vmatpush.bf16.msra.mxu0 %v571
    %1790 = vmatpush.bf16.msra.mxu0 %v565
    %1791 = vmatpush.bf16.msra.mxu0 %v559
    %1792 = vmatpush.bf16.msra.mxu0 %v553
    %1793 = vmatpush.bf16.msra.mxu0 %v547
    %1794 = vmatpush.bf16.msra.mxu0 %v541
    %1795 = vmatpush.bf16.msra.mxu0 %v535
    %1796 = vmatpush.bf16.msra.mxu0 %v529
    %1797 = vmatmul.bf16.gmra.mxu0 %v1648
    %v1798 = vpop.f32.mrf.mxu0
    %v1799 = vadd.f32 0.0, %v1798
    %v1800 = vpop.f32.mrf.mxu0
    %1801 = vdwg.mxu0
    %1802 = vmatpush.bf16.msra.mxu0 %v619
    %1803 = vmatpush.bf16.msra.mxu0 %v613
    %1804 = vmatpush.bf16.msra.mxu0 %v607
    %1805 = vmatpush.bf16.msra.mxu0 %v601
    %1806 = vmatpush.bf16.msra.mxu0 %v595
    %1807 = vmatpush.bf16.msra.mxu0 %v589
    %1808 = vmatpush.bf16.msra.mxu0 %v583
    %1809 = vmatpush.bf16.msra.mxu0 %v577
    %1810 = vmatmul.bf16.gmra.mxu0 %v1736
    %v1811 = vpop.f32.mrf.mxu0
    %v1812 = vadd.f32 %v1799, %v1811
    %v1813 = vpop.f32.mrf.mxu0
    %1814 = vdwg.mxu0
    %1815 = vmatpush.bf16.msra.mxu0 %v572
    %1816 = vmatpush.bf16.msra.mxu0 %v566
    %1817 = vmatpush.bf16.msra.mxu0 %v560
    %1818 = vmatpush.bf16.msra.mxu0 %v554
    %1819 = vmatpush.bf16.msra.mxu0 %v548
    %1820 = vmatpush.bf16.msra.mxu0 %v542
    %1821 = vmatpush.bf16.msra.mxu0 %v536
    %1822 = vmatpush.bf16.msra.mxu0 %v530
    %1823 = vmatmul.bf16.gmra.mxu0 %v1648
    %v1824 = vpop.f32.mrf.mxu0
    %v1825 = vadd.f32 0.0, %v1824
    %v1826 = vpop.f32.mrf.mxu0
    %1827 = vdwg.mxu0
    %1828 = vmatpush.bf16.msra.mxu0 %v620
    %1829 = vmatpush.bf16.msra.mxu0 %v614
    %1830 = vmatpush.bf16.msra.mxu0 %v608
    %1831 = vmatpush.bf16.msra.mxu0 %v602
    %1832 = vmatpush.bf16.msra.mxu0 %v596
    %1833 = vmatpush.bf16.msra.mxu0 %v590
    %1834 = vmatpush.bf16.msra.mxu0 %v584
    %1835 = vmatpush.bf16.msra.mxu0 %v578
    %1836 = vmatmul.bf16.gmra.mxu0 %v1736
    %v1837 = vpop.f32.mrf.mxu0
    %v1838 = vadd.f32 %v1825, %v1837
    %v1839 = vpop.f32.mrf.mxu0
    %1840 = vdwg.mxu0
    %1841 = vmatpush.bf16.msra.mxu0 %v573
    %1842 = vmatpush.bf16.msra.mxu0 %v567
    %1843 = vmatpush.bf16.msra.mxu0 %v561
    %1844 = vmatpush.bf16.msra.mxu0 %v555
    %1845 = vmatpush.bf16.msra.mxu0 %v549
    %1846 = vmatpush.bf16.msra.mxu0 %v543
    %1847 = vmatpush.bf16.msra.mxu0 %v537
    %1848 = vmatpush.bf16.msra.mxu0 %v531
    %1849 = vmatmul.bf16.gmra.mxu0 %v1648
    %v1850 = vpop.f32.mrf.mxu0
    %v1851 = vadd.f32 0.0, %v1850
    %v1852 = vpop.f32.mrf.mxu0
    %1853 = vdwg.mxu0
    %1854 = vmatpush.bf16.msra.mxu0 %v621
    %1855 = vmatpush.bf16.msra.mxu0 %v615
    %1856 = vmatpush.bf16.msra.mxu0 %v609
    %1857 = vmatpush.bf16.msra.mxu0 %v603
    %1858 = vmatpush.bf16.msra.mxu0 %v597
    %1859 = vmatpush.bf16.msra.mxu0 %v591
    %1860 = vmatpush.bf16.msra.mxu0 %v585
    %1861 = vmatpush.bf16.msra.mxu0 %v579
    %1862 = vmatmul.bf16.gmra.mxu0 %v1736
    %v1863 = vpop.f32.mrf.mxu0
    %v1864 = vadd.f32 %v1851, %v1863
    %v1865 = vpop.f32.mrf.mxu0
    %1866 = vdwg.mxu0
    %1867 = vmatpush.bf16.msra.mxu0 %v574
    %1868 = vmatpush.bf16.msra.mxu0 %v568
    %1869 = vmatpush.bf16.msra.mxu0 %v562
    %1870 = vmatpush.bf16.msra.mxu0 %v556
    %1871 = vmatpush.bf16.msra.mxu0 %v550
    %1872 = vmatpush.bf16.msra.mxu0 %v544
    %1873 = vmatpush.bf16.msra.mxu0 %v538
    %1874 = vmatpush.bf16.msra.mxu0 %v532
    %1875 = vmatmul.bf16.gmra.mxu0 %v1648
    %v1876 = vpop.f32.mrf.mxu0
    %v1877 = vadd.f32 0.0, %v1876
    %v1878 = vpop.f32.mrf.mxu0
    %1879 = vdwg.mxu0
    %1880 = vmatpush.bf16.msra.mxu0 %v622
    %1881 = vmatpush.bf16.msra.mxu0 %v616
    %1882 = vmatpush.bf16.msra.mxu0 %v610
    %1883 = vmatpush.bf16.msra.mxu0 %v604
    %1884 = vmatpush.bf16.msra.mxu0 %v598
    %1885 = vmatpush.bf16.msra.mxu0 %v592
    %1886 = vmatpush.bf16.msra.mxu0 %v586
    %1887 = vmatpush.bf16.msra.mxu0 %v580
    %1888 = vmatmul.bf16.gmra.mxu0 %v1736
    %v1889 = vpop.f32.mrf.mxu0
    %v1890 = vadd.f32 %v1877, %v1889
    %v1891 = vpop.f32.mrf.mxu0
    %1892 = vdwg.mxu0
    %s1893 = scalar_lea.vmem %s0, 72
    %v1894 = vld [vmem:[%s1893] sm:$0xff]
    %v1895 = vld [vmem:[%s1893 + $0x8] sm:$0xff]
    %v1896 = vld [vmem:[%s1893 + $0x10] sm:$0xff]
    %v1897 = vadd.f32 %v1894, %v1760
    %v1898 = vadd.f32 %v1895, %v1786
    %v1899 = vxor.u32 %v1897, 2147483648
    %v1900 = vxor.u32 %v1898, 2147483648
    %v1901 = vmul.f32 %v1899, 1.442695
    %v1902 = vpow.pop %v1901
    %v1903 = vmul.f32 %v1900, 1.442695
    %v1904 = vpow.pop %v1903
    %v1905 = vadd.f32 %v1902, 1.0
    %v1906 = vadd.f32 %v1904, 1.0
    %v1907 = vrcp.pop %v1905
    %v1908 = vmul.f32 %v1905, %v1907
    %v1909 = vsub.f32 1.0, %v1908
    %v1910 = vmul.f32 %v1907, %v1909
    %v1911 = vadd.f32 %v1907, %v1910
    %vm1912 = vweird.f32 %v1905
    %vm1913 = vweird.f32 %v1907
    %vm1914 = vmor %vm1912, %vm1913
    %v1915 = vsel %vm1914, %v1907, %v1911
    %v1916 = vand.u32 2147483647, %v1905
    %vm1917 = vcmp.eq.f32.partialorder %v1916, 8.507059e+37
    %v1918 = vand.u32 %v1905, 2147483648
    %v1919 = vor.u32 1.1754944e-38, %v1918
    %v1920 = vsel %vm1917, %v1919, %v1915
    %v1921 = vmul.f32 1.0, %v1920
    %v1922 = vrcp.pop %v1906
    %v1923 = vmul.f32 %v1906, %v1922
    %v1924 = vsub.f32 1.0, %v1923
    %v1925 = vmul.f32 %v1922, %v1924
    %v1926 = vadd.f32 %v1922, %v1925
    %vm1927 = vweird.f32 %v1906
    %vm1928 = vweird.f32 %v1922
    %vm1929 = vmor %vm1927, %vm1928
    %v1930 = vsel %vm1929, %v1922, %v1926
    %v1931 = vand.u32 2147483647, %v1906
    %vm1932 = vcmp.eq.f32.partialorder %v1931, 8.507059e+37
    %v1933 = vand.u32 %v1906, 2147483648
    %v1934 = vor.u32 1.1754944e-38, %v1933
    %v1935 = vsel %vm1932, %v1934, %v1930
    %v1936 = vmul.f32 1.0, %v1935
    %v1937 = vadd.f32 %v1812, %v233
    %v1938 = vmul.f32 %v1921, %v1937
    %v1939 = vadd.f32 %v1896, %v1938
    %v1940 = vtanh.pop %v1939
    %v1941 = vsub.f32 1.0, %v1936
    %v1942 = vmul.f32 %v1941, %v1940
    %v1943 = vmul.f32 %v1936, %v1647
    %v1944 = vadd.f32 %v1942, %v1943
    %v1945 = vpack.c.bf16 %v1944, %v1944
    %1946 = vmatpush.bf16.msra.mxu0 %v1028
    %1947 = vmatpush.bf16.msra.mxu0 %v1025
    %1948 = vmatpush.bf16.msra.mxu0 %v1022
    %1949 = vmatpush.bf16.msra.mxu0 %v1019
    %1950 = vmatpush.bf16.msra.mxu0 %v1016
    %1951 = vmatpush.bf16.msra.mxu0 %v1013
    %1952 = vmatpush.bf16.msra.mxu0 %v1010
    %1953 = vmatpush.bf16.msra.mxu0 %v1007
    %1954 = vmatmul.bf16.gmra.mxu0 %v1945
    %v1955 = vpop.f32.mrf.mxu0
    %v1956 = vadd.f32 %v225, %v1955
    %v1957 = vpop.f32.mrf.mxu0
    %1958 = vdwg.mxu0
    %1959 = vmatpush.bf16.msra.mxu0 %v1029
    %1960 = vmatpush.bf16.msra.mxu0 %v1026
    %1961 = vmatpush.bf16.msra.mxu0 %v1023
    %1962 = vmatpush.bf16.msra.mxu0 %v1020
    %1963 = vmatpush.bf16.msra.mxu0 %v1017
    %1964 = vmatpush.bf16.msra.mxu0 %v1014
    %1965 = vmatpush.bf16.msra.mxu0 %v1011
    %1966 = vmatpush.bf16.msra.mxu0 %v1008
    %1967 = vmatmul.bf16.gmra.mxu0 %v1945
    %v1968 = vpop.f32.mrf.mxu0
    %v1969 = vadd.f32 %v226, %v1968
    %v1970 = vpop.f32.mrf.mxu0
    %1971 = vdwg.mxu0
    %1972 = vmatpush.bf16.msra.mxu0 %v1030
    %1973 = vmatpush.bf16.msra.mxu0 %v1027
    %1974 = vmatpush.bf16.msra.mxu0 %v1024
    %1975 = vmatpush.bf16.msra.mxu0 %v1021
    %1976 = vmatpush.bf16.msra.mxu0 %v1018
    %1977 = vmatpush.bf16.msra.mxu0 %v1015
    %1978 = vmatpush.bf16.msra.mxu0 %v1012
    %1979 = vmatpush.bf16.msra.mxu0 %v1009
    %1980 = vmatmul.bf16.gmra.mxu0 %v1945
    %v1981 = vpop.f32.mrf.mxu0
    %v1982 = vadd.f32 %v227, %v1981
    %v1983 = vpop.f32.mrf.mxu0
    %1984 = vdwg.mxu0
    %v1985 = vadd.f32 %v1956, %v1838
    %v1986 = vadd.f32 %v1969, %v1864
    %v1987 = vxor.u32 %v1985, 2147483648
    %v1988 = vxor.u32 %v1986, 2147483648
    %v1989 = vmul.f32 %v1987, 1.442695
    %v1990 = vpow.pop %v1989
    %v1991 = vmul.f32 %v1988, 1.442695
    %v1992 = vpow.pop %v1991
    %v1993 = vadd.f32 %v1990, 1.0
    %v1994 = vadd.f32 %v1992, 1.0
    %v1995 = vrcp.pop %v1993
    %v1996 = vmul.f32 %v1993, %v1995
    %v1997 = vsub.f32 1.0, %v1996
    %v1998 = vmul.f32 %v1995, %v1997
    %v1999 = vadd.f32 %v1995, %v1998
    %vm2000 = vweird.f32 %v1993
    %vm2001 = vweird.f32 %v1995
    %vm2002 = vmor %vm2000, %vm2001
    %v2003 = vsel %vm2002, %v1995, %v1999
    %v2004 = vand.u32 2147483647, %v1993
    %vm2005 = vcmp.eq.f32.partialorder %v2004, 8.507059e+37
    %v2006 = vand.u32 %v1993, 2147483648
    %v2007 = vor.u32 1.1754944e-38, %v2006
    %v2008 = vsel %vm2005, %v2007, %v2003
    %v2009 = vmul.f32 1.0, %v2008
    %v2010 = vrcp.pop %v1994
    %v2011 = vmul.f32 %v1994, %v2010
    %v2012 = vsub.f32 1.0, %v2011
    %v2013 = vmul.f32 %v2010, %v2012
    %v2014 = vadd.f32 %v2010, %v2013
    %vm2015 = vweird.f32 %v1994
    %vm2016 = vweird.f32 %v2010
    %vm2017 = vmor %vm2015, %vm2016
    %v2018 = vsel %vm2017, %v2010, %v2014
    %v2019 = vand.u32 2147483647, %v1994
    %vm2020 = vcmp.eq.f32.partialorder %v2019, 8.507059e+37
    %v2021 = vand.u32 %v1994, 2147483648
    %v2022 = vor.u32 1.1754944e-38, %v2021
    %v2023 = vsel %vm2020, %v2022, %v2018
    %v2024 = vmul.f32 1.0, %v2023
    %v2025 = vadd.f32 %v1890, %v237
    %v2026 = vmul.f32 %v2009, %v2025
    %v2027 = vadd.f32 %v1982, %v2026
    %v2028 = vtanh.pop %v2027
    %v2029 = vsub.f32 1.0, %v2024
    %v2030 = vmul.f32 %v2029, %v2028
    %v2031 = vmul.f32 %v2024, %v1735
    %v2032 = vadd.f32 %v2030, %v2031
    %v2033 = vpack.c.bf16 %v2032, %v2032
    %2034 = vmatpush.bf16.msra.mxu0 %v569
    %2035 = vmatpush.bf16.msra.mxu0 %v563
    %2036 = vmatpush.bf16.msra.mxu0 %v557
    %2037 = vmatpush.bf16.msra.mxu0 %v551
    %2038 = vmatpush.bf16.msra.mxu0 %v545
    %2039 = vmatpush.bf16.msra.mxu0 %v539
    %2040 = vmatpush.bf16.msra.mxu0 %v533
    %2041 = vmatpush.bf16.msra.mxu0 %v527
    %2042 = vmatmul.bf16.gmra.mxu0 %v1945
    %v2043 = vpop.f32.mrf.mxu0
    %v2044 = vadd.f32 0.0, %v2043
    %v2045 = vpop.f32.mrf.mxu0
    %2046 = vdwg.mxu0
    %2047 = vmatpush.bf16.msra.mxu0 %v617
    %2048 = vmatpush.bf16.msra.mxu0 %v611
    %2049 = vmatpush.bf16.msra.mxu0 %v605
    %2050 = vmatpush.bf16.msra.mxu0 %v599
    %2051 = vmatpush.bf16.msra.mxu0 %v593
    %2052 = vmatpush.bf16.msra.mxu0 %v587
    %2053 = vmatpush.bf16.msra.mxu0 %v581
    %2054 = vmatpush.bf16.msra.mxu0 %v575
    %2055 = vmatmul.bf16.gmra.mxu0 %v2033
    %v2056 = vpop.f32.mrf.mxu0
    %v2057 = vadd.f32 %v2044, %v2056
    %v2058 = vpop.f32.mrf.mxu0
    %2059 = vdwg.mxu0
    %2060 = vmatpush.bf16.msra.mxu0 %v570
    %2061 = vmatpush.bf16.msra.mxu0 %v564
    %2062 = vmatpush.bf16.msra.mxu0 %v558
    %2063 = vmatpush.bf16.msra.mxu0 %v552
    %2064 = vmatpush.bf16.msra.mxu0 %v546
    %2065 = vmatpush.bf16.msra.mxu0 %v540
    %2066 = vmatpush.bf16.msra.mxu0 %v534
    %2067 = vmatpush.bf16.msra.mxu0 %v528
    %2068 = vmatmul.bf16.gmra.mxu0 %v1945
    %v2069 = vpop.f32.mrf.mxu0
    %v2070 = vadd.f32 0.0, %v2069
    %v2071 = vpop.f32.mrf.mxu0
    %2072 = vdwg.mxu0
    %2073 = vmatpush.bf16.msra.mxu0 %v618
    %2074 = vmatpush.bf16.msra.mxu0 %v612
    %2075 = vmatpush.bf16.msra.mxu0 %v606
    %2076 = vmatpush.bf16.msra.mxu0 %v600
    %2077 = vmatpush.bf16.msra.mxu0 %v594
    %2078 = vmatpush.bf16.msra.mxu0 %v588
    %2079 = vmatpush.bf16.msra.mxu0 %v582
    %2080 = vmatpush.bf16.msra.mxu0 %v576
    %2081 = vmatmul.bf16.gmra.mxu0 %v2033
    %v2082 = vpop.f32.mrf.mxu0
    %v2083 = vadd.f32 %v2070, %v2082
    %v2084 = vpop.f32.mrf.mxu0
    %2085 = vdwg.mxu0
    %2086 = vmatpush.bf16.msra.mxu0 %v571
    %2087 = vmatpush.bf16.msra.mxu0 %v565
    %2088 = vmatpush.bf16.msra.mxu0 %v559
    %2089 = vmatpush.bf16.msra.mxu0 %v553
    %2090 = vmatpush.bf16.msra.mxu0 %v547
    %2091 = vmatpush.bf16.msra.mxu0 %v541
    %2092 = vmatpush.bf16.msra.mxu0 %v535
    %2093 = vmatpush.bf16.msra.mxu0 %v529
    %2094 = vmatmul.bf16.gmra.mxu0 %v1945
    %v2095 = vpop.f32.mrf.mxu0
    %v2096 = vadd.f32 0.0, %v2095
    %v2097 = vpop.f32.mrf.mxu0
    %2098 = vdwg.mxu0
    %2099 = vmatpush.bf16.msra.mxu0 %v619
    %2100 = vmatpush.bf16.msra.mxu0 %v613
    %2101 = vmatpush.bf16.msra.mxu0 %v607
    %2102 = vmatpush.bf16.msra.mxu0 %v601
    %2103 = vmatpush.bf16.msra.mxu0 %v595
    %2104 = vmatpush.bf16.msra.mxu0 %v589
    %2105 = vmatpush.bf16.msra.mxu0 %v583
    %2106 = vmatpush.bf16.msra.mxu0 %v577
    %2107 = vmatmul.bf16.gmra.mxu0 %v2033
    %v2108 = vpop.f32.mrf.mxu0
    %v2109 = vadd.f32 %v2096, %v2108
    %v2110 = vpop.f32.mrf.mxu0
    %2111 = vdwg.mxu0
    %2112 = vmatpush.bf16.msra.mxu0 %v572
    %2113 = vmatpush.bf16.msra.mxu0 %v566
    %2114 = vmatpush.bf16.msra.mxu0 %v560
    %2115 = vmatpush.bf16.msra.mxu0 %v554
    %2116 = vmatpush.bf16.msra.mxu0 %v548
    %2117 = vmatpush.bf16.msra.mxu0 %v542
    %2118 = vmatpush.bf16.msra.mxu0 %v536
    %2119 = vmatpush.bf16.msra.mxu0 %v530
    %2120 = vmatmul.bf16.gmra.mxu0 %v1945
    %v2121 = vpop.f32.mrf.mxu0
    %v2122 = vadd.f32 0.0, %v2121
    %v2123 = vpop.f32.mrf.mxu0
    %2124 = vdwg.mxu0
    %2125 = vmatpush.bf16.msra.mxu0 %v620
    %2126 = vmatpush.bf16.msra.mxu0 %v614
    %2127 = vmatpush.bf16.msra.mxu0 %v608
    %2128 = vmatpush.bf16.msra.mxu0 %v602
    %2129 = vmatpush.bf16.msra.mxu0 %v596
    %2130 = vmatpush.bf16.msra.mxu0 %v590
    %2131 = vmatpush.bf16.msra.mxu0 %v584
    %2132 = vmatpush.bf16.msra.mxu0 %v578
    %2133 = vmatmul.bf16.gmra.mxu0 %v2033
    %v2134 = vpop.f32.mrf.mxu0
    %v2135 = vadd.f32 %v2122, %v2134
    %v2136 = vpop.f32.mrf.mxu0
    %2137 = vdwg.mxu0
    %2138 = vmatpush.bf16.msra.mxu0 %v573
    %2139 = vmatpush.bf16.msra.mxu0 %v567
    %2140 = vmatpush.bf16.msra.mxu0 %v561
    %2141 = vmatpush.bf16.msra.mxu0 %v555
    %2142 = vmatpush.bf16.msra.mxu0 %v549
    %2143 = vmatpush.bf16.msra.mxu0 %v543
    %2144 = vmatpush.bf16.msra.mxu0 %v537
    %2145 = vmatpush.bf16.msra.mxu0 %v531
    %2146 = vmatmul.bf16.gmra.mxu0 %v1945
    %v2147 = vpop.f32.mrf.mxu0
    %v2148 = vadd.f32 0.0, %v2147
    %v2149 = vpop.f32.mrf.mxu0
    %2150 = vdwg.mxu0
    %2151 = vmatpush.bf16.msra.mxu0 %v621
    %2152 = vmatpush.bf16.msra.mxu0 %v615
    %2153 = vmatpush.bf16.msra.mxu0 %v609
    %2154 = vmatpush.bf16.msra.mxu0 %v603
    %2155 = vmatpush.bf16.msra.mxu0 %v597
    %2156 = vmatpush.bf16.msra.mxu0 %v591
    %2157 = vmatpush.bf16.msra.mxu0 %v585
    %2158 = vmatpush.bf16.msra.mxu0 %v579
    %2159 = vmatmul.bf16.gmra.mxu0 %v2033
    %v2160 = vpop.f32.mrf.mxu0
    %v2161 = vadd.f32 %v2148, %v2160
    %v2162 = vpop.f32.mrf.mxu0
    %2163 = vdwg.mxu0
    %2164 = vmatpush.bf16.msra.mxu0 %v574
    %2165 = vmatpush.bf16.msra.mxu0 %v568
    %2166 = vmatpush.bf16.msra.mxu0 %v562
    %2167 = vmatpush.bf16.msra.mxu0 %v556
    %2168 = vmatpush.bf16.msra.mxu0 %v550
    %2169 = vmatpush.bf16.msra.mxu0 %v544
    %2170 = vmatpush.bf16.msra.mxu0 %v538
    %2171 = vmatpush.bf16.msra.mxu0 %v532
    %2172 = vmatmul.bf16.gmra.mxu0 %v1945
    %v2173 = vpop.f32.mrf.mxu0
    %v2174 = vadd.f32 0.0, %v2173
    %v2175 = vpop.f32.mrf.mxu0
    %2176 = vdwg.mxu0
    %2177 = vmatpush.bf16.msra.mxu0 %v622
    %2178 = vmatpush.bf16.msra.mxu0 %v616
    %2179 = vmatpush.bf16.msra.mxu0 %v610
    %2180 = vmatpush.bf16.msra.mxu0 %v604
    %2181 = vmatpush.bf16.msra.mxu0 %v598
    %2182 = vmatpush.bf16.msra.mxu0 %v592
    %2183 = vmatpush.bf16.msra.mxu0 %v586
    %2184 = vmatpush.bf16.msra.mxu0 %v580
    %2185 = vmatmul.bf16.gmra.mxu0 %v2033
    %v2186 = vpop.f32.mrf.mxu0
    %v2187 = vadd.f32 %v2174, %v2186
    %v2188 = vpop.f32.mrf.mxu0
    %2189 = vdwg.mxu0
    %s2190 = scalar_lea.vmem %s0, 96
    %v2191 = vld [vmem:[%s2190] sm:$0xff]
    %v2192 = vld [vmem:[%s2190 + $0x8] sm:$0xff]
    %v2193 = vld [vmem:[%s2190 + $0x10] sm:$0xff]
    %v2194 = vadd.f32 %v2191, %v2057
    %v2195 = vadd.f32 %v2192, %v2083
    %v2196 = vxor.u32 %v2194, 2147483648
    %v2197 = vxor.u32 %v2195, 2147483648
    %v2198 = vmul.f32 %v2196, 1.442695
    %v2199 = vpow.pop %v2198
    %v2200 = vmul.f32 %v2197, 1.442695
    %v2201 = vpow.pop %v2200
    %v2202 = vadd.f32 %v2199, 1.0
    %v2203 = vadd.f32 %v2201, 1.0
    %v2204 = vrcp.pop %v2202
    %v2205 = vmul.f32 %v2202, %v2204
    %v2206 = vsub.f32 1.0, %v2205
    %v2207 = vmul.f32 %v2204, %v2206
    %v2208 = vadd.f32 %v2204, %v2207
    %vm2209 = vweird.f32 %v2202
    %vm2210 = vweird.f32 %v2204
    %vm2211 = vmor %vm2209, %vm2210
    %v2212 = vsel %vm2211, %v2204, %v2208
    %v2213 = vand.u32 2147483647, %v2202
    %vm2214 = vcmp.eq.f32.partialorder %v2213, 8.507059e+37
    %v2215 = vand.u32 %v2202, 2147483648
    %v2216 = vor.u32 1.1754944e-38, %v2215
    %v2217 = vsel %vm2214, %v2216, %v2212
    %v2218 = vmul.f32 1.0, %v2217
    %v2219 = vrcp.pop %v2203
    %v2220 = vmul.f32 %v2203, %v2219
    %v2221 = vsub.f32 1.0, %v2220
    %v2222 = vmul.f32 %v2219, %v2221
    %v2223 = vadd.f32 %v2219, %v2222
    %vm2224 = vweird.f32 %v2203
    %vm2225 = vweird.f32 %v2219
    %vm2226 = vmor %vm2224, %vm2225
    %v2227 = vsel %vm2226, %v2219, %v2223
    %v2228 = vand.u32 2147483647, %v2203
    %vm2229 = vcmp.eq.f32.partialorder %v2228, 8.507059e+37
    %v2230 = vand.u32 %v2203, 2147483648
    %v2231 = vor.u32 1.1754944e-38, %v2230
    %v2232 = vsel %vm2229, %v2231, %v2227
    %v2233 = vmul.f32 1.0, %v2232
    %v2234 = vadd.f32 %v2109, %v233
    %v2235 = vmul.f32 %v2218, %v2234
    %v2236 = vadd.f32 %v2193, %v2235
    %v2237 = vtanh.pop %v2236
    %v2238 = vsub.f32 1.0, %v2233
    %v2239 = vmul.f32 %v2238, %v2237
    %v2240 = vmul.f32 %v2233, %v1944
    %v2241 = vadd.f32 %v2239, %v2240
    %v2242 = vpack.c.bf16 %v2241, %v2241
    %2243 = vmatpush.bf16.msra.mxu0 %v1028
    %2244 = vmatpush.bf16.msra.mxu0 %v1025
    %2245 = vmatpush.bf16.msra.mxu0 %v1022
    %2246 = vmatpush.bf16.msra.mxu0 %v1019
    %2247 = vmatpush.bf16.msra.mxu0 %v1016
    %2248 = vmatpush.bf16.msra.mxu0 %v1013
    %2249 = vmatpush.bf16.msra.mxu0 %v1010
    %2250 = vmatpush.bf16.msra.mxu0 %v1007
    %2251 = vmatmul.bf16.gmra.mxu0 %v2242
    %v2252 = vpop.f32.mrf.mxu0
    %v2253 = vadd.f32 %v225, %v2252
    %v2254 = vpop.f32.mrf.mxu0
    %2255 = vdwg.mxu0
    %2256 = vmatpush.bf16.msra.mxu0 %v1029
    %2257 = vmatpush.bf16.msra.mxu0 %v1026
    %2258 = vmatpush.bf16.msra.mxu0 %v1023
    %2259 = vmatpush.bf16.msra.mxu0 %v1020
    %2260 = vmatpush.bf16.msra.mxu0 %v1017
    %2261 = vmatpush.bf16.msra.mxu0 %v1014
    %2262 = vmatpush.bf16.msra.mxu0 %v1011
    %2263 = vmatpush.bf16.msra.mxu0 %v1008
    %2264 = vmatmul.bf16.gmra.mxu0 %v2242
    %v2265 = vpop.f32.mrf.mxu0
    %v2266 = vadd.f32 %v226, %v2265
    %v2267 = vpop.f32.mrf.mxu0
    %2268 = vdwg.mxu0
    %2269 = vmatpush.bf16.msra.mxu0 %v1030
    %2270 = vmatpush.bf16.msra.mxu0 %v1027
    %2271 = vmatpush.bf16.msra.mxu0 %v1024
    %2272 = vmatpush.bf16.msra.mxu0 %v1021
    %2273 = vmatpush.bf16.msra.mxu0 %v1018
    %2274 = vmatpush.bf16.msra.mxu0 %v1015
    %2275 = vmatpush.bf16.msra.mxu0 %v1012
    %2276 = vmatpush.bf16.msra.mxu0 %v1009
    %2277 = vmatmul.bf16.gmra.mxu0 %v2242
    %v2278 = vpop.f32.mrf.mxu0
    %v2279 = vadd.f32 %v227, %v2278
    %v2280 = vpop.f32.mrf.mxu0
    %2281 = vdwg.mxu0
    %v2282 = vadd.f32 %v2253, %v2135
    %v2283 = vadd.f32 %v2266, %v2161
    %v2284 = vxor.u32 %v2282, 2147483648
    %v2285 = vxor.u32 %v2283, 2147483648
    %v2286 = vmul.f32 %v2284, 1.442695
    %v2287 = vpow.pop %v2286
    %v2288 = vmul.f32 %v2285, 1.442695
    %v2289 = vpow.pop %v2288
    %v2290 = vadd.f32 %v2287, 1.0
    %v2291 = vadd.f32 %v2289, 1.0
    %v2292 = vrcp.pop %v2290
    %v2293 = vmul.f32 %v2290, %v2292
    %v2294 = vsub.f32 1.0, %v2293
    %v2295 = vmul.f32 %v2292, %v2294
    %v2296 = vadd.f32 %v2292, %v2295
    %vm2297 = vweird.f32 %v2290
    %vm2298 = vweird.f32 %v2292
    %vm2299 = vmor %vm2297, %vm2298
    %v2300 = vsel %vm2299, %v2292, %v2296
    %v2301 = vand.u32 2147483647, %v2290
    %vm2302 = vcmp.eq.f32.partialorder %v2301, 8.507059e+37
    %v2303 = vand.u32 %v2290, 2147483648
    %v2304 = vor.u32 1.1754944e-38, %v2303
    %v2305 = vsel %vm2302, %v2304, %v2300
    %v2306 = vmul.f32 1.0, %v2305
    %v2307 = vrcp.pop %v2291
    %v2308 = vmul.f32 %v2291, %v2307
    %v2309 = vsub.f32 1.0, %v2308
    %v2310 = vmul.f32 %v2307, %v2309
    %v2311 = vadd.f32 %v2307, %v2310
    %vm2312 = vweird.f32 %v2291
    %vm2313 = vweird.f32 %v2307
    %vm2314 = vmor %vm2312, %vm2313
    %v2315 = vsel %vm2314, %v2307, %v2311
    %v2316 = vand.u32 2147483647, %v2291
    %vm2317 = vcmp.eq.f32.partialorder %v2316, 8.507059e+37
    %v2318 = vand.u32 %v2291, 2147483648
    %v2319 = vor.u32 1.1754944e-38, %v2318
    %v2320 = vsel %vm2317, %v2319, %v2315
    %v2321 = vmul.f32 1.0, %v2320
    %v2322 = vadd.f32 %v2187, %v237
    %v2323 = vmul.f32 %v2306, %v2322
    %v2324 = vadd.f32 %v2279, %v2323
    %v2325 = vtanh.pop %v2324
    %v2326 = vsub.f32 1.0, %v2321
    %v2327 = vmul.f32 %v2326, %v2325
    %v2328 = vmul.f32 %v2321, %v2032
    %v2329 = vadd.f32 %v2327, %v2328
    %v2330 = vpack.c.bf16 %v2329, %v2329
    %2331 = vmatpush.bf16.msra.mxu0 %v569
    %2332 = vmatpush.bf16.msra.mxu0 %v563
    %2333 = vmatpush.bf16.msra.mxu0 %v557
    %2334 = vmatpush.bf16.msra.mxu0 %v551
    %2335 = vmatpush.bf16.msra.mxu0 %v545
    %2336 = vmatpush.bf16.msra.mxu0 %v539
    %2337 = vmatpush.bf16.msra.mxu0 %v533
    %2338 = vmatpush.bf16.msra.mxu0 %v527
    %2339 = vmatmul.bf16.gmra.mxu0 %v2242
    %v2340 = vpop.f32.mrf.mxu0
    %v2341 = vadd.f32 0.0, %v2340
    %v2342 = vpop.f32.mrf.mxu0
    %2343 = vdwg.mxu0
    %2344 = vmatpush.bf16.msra.mxu0 %v617
    %2345 = vmatpush.bf16.msra.mxu0 %v611
    %2346 = vmatpush.bf16.msra.mxu0 %v605
    %2347 = vmatpush.bf16.msra.mxu0 %v599
    %2348 = vmatpush.bf16.msra.mxu0 %v593
    %2349 = vmatpush.bf16.msra.mxu0 %v587
    %2350 = vmatpush.bf16.msra.mxu0 %v581
    %2351 = vmatpush.bf16.msra.mxu0 %v575
    %2352 = vmatmul.bf16.gmra.mxu0 %v2330
    %v2353 = vpop.f32.mrf.mxu0
    %v2354 = vadd.f32 %v2341, %v2353
    %v2355 = vpop.f32.mrf.mxu0
    %2356 = vdwg.mxu0
    %2357 = vmatpush.bf16.msra.mxu0 %v570
    %2358 = vmatpush.bf16.msra.mxu0 %v564
    %2359 = vmatpush.bf16.msra.mxu0 %v558
    %2360 = vmatpush.bf16.msra.mxu0 %v552
    %2361 = vmatpush.bf16.msra.mxu0 %v546
    %2362 = vmatpush.bf16.msra.mxu0 %v540
    %2363 = vmatpush.bf16.msra.mxu0 %v534
    %2364 = vmatpush.bf16.msra.mxu0 %v528
    %2365 = vmatmul.bf16.gmra.mxu0 %v2242
    %v2366 = vpop.f32.mrf.mxu0
    %v2367 = vadd.f32 0.0, %v2366
    %v2368 = vpop.f32.mrf.mxu0
    %2369 = vdwg.mxu0
    %2370 = vmatpush.bf16.msra.mxu0 %v618
    %2371 = vmatpush.bf16.msra.mxu0 %v612
    %2372 = vmatpush.bf16.msra.mxu0 %v606
    %2373 = vmatpush.bf16.msra.mxu0 %v600
    %2374 = vmatpush.bf16.msra.mxu0 %v594
    %2375 = vmatpush.bf16.msra.mxu0 %v588
    %2376 = vmatpush.bf16.msra.mxu0 %v582
    %2377 = vmatpush.bf16.msra.mxu0 %v576
    %2378 = vmatmul.bf16.gmra.mxu0 %v2330
    %v2379 = vpop.f32.mrf.mxu0
    %v2380 = vadd.f32 %v2367, %v2379
    %v2381 = vpop.f32.mrf.mxu0
    %2382 = vdwg.mxu0
    %2383 = vmatpush.bf16.msra.mxu0 %v571
    %2384 = vmatpush.bf16.msra.mxu0 %v565
    %2385 = vmatpush.bf16.msra.mxu0 %v559
    %2386 = vmatpush.bf16.msra.mxu0 %v553
    %2387 = vmatpush.bf16.msra.mxu0 %v547
    %2388 = vmatpush.bf16.msra.mxu0 %v541
    %2389 = vmatpush.bf16.msra.mxu0 %v535
    %2390 = vmatpush.bf16.msra.mxu0 %v529
    %2391 = vmatmul.bf16.gmra.mxu0 %v2242
    %v2392 = vpop.f32.mrf.mxu0
    %v2393 = vadd.f32 0.0, %v2392
    %v2394 = vpop.f32.mrf.mxu0
    %2395 = vdwg.mxu0
    %2396 = vmatpush.bf16.msra.mxu0 %v619
    %2397 = vmatpush.bf16.msra.mxu0 %v613
    %2398 = vmatpush.bf16.msra.mxu0 %v607
    %2399 = vmatpush.bf16.msra.mxu0 %v601
    %2400 = vmatpush.bf16.msra.mxu0 %v595
    %2401 = vmatpush.bf16.msra.mxu0 %v589
    %2402 = vmatpush.bf16.msra.mxu0 %v583
    %2403 = vmatpush.bf16.msra.mxu0 %v577
    %2404 = vmatmul.bf16.gmra.mxu0 %v2330
    %v2405 = vpop.f32.mrf.mxu0
    %v2406 = vadd.f32 %v2393, %v2405
    %v2407 = vpop.f32.mrf.mxu0
    %2408 = vdwg.mxu0
    %2409 = vmatpush.bf16.msra.mxu0 %v572
    %2410 = vmatpush.bf16.msra.mxu0 %v566
    %2411 = vmatpush.bf16.msra.mxu0 %v560
    %2412 = vmatpush.bf16.msra.mxu0 %v554
    %2413 = vmatpush.bf16.msra.mxu0 %v548
    %2414 = vmatpush.bf16.msra.mxu0 %v542
    %2415 = vmatpush.bf16.msra.mxu0 %v536
    %2416 = vmatpush.bf16.msra.mxu0 %v530
    %2417 = vmatmul.bf16.gmra.mxu0 %v2242
    %v2418 = vpop.f32.mrf.mxu0
    %v2419 = vadd.f32 0.0, %v2418
    %v2420 = vpop.f32.mrf.mxu0
    %2421 = vdwg.mxu0
    %2422 = vmatpush.bf16.msra.mxu0 %v620
    %2423 = vmatpush.bf16.msra.mxu0 %v614
    %2424 = vmatpush.bf16.msra.mxu0 %v608
    %2425 = vmatpush.bf16.msra.mxu0 %v602
    %2426 = vmatpush.bf16.msra.mxu0 %v596
    %2427 = vmatpush.bf16.msra.mxu0 %v590
    %2428 = vmatpush.bf16.msra.mxu0 %v584
    %2429 = vmatpush.bf16.msra.mxu0 %v578
    %2430 = vmatmul.bf16.gmra.mxu0 %v2330
    %v2431 = vpop.f32.mrf.mxu0
    %v2432 = vadd.f32 %v2419, %v2431
    %v2433 = vpop.f32.mrf.mxu0
    %2434 = vdwg.mxu0
    %2435 = vmatpush.bf16.msra.mxu0 %v573
    %2436 = vmatpush.bf16.msra.mxu0 %v567
    %2437 = vmatpush.bf16.msra.mxu0 %v561
    %2438 = vmatpush.bf16.msra.mxu0 %v555
    %2439 = vmatpush.bf16.msra.mxu0 %v549
    %2440 = vmatpush.bf16.msra.mxu0 %v543
    %2441 = vmatpush.bf16.msra.mxu0 %v537
    %2442 = vmatpush.bf16.msra.mxu0 %v531
    %2443 = vmatmul.bf16.gmra.mxu0 %v2242
    %v2444 = vpop.f32.mrf.mxu0
    %v2445 = vadd.f32 0.0, %v2444
    %v2446 = vpop.f32.mrf.mxu0
    %2447 = vdwg.mxu0
    %2448 = vmatpush.bf16.msra.mxu0 %v621
    %2449 = vmatpush.bf16.msra.mxu0 %v615
    %2450 = vmatpush.bf16.msra.mxu0 %v609
    %2451 = vmatpush.bf16.msra.mxu0 %v603
    %2452 = vmatpush.bf16.msra.mxu0 %v597
    %2453 = vmatpush.bf16.msra.mxu0 %v591
    %2454 = vmatpush.bf16.msra.mxu0 %v585
    %2455 = vmatpush.bf16.msra.mxu0 %v579
    %2456 = vmatmul.bf16.gmra.mxu0 %v2330
    %v2457 = vpop.f32.mrf.mxu0
    %v2458 = vadd.f32 %v2445, %v2457
    %v2459 = vpop.f32.mrf.mxu0
    %2460 = vdwg.mxu0
    %2461 = vmatpush.bf16.msra.mxu0 %v574
    %2462 = vmatpush.bf16.msra.mxu0 %v568
    %2463 = vmatpush.bf16.msra.mxu0 %v562
    %2464 = vmatpush.bf16.msra.mxu0 %v556
    %2465 = vmatpush.bf16.msra.mxu0 %v550
    %2466 = vmatpush.bf16.msra.mxu0 %v544
    %2467 = vmatpush.bf16.msra.mxu0 %v538
    %2468 = vmatpush.bf16.msra.mxu0 %v532
    %2469 = vmatmul.bf16.gmra.mxu0 %v2242
    %v2470 = vpop.f32.mrf.mxu0
    %v2471 = vadd.f32 0.0, %v2470
    %v2472 = vpop.f32.mrf.mxu0
    %2473 = vdwg.mxu0
    %2474 = vmatpush.bf16.msra.mxu0 %v622
    %2475 = vmatpush.bf16.msra.mxu0 %v616
    %2476 = vmatpush.bf16.msra.mxu0 %v610
    %2477 = vmatpush.bf16.msra.mxu0 %v604
    %2478 = vmatpush.bf16.msra.mxu0 %v598
    %2479 = vmatpush.bf16.msra.mxu0 %v592
    %2480 = vmatpush.bf16.msra.mxu0 %v586
    %2481 = vmatpush.bf16.msra.mxu0 %v580
    %2482 = vmatmul.bf16.gmra.mxu0 %v2330
    %v2483 = vpop.f32.mrf.mxu0
    %v2484 = vadd.f32 %v2471, %v2483
    %v2485 = vpop.f32.mrf.mxu0
    %2486 = vdwg.mxu0
    %s2487 = scalar_lea.vmem %s0, 120
    %v2488 = vld [vmem:[%s2487] sm:$0xff]
    %v2489 = vld [vmem:[%s2487 + $0x8] sm:$0xff]
    %v2490 = vld [vmem:[%s2487 + $0x10] sm:$0xff]
    %v2491 = vadd.f32 %v2488, %v2354
    %v2492 = vadd.f32 %v2489, %v2380
    %v2493 = vxor.u32 %v2491, 2147483648
    %v2494 = vxor.u32 %v2492, 2147483648
    %v2495 = vmul.f32 %v2493, 1.442695
    %v2496 = vpow.pop %v2495
    %v2497 = vmul.f32 %v2494, 1.442695
    %v2498 = vpow.pop %v2497
    %v2499 = vadd.f32 %v2496, 1.0
    %v2500 = vadd.f32 %v2498, 1.0
    %v2501 = vrcp.pop %v2499
    %v2502 = vmul.f32 %v2499, %v2501
    %v2503 = vsub.f32 1.0, %v2502
    %v2504 = vmul.f32 %v2501, %v2503
    %v2505 = vadd.f32 %v2501, %v2504
    %vm2506 = vweird.f32 %v2499
    %vm2507 = vweird.f32 %v2501
    %vm2508 = vmor %vm2506, %vm2507
    %v2509 = vsel %vm2508, %v2501, %v2505
    %v2510 = vand.u32 2147483647, %v2499
    %vm2511 = vcmp.eq.f32.partialorder %v2510, 8.507059e+37
    %v2512 = vand.u32 %v2499, 2147483648
    %v2513 = vor.u32 1.1754944e-38, %v2512
    %v2514 = vsel %vm2511, %v2513, %v2509
    %v2515 = vmul.f32 1.0, %v2514
    %v2516 = vrcp.pop %v2500
    %v2517 = vmul.f32 %v2500, %v2516
    %v2518 = vsub.f32 1.0, %v2517
    %v2519 = vmul.f32 %v2516, %v2518
    %v2520 = vadd.f32 %v2516, %v2519
    %vm2521 = vweird.f32 %v2500
    %vm2522 = vweird.f32 %v2516
    %vm2523 = vmor %vm2521, %vm2522
    %v2524 = vsel %vm2523, %v2516, %v2520
    %v2525 = vand.u32 2147483647, %v2500
    %vm2526 = vcmp.eq.f32.partialorder %v2525, 8.507059e+37
    %v2527 = vand.u32 %v2500, 2147483648
    %v2528 = vor.u32 1.1754944e-38, %v2527
    %v2529 = vsel %vm2526, %v2528, %v2524
    %v2530 = vmul.f32 1.0, %v2529
    %v2531 = vadd.f32 %v2406, %v233
    %v2532 = vmul.f32 %v2515, %v2531
    %v2533 = vadd.f32 %v2490, %v2532
    %v2534 = vtanh.pop %v2533
    %v2535 = vsub.f32 1.0, %v2530
    %v2536 = vmul.f32 %v2535, %v2534
    %v2537 = vmul.f32 %v2530, %v2241
    %v2538 = vadd.f32 %v2536, %v2537
    %v2539 = vpack.c.bf16 %v2538, %v2538
    %2540 = vmatpush.bf16.msra.mxu0 %v1028
    %2541 = vmatpush.bf16.msra.mxu0 %v1025
    %2542 = vmatpush.bf16.msra.mxu0 %v1022
    %2543 = vmatpush.bf16.msra.mxu0 %v1019
    %2544 = vmatpush.bf16.msra.mxu0 %v1016
    %2545 = vmatpush.bf16.msra.mxu0 %v1013
    %2546 = vmatpush.bf16.msra.mxu0 %v1010
    %2547 = vmatpush.bf16.msra.mxu0 %v1007
    %2548 = vmatmul.bf16.gmra.mxu0 %v2539
    %v2549 = vpop.f32.mrf.mxu0
    %v2550 = vadd.f32 %v225, %v2549
    %v2551 = vpop.f32.mrf.mxu0
    %2552 = vdwg.mxu0
    %2553 = vmatpush.bf16.msra.mxu0 %v1029
    %2554 = vmatpush.bf16.msra.mxu0 %v1026
    %2555 = vmatpush.bf16.msra.mxu0 %v1023
    %2556 = vmatpush.bf16.msra.mxu0 %v1020
    %2557 = vmatpush.bf16.msra.mxu0 %v1017
    %2558 = vmatpush.bf16.msra.mxu0 %v1014
    %2559 = vmatpush.bf16.msra.mxu0 %v1011
    %2560 = vmatpush.bf16.msra.mxu0 %v1008
    %2561 = vmatmul.bf16.gmra.mxu0 %v2539
    %v2562 = vpop.f32.mrf.mxu0
    %v2563 = vadd.f32 %v226, %v2562
    %v2564 = vpop.f32.mrf.mxu0
    %2565 = vdwg.mxu0
    %2566 = vmatpush.bf16.msra.mxu0 %v1030
    %2567 = vmatpush.bf16.msra.mxu0 %v1027
    %2568 = vmatpush.bf16.msra.mxu0 %v1024
    %2569 = vmatpush.bf16.msra.mxu0 %v1021
    %2570 = vmatpush.bf16.msra.mxu0 %v1018
    %2571 = vmatpush.bf16.msra.mxu0 %v1015
    %2572 = vmatpush.bf16.msra.mxu0 %v1012
    %2573 = vmatpush.bf16.msra.mxu0 %v1009
    %2574 = vmatmul.bf16.gmra.mxu0 %v2539
    %v2575 = vpop.f32.mrf.mxu0
    %v2576 = vadd.f32 %v227, %v2575
    %v2577 = vpop.f32.mrf.mxu0
    %2578 = vdwg.mxu0
    %v2579 = vadd.f32 %v2550, %v2432
    %v2580 = vadd.f32 %v2563, %v2458
    %v2581 = vxor.u32 %v2579, 2147483648
    %v2582 = vxor.u32 %v2580, 2147483648
    %v2583 = vmul.f32 %v2581, 1.442695
    %v2584 = vpow.pop %v2583
    %v2585 = vmul.f32 %v2582, 1.442695
    %v2586 = vpow.pop %v2585
    %v2587 = vadd.f32 %v2584, 1.0
    %v2588 = vadd.f32 %v2586, 1.0
    %v2589 = vrcp.pop %v2587
    %v2590 = vmul.f32 %v2587, %v2589
    %v2591 = vsub.f32 1.0, %v2590
    %v2592 = vmul.f32 %v2589, %v2591
    %v2593 = vadd.f32 %v2589, %v2592
    %vm2594 = vweird.f32 %v2587
    %vm2595 = vweird.f32 %v2589
    %vm2596 = vmor %vm2594, %vm2595
    %v2597 = vsel %vm2596, %v2589, %v2593
    %v2598 = vand.u32 2147483647, %v2587
    %vm2599 = vcmp.eq.f32.partialorder %v2598, 8.507059e+37
    %v2600 = vand.u32 %v2587, 2147483648
    %v2601 = vor.u32 1.1754944e-38, %v2600
    %v2602 = vsel %vm2599, %v2601, %v2597
    %v2603 = vmul.f32 1.0, %v2602
    %v2604 = vrcp.pop %v2588
    %v2605 = vmul.f32 %v2588, %v2604
    %v2606 = vsub.f32 1.0, %v2605
    %v2607 = vmul.f32 %v2604, %v2606
    %v2608 = vadd.f32 %v2604, %v2607
    %vm2609 = vweird.f32 %v2588
    %vm2610 = vweird.f32 %v2604
    %vm2611 = vmor %vm2609, %vm2610
    %v2612 = vsel %vm2611, %v2604, %v2608
    %v2613 = vand.u32 2147483647, %v2588
    %vm2614 = vcmp.eq.f32.partialorder %v2613, 8.507059e+37
    %v2615 = vand.u32 %v2588, 2147483648
    %v2616 = vor.u32 1.1754944e-38, %v2615
    %v2617 = vsel %vm2614, %v2616, %v2612
    %v2618 = vmul.f32 1.0, %v2617
    %v2619 = vadd.f32 %v2484, %v237
    %v2620 = vmul.f32 %v2603, %v2619
    %v2621 = vadd.f32 %v2576, %v2620
    %v2622 = vtanh.pop %v2621
    %v2623 = vsub.f32 1.0, %v2618
    %v2624 = vmul.f32 %v2623, %v2622
    %v2625 = vmul.f32 %v2618, %v2329
    %v2626 = vadd.f32 %v2624, %v2625
    %v2627 = vpack.c.bf16 %v2626, %v2626
    %2628 = vmatpush.bf16.msra.mxu0 %v569
    %2629 = vmatpush.bf16.msra.mxu0 %v563
    %2630 = vmatpush.bf16.msra.mxu0 %v557
    %2631 = vmatpush.bf16.msra.mxu0 %v551
    %2632 = vmatpush.bf16.msra.mxu0 %v545
    %2633 = vmatpush.bf16.msra.mxu0 %v539
    %2634 = vmatpush.bf16.msra.mxu0 %v533
    %2635 = vmatpush.bf16.msra.mxu0 %v527
    %2636 = vmatmul.bf16.gmra.mxu0 %v2539
    %v2637 = vpop.f32.mrf.mxu0
    %v2638 = vadd.f32 0.0, %v2637
    %v2639 = vpop.f32.mrf.mxu0
    %2640 = vdwg.mxu0
    %2641 = vmatpush.bf16.msra.mxu0 %v617
    %2642 = vmatpush.bf16.msra.mxu0 %v611
    %2643 = vmatpush.bf16.msra.mxu0 %v605
    %2644 = vmatpush.bf16.msra.mxu0 %v599
    %2645 = vmatpush.bf16.msra.mxu0 %v593
    %2646 = vmatpush.bf16.msra.mxu0 %v587
    %2647 = vmatpush.bf16.msra.mxu0 %v581
    %2648 = vmatpush.bf16.msra.mxu0 %v575
    %2649 = vmatmul.bf16.gmra.mxu0 %v2627
    %v2650 = vpop.f32.mrf.mxu0
    %v2651 = vadd.f32 %v2638, %v2650
    %v2652 = vpop.f32.mrf.mxu0
    %2653 = vdwg.mxu0
    %2654 = vmatpush.bf16.msra.mxu0 %v570
    %2655 = vmatpush.bf16.msra.mxu0 %v564
    %2656 = vmatpush.bf16.msra.mxu0 %v558
    %2657 = vmatpush.bf16.msra.mxu0 %v552
    %2658 = vmatpush.bf16.msra.mxu0 %v546
    %2659 = vmatpush.bf16.msra.mxu0 %v540
    %2660 = vmatpush.bf16.msra.mxu0 %v534
    %2661 = vmatpush.bf16.msra.mxu0 %v528
    %2662 = vmatmul.bf16.gmra.mxu0 %v2539
    %v2663 = vpop.f32.mrf.mxu0
    %v2664 = vadd.f32 0.0, %v2663
    %v2665 = vpop.f32.mrf.mxu0
    %2666 = vdwg.mxu0
    %2667 = vmatpush.bf16.msra.mxu0 %v618
    %2668 = vmatpush.bf16.msra.mxu0 %v612
    %2669 = vmatpush.bf16.msra.mxu0 %v606
    %2670 = vmatpush.bf16.msra.mxu0 %v600
    %2671 = vmatpush.bf16.msra.mxu0 %v594
    %2672 = vmatpush.bf16.msra.mxu0 %v588
    %2673 = vmatpush.bf16.msra.mxu0 %v582
    %2674 = vmatpush.bf16.msra.mxu0 %v576
    %2675 = vmatmul.bf16.gmra.mxu0 %v2627
    %v2676 = vpop.f32.mrf.mxu0
    %v2677 = vadd.f32 %v2664, %v2676
    %v2678 = vpop.f32.mrf.mxu0
    %2679 = vdwg.mxu0
    %2680 = vmatpush.bf16.msra.mxu0 %v571
    %2681 = vmatpush.bf16.msra.mxu0 %v565
    %2682 = vmatpush.bf16.msra.mxu0 %v559
    %2683 = vmatpush.bf16.msra.mxu0 %v553
    %2684 = vmatpush.bf16.msra.mxu0 %v547
    %2685 = vmatpush.bf16.msra.mxu0 %v541
    %2686 = vmatpush.bf16.msra.mxu0 %v535
    %2687 = vmatpush.bf16.msra.mxu0 %v529
    %2688 = vmatmul.bf16.gmra.mxu0 %v2539
    %v2689 = vpop.f32.mrf.mxu0
    %v2690 = vadd.f32 0.0, %v2689
    %v2691 = vpop.f32.mrf.mxu0
    %2692 = vdwg.mxu0
    %2693 = vmatpush.bf16.msra.mxu0 %v619
    %2694 = vmatpush.bf16.msra.mxu0 %v613
    %2695 = vmatpush.bf16.msra.mxu0 %v607
    %2696 = vmatpush.bf16.msra.mxu0 %v601
    %2697 = vmatpush.bf16.msra.mxu0 %v595
    %2698 = vmatpush.bf16.msra.mxu0 %v589
    %2699 = vmatpush.bf16.msra.mxu0 %v583
    %2700 = vmatpush.bf16.msra.mxu0 %v577
    %2701 = vmatmul.bf16.gmra.mxu0 %v2627
    %v2702 = vpop.f32.mrf.mxu0
    %v2703 = vadd.f32 %v2690, %v2702
    %v2704 = vpop.f32.mrf.mxu0
    %2705 = vdwg.mxu0
    %2706 = vmatpush.bf16.msra.mxu0 %v572
    %2707 = vmatpush.bf16.msra.mxu0 %v566
    %2708 = vmatpush.bf16.msra.mxu0 %v560
    %2709 = vmatpush.bf16.msra.mxu0 %v554
    %2710 = vmatpush.bf16.msra.mxu0 %v548
    %2711 = vmatpush.bf16.msra.mxu0 %v542
    %2712 = vmatpush.bf16.msra.mxu0 %v536
    %2713 = vmatpush.bf16.msra.mxu0 %v530
    %2714 = vmatmul.bf16.gmra.mxu0 %v2539
    %v2715 = vpop.f32.mrf.mxu0
    %v2716 = vadd.f32 0.0, %v2715
    %v2717 = vpop.f32.mrf.mxu0
    %2718 = vdwg.mxu0
    %2719 = vmatpush.bf16.msra.mxu0 %v620
    %2720 = vmatpush.bf16.msra.mxu0 %v614
    %2721 = vmatpush.bf16.msra.mxu0 %v608
    %2722 = vmatpush.bf16.msra.mxu0 %v602
    %2723 = vmatpush.bf16.msra.mxu0 %v596
    %2724 = vmatpush.bf16.msra.mxu0 %v590
    %2725 = vmatpush.bf16.msra.mxu0 %v584
    %2726 = vmatpush.bf16.msra.mxu0 %v578
    %2727 = vmatmul.bf16.gmra.mxu0 %v2627
    %v2728 = vpop.f32.mrf.mxu0
    %v2729 = vadd.f32 %v2716, %v2728
    %v2730 = vpop.f32.mrf.mxu0
    %2731 = vdwg.mxu0
    %2732 = vmatpush.bf16.msra.mxu0 %v573
    %2733 = vmatpush.bf16.msra.mxu0 %v567
    %2734 = vmatpush.bf16.msra.mxu0 %v561
    %2735 = vmatpush.bf16.msra.mxu0 %v555
    %2736 = vmatpush.bf16.msra.mxu0 %v549
    %2737 = vmatpush.bf16.msra.mxu0 %v543
    %2738 = vmatpush.bf16.msra.mxu0 %v537
    %2739 = vmatpush.bf16.msra.mxu0 %v531
    %2740 = vmatmul.bf16.gmra.mxu0 %v2539
    %v2741 = vpop.f32.mrf.mxu0
    %v2742 = vadd.f32 0.0, %v2741
    %v2743 = vpop.f32.mrf.mxu0
    %2744 = vdwg.mxu0
    %2745 = vmatpush.bf16.msra.mxu0 %v621
    %2746 = vmatpush.bf16.msra.mxu0 %v615
    %2747 = vmatpush.bf16.msra.mxu0 %v609
    %2748 = vmatpush.bf16.msra.mxu0 %v603
    %2749 = vmatpush.bf16.msra.mxu0 %v597
    %2750 = vmatpush.bf16.msra.mxu0 %v591
    %2751 = vmatpush.bf16.msra.mxu0 %v585
    %2752 = vmatpush.bf16.msra.mxu0 %v579
    %2753 = vmatmul.bf16.gmra.mxu0 %v2627
    %v2754 = vpop.f32.mrf.mxu0
    %v2755 = vadd.f32 %v2742, %v2754
    %v2756 = vpop.f32.mrf.mxu0
    %2757 = vdwg.mxu0
    %2758 = vmatpush.bf16.msra.mxu0 %v574
    %2759 = vmatpush.bf16.msra.mxu0 %v568
    %2760 = vmatpush.bf16.msra.mxu0 %v562
    %2761 = vmatpush.bf16.msra.mxu0 %v556
    %2762 = vmatpush.bf16.msra.mxu0 %v550
    %2763 = vmatpush.bf16.msra.mxu0 %v544
    %2764 = vmatpush.bf16.msra.mxu0 %v538
    %2765 = vmatpush.bf16.msra.mxu0 %v532
    %2766 = vmatmul.bf16.gmra.mxu0 %v2539
    %v2767 = vpop.f32.mrf.mxu0
    %v2768 = vadd.f32 0.0, %v2767
    %v2769 = vpop.f32.mrf.mxu0
    %2770 = vdwg.mxu0
    %2771 = vmatpush.bf16.msra.mxu0 %v622
    %2772 = vmatpush.bf16.msra.mxu0 %v616
    %2773 = vmatpush.bf16.msra.mxu0 %v610
    %2774 = vmatpush.bf16.msra.mxu0 %v604
    %2775 = vmatpush.bf16.msra.mxu0 %v598
    %2776 = vmatpush.bf16.msra.mxu0 %v592
    %2777 = vmatpush.bf16.msra.mxu0 %v586
    %2778 = vmatpush.bf16.msra.mxu0 %v580
    %2779 = vmatmul.bf16.gmra.mxu0 %v2627
    %v2780 = vpop.f32.mrf.mxu0
    %v2781 = vadd.f32 %v2768, %v2780
    %v2782 = vpop.f32.mrf.mxu0
    %2783 = vdwg.mxu0
    %s2784 = scalar_lea.vmem %s0, 144
    %v2785 = vld [vmem:[%s2784] sm:$0xff]
    %v2786 = vld [vmem:[%s2784 + $0x8] sm:$0xff]
    %v2787 = vld [vmem:[%s2784 + $0x10] sm:$0xff]
    %v2788 = vadd.f32 %v2785, %v2651
    %v2789 = vadd.f32 %v2786, %v2677
    %v2790 = vxor.u32 %v2788, 2147483648
    %v2791 = vxor.u32 %v2789, 2147483648
    %v2792 = vmul.f32 %v2790, 1.442695
    %v2793 = vpow.pop %v2792
    %v2794 = vmul.f32 %v2791, 1.442695
    %v2795 = vpow.pop %v2794
    %v2796 = vadd.f32 %v2793, 1.0
    %v2797 = vadd.f32 %v2795, 1.0
    %v2798 = vrcp.pop %v2796
    %v2799 = vmul.f32 %v2796, %v2798
    %v2800 = vsub.f32 1.0, %v2799
    %v2801 = vmul.f32 %v2798, %v2800
    %v2802 = vadd.f32 %v2798, %v2801
    %vm2803 = vweird.f32 %v2796
    %vm2804 = vweird.f32 %v2798
    %vm2805 = vmor %vm2803, %vm2804
    %v2806 = vsel %vm2805, %v2798, %v2802
    %v2807 = vand.u32 2147483647, %v2796
    %vm2808 = vcmp.eq.f32.partialorder %v2807, 8.507059e+37
    %v2809 = vand.u32 %v2796, 2147483648
    %v2810 = vor.u32 1.1754944e-38, %v2809
    %v2811 = vsel %vm2808, %v2810, %v2806
    %v2812 = vmul.f32 1.0, %v2811
    %v2813 = vrcp.pop %v2797
    %v2814 = vmul.f32 %v2797, %v2813
    %v2815 = vsub.f32 1.0, %v2814
    %v2816 = vmul.f32 %v2813, %v2815
    %v2817 = vadd.f32 %v2813, %v2816
    %vm2818 = vweird.f32 %v2797
    %vm2819 = vweird.f32 %v2813
    %vm2820 = vmor %vm2818, %vm2819
    %v2821 = vsel %vm2820, %v2813, %v2817
    %v2822 = vand.u32 2147483647, %v2797
    %vm2823 = vcmp.eq.f32.partialorder %v2822, 8.507059e+37
    %v2824 = vand.u32 %v2797, 2147483648
    %v2825 = vor.u32 1.1754944e-38, %v2824
    %v2826 = vsel %vm2823, %v2825, %v2821
    %v2827 = vmul.f32 1.0, %v2826
    %v2828 = vadd.f32 %v2703, %v233
    %v2829 = vmul.f32 %v2812, %v2828
    %v2830 = vadd.f32 %v2787, %v2829
    %v2831 = vtanh.pop %v2830
    %v2832 = vsub.f32 1.0, %v2827
    %v2833 = vmul.f32 %v2832, %v2831
    %v2834 = vmul.f32 %v2827, %v2538
    %v2835 = vadd.f32 %v2833, %v2834
    %v2836 = vpack.c.bf16 %v2835, %v2835
    %2837 = vmatpush.bf16.msra.mxu0 %v1028
    %2838 = vmatpush.bf16.msra.mxu0 %v1025
    %2839 = vmatpush.bf16.msra.mxu0 %v1022
    %2840 = vmatpush.bf16.msra.mxu0 %v1019
    %2841 = vmatpush.bf16.msra.mxu0 %v1016
    %2842 = vmatpush.bf16.msra.mxu0 %v1013
    %2843 = vmatpush.bf16.msra.mxu0 %v1010
    %2844 = vmatpush.bf16.msra.mxu0 %v1007
    %2845 = vmatmul.bf16.gmra.mxu0 %v2836
    %v2846 = vpop.f32.mrf.mxu0
    %v2847 = vadd.f32 %v225, %v2846
    %v2848 = vpop.f32.mrf.mxu0
    %2849 = vdwg.mxu0
    %2850 = vmatpush.bf16.msra.mxu0 %v1029
    %2851 = vmatpush.bf16.msra.mxu0 %v1026
    %2852 = vmatpush.bf16.msra.mxu0 %v1023
    %2853 = vmatpush.bf16.msra.mxu0 %v1020
    %2854 = vmatpush.bf16.msra.mxu0 %v1017
    %2855 = vmatpush.bf16.msra.mxu0 %v1014
    %2856 = vmatpush.bf16.msra.mxu0 %v1011
    %2857 = vmatpush.bf16.msra.mxu0 %v1008
    %2858 = vmatmul.bf16.gmra.mxu0 %v2836
    %v2859 = vpop.f32.mrf.mxu0
    %v2860 = vadd.f32 %v226, %v2859
    %v2861 = vpop.f32.mrf.mxu0
    %2862 = vdwg.mxu0
    %2863 = vmatpush.bf16.msra.mxu0 %v1030
    %2864 = vmatpush.bf16.msra.mxu0 %v1027
    %2865 = vmatpush.bf16.msra.mxu0 %v1024
    %2866 = vmatpush.bf16.msra.mxu0 %v1021
    %2867 = vmatpush.bf16.msra.mxu0 %v1018
    %2868 = vmatpush.bf16.msra.mxu0 %v1015
    %2869 = vmatpush.bf16.msra.mxu0 %v1012
    %2870 = vmatpush.bf16.msra.mxu0 %v1009
    %2871 = vmatmul.bf16.gmra.mxu0 %v2836
    %v2872 = vpop.f32.mrf.mxu0
    %v2873 = vadd.f32 %v227, %v2872
    %v2874 = vpop.f32.mrf.mxu0
    %2875 = vdwg.mxu0
    %v2876 = vadd.f32 %v2847, %v2729
    %v2877 = vadd.f32 %v2860, %v2755
    %v2878 = vxor.u32 %v2876, 2147483648
    %v2879 = vxor.u32 %v2877, 2147483648
    %v2880 = vmul.f32 %v2878, 1.442695
    %v2881 = vpow.pop %v2880
    %v2882 = vmul.f32 %v2879, 1.442695
    %v2883 = vpow.pop %v2882
    %v2884 = vadd.f32 %v2881, 1.0
    %v2885 = vadd.f32 %v2883, 1.0
    %v2886 = vrcp.pop %v2884
    %v2887 = vmul.f32 %v2884, %v2886
    %v2888 = vsub.f32 1.0, %v2887
    %v2889 = vmul.f32 %v2886, %v2888
    %v2890 = vadd.f32 %v2886, %v2889
    %vm2891 = vweird.f32 %v2884
    %vm2892 = vweird.f32 %v2886
    %vm2893 = vmor %vm2891, %vm2892
    %v2894 = vsel %vm2893, %v2886, %v2890
    %v2895 = vand.u32 2147483647, %v2884
    %vm2896 = vcmp.eq.f32.partialorder %v2895, 8.507059e+37
    %v2897 = vand.u32 %v2884, 2147483648
    %v2898 = vor.u32 1.1754944e-38, %v2897
    %v2899 = vsel %vm2896, %v2898, %v2894
    %v2900 = vmul.f32 1.0, %v2899
    %v2901 = vrcp.pop %v2885
    %v2902 = vmul.f32 %v2885, %v2901
    %v2903 = vsub.f32 1.0, %v2902
    %v2904 = vmul.f32 %v2901, %v2903
    %v2905 = vadd.f32 %v2901, %v2904
    %vm2906 = vweird.f32 %v2885
    %vm2907 = vweird.f32 %v2901
    %vm2908 = vmor %vm2906, %vm2907
    %v2909 = vsel %vm2908, %v2901, %v2905
    %v2910 = vand.u32 2147483647, %v2885
    %vm2911 = vcmp.eq.f32.partialorder %v2910, 8.507059e+37
    %v2912 = vand.u32 %v2885, 2147483648
    %v2913 = vor.u32 1.1754944e-38, %v2912
    %v2914 = vsel %vm2911, %v2913, %v2909
    %v2915 = vmul.f32 1.0, %v2914
    %v2916 = vadd.f32 %v2781, %v237
    %v2917 = vmul.f32 %v2900, %v2916
    %v2918 = vadd.f32 %v2873, %v2917
    %v2919 = vtanh.pop %v2918
    %v2920 = vsub.f32 1.0, %v2915
    %v2921 = vmul.f32 %v2920, %v2919
    %v2922 = vmul.f32 %v2915, %v2626
    %v2923 = vadd.f32 %v2921, %v2922
    %v2924 = vpack.c.bf16 %v2923, %v2923
    %2925 = vmatpush.bf16.msra.mxu0 %v569
    %2926 = vmatpush.bf16.msra.mxu0 %v563
    %2927 = vmatpush.bf16.msra.mxu0 %v557
    %2928 = vmatpush.bf16.msra.mxu0 %v551
    %2929 = vmatpush.bf16.msra.mxu0 %v545
    %2930 = vmatpush.bf16.msra.mxu0 %v539
    %2931 = vmatpush.bf16.msra.mxu0 %v533
    %2932 = vmatpush.bf16.msra.mxu0 %v527
    %2933 = vmatmul.bf16.gmra.mxu0 %v2836
    %v2934 = vpop.f32.mrf.mxu0
    %v2935 = vadd.f32 0.0, %v2934
    %v2936 = vpop.f32.mrf.mxu0
    %2937 = vdwg.mxu0
    %2938 = vmatpush.bf16.msra.mxu0 %v617
    %2939 = vmatpush.bf16.msra.mxu0 %v611
    %2940 = vmatpush.bf16.msra.mxu0 %v605
    %2941 = vmatpush.bf16.msra.mxu0 %v599
    %2942 = vmatpush.bf16.msra.mxu0 %v593
    %2943 = vmatpush.bf16.msra.mxu0 %v587
    %2944 = vmatpush.bf16.msra.mxu0 %v581
    %2945 = vmatpush.bf16.msra.mxu0 %v575
    %2946 = vmatmul.bf16.gmra.mxu0 %v2924
    %v2947 = vpop.f32.mrf.mxu0
    %v2948 = vadd.f32 %v2935, %v2947
    %v2949 = vpop.f32.mrf.mxu0
    %2950 = vdwg.mxu0
    %2951 = vmatpush.bf16.msra.mxu0 %v570
    %2952 = vmatpush.bf16.msra.mxu0 %v564
    %2953 = vmatpush.bf16.msra.mxu0 %v558
    %2954 = vmatpush.bf16.msra.mxu0 %v552
    %2955 = vmatpush.bf16.msra.mxu0 %v546
    %2956 = vmatpush.bf16.msra.mxu0 %v540
    %2957 = vmatpush.bf16.msra.mxu0 %v534
    %2958 = vmatpush.bf16.msra.mxu0 %v528
    %2959 = vmatmul.bf16.gmra.mxu0 %v2836
    %v2960 = vpop.f32.mrf.mxu0
    %v2961 = vadd.f32 0.0, %v2960
    %v2962 = vpop.f32.mrf.mxu0
    %2963 = vdwg.mxu0
    %2964 = vmatpush.bf16.msra.mxu0 %v618
    %2965 = vmatpush.bf16.msra.mxu0 %v612
    %2966 = vmatpush.bf16.msra.mxu0 %v606
    %2967 = vmatpush.bf16.msra.mxu0 %v600
    %2968 = vmatpush.bf16.msra.mxu0 %v594
    %2969 = vmatpush.bf16.msra.mxu0 %v588
    %2970 = vmatpush.bf16.msra.mxu0 %v582
    %2971 = vmatpush.bf16.msra.mxu0 %v576
    %2972 = vmatmul.bf16.gmra.mxu0 %v2924
    %v2973 = vpop.f32.mrf.mxu0
    %v2974 = vadd.f32 %v2961, %v2973
    %v2975 = vpop.f32.mrf.mxu0
    %2976 = vdwg.mxu0
    %2977 = vmatpush.bf16.msra.mxu0 %v571
    %2978 = vmatpush.bf16.msra.mxu0 %v565
    %2979 = vmatpush.bf16.msra.mxu0 %v559
    %2980 = vmatpush.bf16.msra.mxu0 %v553
    %2981 = vmatpush.bf16.msra.mxu0 %v547
    %2982 = vmatpush.bf16.msra.mxu0 %v541
    %2983 = vmatpush.bf16.msra.mxu0 %v535
    %2984 = vmatpush.bf16.msra.mxu0 %v529
    %2985 = vmatmul.bf16.gmra.mxu0 %v2836
    %v2986 = vpop.f32.mrf.mxu0
    %v2987 = vadd.f32 0.0, %v2986
    %v2988 = vpop.f32.mrf.mxu0
    %2989 = vdwg.mxu0
    %2990 = vmatpush.bf16.msra.mxu0 %v619
    %2991 = vmatpush.bf16.msra.mxu0 %v613
    %2992 = vmatpush.bf16.msra.mxu0 %v607
    %2993 = vmatpush.bf16.msra.mxu0 %v601
    %2994 = vmatpush.bf16.msra.mxu0 %v595
    %2995 = vmatpush.bf16.msra.mxu0 %v589
    %2996 = vmatpush.bf16.msra.mxu0 %v583
    %2997 = vmatpush.bf16.msra.mxu0 %v577
    %2998 = vmatmul.bf16.gmra.mxu0 %v2924
    %v2999 = vpop.f32.mrf.mxu0
    %v3000 = vadd.f32 %v2987, %v2999
    %v3001 = vpop.f32.mrf.mxu0
    %3002 = vdwg.mxu0
    %3003 = vmatpush.bf16.msra.mxu0 %v572
    %3004 = vmatpush.bf16.msra.mxu0 %v566
    %3005 = vmatpush.bf16.msra.mxu0 %v560
    %3006 = vmatpush.bf16.msra.mxu0 %v554
    %3007 = vmatpush.bf16.msra.mxu0 %v548
    %3008 = vmatpush.bf16.msra.mxu0 %v542
    %3009 = vmatpush.bf16.msra.mxu0 %v536
    %3010 = vmatpush.bf16.msra.mxu0 %v530
    %3011 = vmatmul.bf16.gmra.mxu0 %v2836
    %v3012 = vpop.f32.mrf.mxu0
    %v3013 = vadd.f32 0.0, %v3012
    %v3014 = vpop.f32.mrf.mxu0
    %3015 = vdwg.mxu0
    %3016 = vmatpush.bf16.msra.mxu0 %v620
    %3017 = vmatpush.bf16.msra.mxu0 %v614
    %3018 = vmatpush.bf16.msra.mxu0 %v608
    %3019 = vmatpush.bf16.msra.mxu0 %v602
    %3020 = vmatpush.bf16.msra.mxu0 %v596
    %3021 = vmatpush.bf16.msra.mxu0 %v590
    %3022 = vmatpush.bf16.msra.mxu0 %v584
    %3023 = vmatpush.bf16.msra.mxu0 %v578
    %3024 = vmatmul.bf16.gmra.mxu0 %v2924
    %v3025 = vpop.f32.mrf.mxu0
    %v3026 = vadd.f32 %v3013, %v3025
    %v3027 = vpop.f32.mrf.mxu0
    %3028 = vdwg.mxu0
    %3029 = vmatpush.bf16.msra.mxu0 %v573
    %3030 = vmatpush.bf16.msra.mxu0 %v567
    %3031 = vmatpush.bf16.msra.mxu0 %v561
    %3032 = vmatpush.bf16.msra.mxu0 %v555
    %3033 = vmatpush.bf16.msra.mxu0 %v549
    %3034 = vmatpush.bf16.msra.mxu0 %v543
    %3035 = vmatpush.bf16.msra.mxu0 %v537
    %3036 = vmatpush.bf16.msra.mxu0 %v531
    %3037 = vmatmul.bf16.gmra.mxu0 %v2836
    %v3038 = vpop.f32.mrf.mxu0
    %v3039 = vadd.f32 0.0, %v3038
    %v3040 = vpop.f32.mrf.mxu0
    %3041 = vdwg.mxu0
    %3042 = vmatpush.bf16.msra.mxu0 %v621
    %3043 = vmatpush.bf16.msra.mxu0 %v615
    %3044 = vmatpush.bf16.msra.mxu0 %v609
    %3045 = vmatpush.bf16.msra.mxu0 %v603
    %3046 = vmatpush.bf16.msra.mxu0 %v597
    %3047 = vmatpush.bf16.msra.mxu0 %v591
    %3048 = vmatpush.bf16.msra.mxu0 %v585
    %3049 = vmatpush.bf16.msra.mxu0 %v579
    %3050 = vmatmul.bf16.gmra.mxu0 %v2924
    %v3051 = vpop.f32.mrf.mxu0
    %v3052 = vadd.f32 %v3039, %v3051
    %v3053 = vpop.f32.mrf.mxu0
    %3054 = vdwg.mxu0
    %3055 = vmatpush.bf16.msra.mxu0 %v574
    %3056 = vmatpush.bf16.msra.mxu0 %v568
    %3057 = vmatpush.bf16.msra.mxu0 %v562
    %3058 = vmatpush.bf16.msra.mxu0 %v556
    %3059 = vmatpush.bf16.msra.mxu0 %v550
    %3060 = vmatpush.bf16.msra.mxu0 %v544
    %3061 = vmatpush.bf16.msra.mxu0 %v538
    %3062 = vmatpush.bf16.msra.mxu0 %v532
    %3063 = vmatmul.bf16.gmra.mxu0 %v2836
    %v3064 = vpop.f32.mrf.mxu0
    %v3065 = vadd.f32 0.0, %v3064
    %v3066 = vpop.f32.mrf.mxu0
    %3067 = vdwg.mxu0
    %3068 = vmatpush.bf16.msra.mxu0 %v622
    %3069 = vmatpush.bf16.msra.mxu0 %v616
    %3070 = vmatpush.bf16.msra.mxu0 %v610
    %3071 = vmatpush.bf16.msra.mxu0 %v604
    %3072 = vmatpush.bf16.msra.mxu0 %v598
    %3073 = vmatpush.bf16.msra.mxu0 %v592
    %3074 = vmatpush.bf16.msra.mxu0 %v586
    %3075 = vmatpush.bf16.msra.mxu0 %v580
    %3076 = vmatmul.bf16.gmra.mxu0 %v2924
    %v3077 = vpop.f32.mrf.mxu0
    %v3078 = vadd.f32 %v3065, %v3077
    %v3079 = vpop.f32.mrf.mxu0
    %3080 = vdwg.mxu0
    %s3081 = scalar_lea.vmem %s0, 168
    %v3082 = vld [vmem:[%s3081] sm:$0xff]
    %v3083 = vld [vmem:[%s3081 + $0x8] sm:$0xff]
    %v3084 = vld [vmem:[%s3081 + $0x10] sm:$0xff]
    %v3085 = vadd.f32 %v3082, %v2948
    %v3086 = vadd.f32 %v3083, %v2974
    %v3087 = vxor.u32 %v3085, 2147483648
    %v3088 = vxor.u32 %v3086, 2147483648
    %v3089 = vmul.f32 %v3087, 1.442695
    %v3090 = vpow.pop %v3089
    %v3091 = vmul.f32 %v3088, 1.442695
    %v3092 = vpow.pop %v3091
    %v3093 = vadd.f32 %v3090, 1.0
    %v3094 = vadd.f32 %v3092, 1.0
    %v3095 = vrcp.pop %v3093
    %v3096 = vmul.f32 %v3093, %v3095
    %v3097 = vsub.f32 1.0, %v3096
    %v3098 = vmul.f32 %v3095, %v3097
    %v3099 = vadd.f32 %v3095, %v3098
    %vm3100 = vweird.f32 %v3093
    %vm3101 = vweird.f32 %v3095
    %vm3102 = vmor %vm3100, %vm3101
    %v3103 = vsel %vm3102, %v3095, %v3099
    %v3104 = vand.u32 2147483647, %v3093
    %vm3105 = vcmp.eq.f32.partialorder %v3104, 8.507059e+37
    %v3106 = vand.u32 %v3093, 2147483648
    %v3107 = vor.u32 1.1754944e-38, %v3106
    %v3108 = vsel %vm3105, %v3107, %v3103
    %v3109 = vmul.f32 1.0, %v3108
    %v3110 = vrcp.pop %v3094
    %v3111 = vmul.f32 %v3094, %v3110
    %v3112 = vsub.f32 1.0, %v3111
    %v3113 = vmul.f32 %v3110, %v3112
    %v3114 = vadd.f32 %v3110, %v3113
    %vm3115 = vweird.f32 %v3094
    %vm3116 = vweird.f32 %v3110
    %vm3117 = vmor %vm3115, %vm3116
    %v3118 = vsel %vm3117, %v3110, %v3114
    %v3119 = vand.u32 2147483647, %v3094
    %vm3120 = vcmp.eq.f32.partialorder %v3119, 8.507059e+37
    %v3121 = vand.u32 %v3094, 2147483648
    %v3122 = vor.u32 1.1754944e-38, %v3121
    %v3123 = vsel %vm3120, %v3122, %v3118
    %v3124 = vmul.f32 1.0, %v3123
    %v3125 = vadd.f32 %v3000, %v233
    %v3126 = vmul.f32 %v3109, %v3125
    %v3127 = vadd.f32 %v3084, %v3126
    %v3128 = vtanh.pop %v3127
    %v3129 = vsub.f32 1.0, %v3124
    %v3130 = vmul.f32 %v3129, %v3128
    %v3131 = vmul.f32 %v3124, %v2835
    %v3132 = vadd.f32 %v3130, %v3131
    %v3133 = vpack.c.bf16 %v3132, %v3132
    %3134 = vmatpush.bf16.msra.mxu0 %v1028
    %3135 = vmatpush.bf16.msra.mxu0 %v1025
    %3136 = vmatpush.bf16.msra.mxu0 %v1022
    %3137 = vmatpush.bf16.msra.mxu0 %v1019
    %3138 = vmatpush.bf16.msra.mxu0 %v1016
    %3139 = vmatpush.bf16.msra.mxu0 %v1013
    %3140 = vmatpush.bf16.msra.mxu0 %v1010
    %3141 = vmatpush.bf16.msra.mxu0 %v1007
    %3142 = vmatmul.bf16.gmra.mxu0 %v3133
    %v3143 = vpop.f32.mrf.mxu0
    %v3144 = vadd.f32 %v225, %v3143
    %v3145 = vpop.f32.mrf.mxu0
    %3146 = vdwg.mxu0
    %3147 = vmatpush.bf16.msra.mxu0 %v1029
    %3148 = vmatpush.bf16.msra.mxu0 %v1026
    %3149 = vmatpush.bf16.msra.mxu0 %v1023
    %3150 = vmatpush.bf16.msra.mxu0 %v1020
    %3151 = vmatpush.bf16.msra.mxu0 %v1017
    %3152 = vmatpush.bf16.msra.mxu0 %v1014
    %3153 = vmatpush.bf16.msra.mxu0 %v1011
    %3154 = vmatpush.bf16.msra.mxu0 %v1008
    %3155 = vmatmul.bf16.gmra.mxu0 %v3133
    %v3156 = vpop.f32.mrf.mxu0
    %v3157 = vadd.f32 %v226, %v3156
    %v3158 = vpop.f32.mrf.mxu0
    %3159 = vdwg.mxu0
    %3160 = vmatpush.bf16.msra.mxu0 %v1030
    %3161 = vmatpush.bf16.msra.mxu0 %v1027
    %3162 = vmatpush.bf16.msra.mxu0 %v1024
    %3163 = vmatpush.bf16.msra.mxu0 %v1021
    %3164 = vmatpush.bf16.msra.mxu0 %v1018
    %3165 = vmatpush.bf16.msra.mxu0 %v1015
    %3166 = vmatpush.bf16.msra.mxu0 %v1012
    %3167 = vmatpush.bf16.msra.mxu0 %v1009
    %3168 = vmatmul.bf16.gmra.mxu0 %v3133
    %v3169 = vpop.f32.mrf.mxu0
    %v3170 = vadd.f32 %v227, %v3169
    %v3171 = vpop.f32.mrf.mxu0
    %3172 = vdwg.mxu0
    %v3173 = vadd.f32 %v3144, %v3026
    %v3174 = vadd.f32 %v3157, %v3052
    %v3175 = vxor.u32 %v3173, 2147483648
    %v3176 = vxor.u32 %v3174, 2147483648
    %v3177 = vmul.f32 %v3175, 1.442695
    %v3178 = vpow.pop %v3177
    %v3179 = vmul.f32 %v3176, 1.442695
    %v3180 = vpow.pop %v3179
    %v3181 = vadd.f32 %v3178, 1.0
    %v3182 = vadd.f32 %v3180, 1.0
    %v3183 = vrcp.pop %v3181
    %v3184 = vmul.f32 %v3181, %v3183
    %v3185 = vsub.f32 1.0, %v3184
    %v3186 = vmul.f32 %v3183, %v3185
    %v3187 = vadd.f32 %v3183, %v3186
    %vm3188 = vweird.f32 %v3181
    %vm3189 = vweird.f32 %v3183
    %vm3190 = vmor %vm3188, %vm3189
    %v3191 = vsel %vm3190, %v3183, %v3187
    %v3192 = vand.u32 2147483647, %v3181
    %vm3193 = vcmp.eq.f32.partialorder %v3192, 8.507059e+37
    %v3194 = vand.u32 %v3181, 2147483648
    %v3195 = vor.u32 1.1754944e-38, %v3194
    %v3196 = vsel %vm3193, %v3195, %v3191
    %v3197 = vmul.f32 1.0, %v3196
    %v3198 = vrcp.pop %v3182
    %v3199 = vmul.f32 %v3182, %v3198
    %v3200 = vsub.f32 1.0, %v3199
    %v3201 = vmul.f32 %v3198, %v3200
    %v3202 = vadd.f32 %v3198, %v3201
    %vm3203 = vweird.f32 %v3182
    %vm3204 = vweird.f32 %v3198
    %vm3205 = vmor %vm3203, %vm3204
    %v3206 = vsel %vm3205, %v3198, %v3202
    %v3207 = vand.u32 2147483647, %v3182
    %vm3208 = vcmp.eq.f32.partialorder %v3207, 8.507059e+37
    %v3209 = vand.u32 %v3182, 2147483648
    %v3210 = vor.u32 1.1754944e-38, %v3209
    %v3211 = vsel %vm3208, %v3210, %v3206
    %v3212 = vmul.f32 1.0, %v3211
    %v3213 = vadd.f32 %v3078, %v237
    %v3214 = vmul.f32 %v3197, %v3213
    %v3215 = vadd.f32 %v3170, %v3214
    %v3216 = vtanh.pop %v3215
    %v3217 = vsub.f32 1.0, %v3212
    %v3218 = vmul.f32 %v3217, %v3216
    %v3219 = vmul.f32 %v3212, %v2923
    %v3220 = vadd.f32 %v3218, %v3219
    %v3221 = vpack.c.bf16 %v3220, %v3220
    %v3222 = vld [vmem:[%s6] sm:$0xf]
    %v3223 = vld [vmem:[%s6 + $0x4] sm:$0xf]
    %v3224 = vld [vmem:[%s6 + $0x8] sm:$0xf]
    %v3225 = vld [vmem:[%s6 + $0xc] sm:$0xf]
    %v3226 = vld [vmem:[%s6 + $0x10] sm:$0xf]
    %v3227 = vld [vmem:[%s6 + $0x14] sm:$0xf]
    %v3228 = vld [vmem:[%s6 + $0x18] sm:$0xf]
    %v3229 = vld [vmem:[%s6 + $0x1c] sm:$0xf]
    %v3230 = vld [vmem:[%s6 + $0x20] sm:$0xf]
    %v3231 = vld [vmem:[%s6 + $0x24] sm:$0xf]
    %v3232 = vld [vmem:[%s6 + $0x28] sm:$0xf]
    %v3233 = vld [vmem:[%s6 + $0x2c] sm:$0xf]
    %v3234 = vld [vmem:[%s6 + $0x30] sm:$0xf]
    %v3235 = vld [vmem:[%s6 + $0x34] sm:$0xf]
    %v3236 = vld [vmem:[%s6 + $0x38] sm:$0xf]
    %v3237 = vld [vmem:[%s6 + $0x3c] sm:$0xf]
    %v3238 = vld [vmem:[%s6 + $0x40] sm:$0xf]
    %v3239 = vld [vmem:[%s6 + $0x44] sm:$0xf]
    %v3240 = vld [vmem:[%s6 + $0x48] sm:$0xf]
    %v3241 = vld [vmem:[%s6 + $0x4c] sm:$0xf]
    %v3242 = vld [vmem:[%s6 + $0x50] sm:$0xf]
    %v3243 = vld [vmem:[%s6 + $0x54] sm:$0xf]
    %v3244 = vld [vmem:[%s6 + $0x58] sm:$0xf]
    %v3245 = vld [vmem:[%s6 + $0x5c] sm:$0xf]
    %v3246 = vld [vmem:[%s6 + $0x60] sm:$0xf]
    %v3247 = vld [vmem:[%s6 + $0x64] sm:$0xf]
    %v3248 = vld [vmem:[%s6 + $0x68] sm:$0xf]
    %v3249 = vld [vmem:[%s6 + $0x6c] sm:$0xf]
    %v3250 = vld [vmem:[%s6 + $0x70] sm:$0xf]
    %v3251 = vld [vmem:[%s6 + $0x74] sm:$0xf]
    %v3252 = vld [vmem:[%s6 + $0x78] sm:$0xf]
    %v3253 = vld [vmem:[%s6 + $0x7c] sm:$0xf]
    %v3254 = vld [vmem:[%s7] sm:$0x1]
    %v3256 = vperm.slane %v3254, 0
    %v3290 = vunpack.c.l.b16 %v3222
    %v3291 = vunpack.c.l.b16 %v3223
    %v3292 = vunpack.c.l.b16 %v3224
    %v3293 = vunpack.c.l.b16 %v3225
    %v3294 = vunpack.c.l.b16 %v3226
    %v3295 = vunpack.c.l.b16 %v3227
    %v3296 = vunpack.c.l.b16 %v3228
    %v3297 = vunpack.c.l.b16 %v3229
    %v3298 = vunpack.c.l.b16 %v3230
    %v3299 = vunpack.c.l.b16 %v3231
    %v3300 = vunpack.c.l.b16 %v3232
    %v3301 = vunpack.c.l.b16 %v3233
    %v3302 = vunpack.c.l.b16 %v3234
    %v3303 = vunpack.c.l.b16 %v3235
    %v3304 = vunpack.c.l.b16 %v3236
    %v3305 = vunpack.c.l.b16 %v3237
    %v3306 = vunpack.c.l.b16 %v3238
    %v3307 = vunpack.c.l.b16 %v3239
    %v3308 = vunpack.c.l.b16 %v3240
    %v3309 = vunpack.c.l.b16 %v3241
    %v3310 = vunpack.c.l.b16 %v3242
    %v3311 = vunpack.c.l.b16 %v3243
    %v3312 = vunpack.c.l.b16 %v3244
    %v3313 = vunpack.c.l.b16 %v3245
    %v3314 = vunpack.c.l.b16 %v3246
    %v3315 = vunpack.c.l.b16 %v3247
    %v3316 = vunpack.c.l.b16 %v3248
    %v3317 = vunpack.c.l.b16 %v3249
    %v3318 = vunpack.c.l.b16 %v3250
    %v3319 = vunpack.c.l.b16 %v3251
    %v3320 = vunpack.c.l.b16 %v3252
    %v3321 = vunpack.c.l.b16 %v3253
    %v3322 = vpack.c.b16 %v3291, %v3290
    %v3323 = vpack.c.b16 %v3293, %v3292
    %v3324 = vpack.c.b16 %v3295, %v3294
    %v3325 = vpack.c.b16 %v3297, %v3296
    %v3326 = vpack.c.b16 %v3299, %v3298
    %v3327 = vpack.c.b16 %v3301, %v3300
    %v3328 = vpack.c.b16 %v3303, %v3302
    %v3329 = vpack.c.b16 %v3305, %v3304
    %v3330 = vpack.c.b16 %v3307, %v3306
    %v3331 = vpack.c.b16 %v3309, %v3308
    %v3332 = vpack.c.b16 %v3311, %v3310
    %v3333 = vpack.c.b16 %v3313, %v3312
    %v3334 = vpack.c.b16 %v3315, %v3314
    %v3335 = vpack.c.b16 %v3317, %v3316
    %v3336 = vpack.c.b16 %v3319, %v3318
    %v3337 = vpack.c.b16 %v3321, %v3320
    %3354 = vmatpush.bf16.msra.mxu0 %v3329
    %3355 = vmatpush.bf16.msra.mxu0 %v3328
    %3356 = vmatpush.bf16.msra.mxu0 %v3327
    %3357 = vmatpush.bf16.msra.mxu0 %v3326
    %3358 = vmatpush.bf16.msra.mxu0 %v3325
    %3359 = vmatpush.bf16.msra.mxu0 %v3324
    %3360 = vmatpush.bf16.msra.mxu0 %v3323
    %3361 = vmatpush.bf16.msra.mxu0 %v3322
    %3362 = vmatmul.bf16.gmra.mxu0 %v3133
    %v3363 = vpop.f32.mrf.mxu0
    %v3364 = vadd.f32 %v3256, %v3363
    %v3365 = vpop.f32.mrf.mxu0
    %3366 = vdwg.mxu0
    %3367 = vmatpush.bf16.msra.mxu0 %v3337
    %3368 = vmatpush.bf16.msra.mxu0 %v3336
    %3369 = vmatpush.bf16.msra.mxu0 %v3335
    %3370 = vmatpush.bf16.msra.mxu0 %v3334
    %3371 = vmatpush.bf16.msra.mxu0 %v3333
    %3372 = vmatpush.bf16.msra.mxu0 %v3332
    %3373 = vmatpush.bf16.msra.mxu0 %v3331
    %3374 = vmatpush.bf16.msra.mxu0 %v3330
    %3375 = vmatmul.bf16.gmra.mxu0 %v3221
    %v3376 = vpop.f32.mrf.mxu0
    %v3377 = vadd.f32 %v3364, %v3376
    %v3378 = vpop.f32.mrf.mxu0
    %3379 = vdwg.mxu0
    %v3380 = vmax.f32 %v3377, 0.0
    %v3381 = vpack.c.bf16 %v3380, %v3380
    %v3382 = vld [vmem:[#allocation4] sm:$0xf]
    %v3383 = vld [vmem:[#allocation4 + $0x4] sm:$0xf]
    %v3384 = vld [vmem:[#allocation4 + $0x8] sm:$0xf]
    %v3385 = vld [vmem:[#allocation4 + $0xc] sm:$0xf]
    %v3386 = vld [vmem:[#allocation4 + $0x10] sm:$0xf]
    %v3387 = vld [vmem:[#allocation4 + $0x14] sm:$0xf]
    %v3388 = vld [vmem:[#allocation4 + $0x18] sm:$0xf]
    %v3389 = vld [vmem:[#allocation4 + $0x1c] sm:$0xf]
    %v3390 = vld [vmem:[#allocation4 + $0x20] sm:$0xf]
    %v3391 = vld [vmem:[#allocation4 + $0x24] sm:$0xf]
    %v3392 = vld [vmem:[#allocation4 + $0x28] sm:$0xf]
    %v3393 = vld [vmem:[#allocation4 + $0x2c] sm:$0xf]
    %v3394 = vld [vmem:[#allocation4 + $0x30] sm:$0xf]
    %v3395 = vld [vmem:[#allocation4 + $0x34] sm:$0xf]
    %v3396 = vld [vmem:[#allocation4 + $0x38] sm:$0xf]
    %v3397 = vld [vmem:[#allocation4 + $0x3c] sm:$0xf]
    %v3398 = vld [vmem:[%s9] sm:$0x1]
    %v3400 = vperm.slane %v3398, 0
    %v3418 = vunpack.c.l.b16 %v3382
    %v3419 = vunpack.c.l.b16 %v3383
    %v3420 = vunpack.c.l.b16 %v3384
    %v3421 = vunpack.c.l.b16 %v3385
    %v3422 = vunpack.c.l.b16 %v3386
    %v3423 = vunpack.c.l.b16 %v3387
    %v3424 = vunpack.c.l.b16 %v3388
    %v3425 = vunpack.c.l.b16 %v3389
    %v3426 = vunpack.c.l.b16 %v3390
    %v3427 = vunpack.c.l.b16 %v3391
    %v3428 = vunpack.c.l.b16 %v3392
    %v3429 = vunpack.c.l.b16 %v3393
    %v3430 = vunpack.c.l.b16 %v3394
    %v3431 = vunpack.c.l.b16 %v3395
    %v3432 = vunpack.c.l.b16 %v3396
    %v3433 = vunpack.c.l.b16 %v3397
    %v3434 = vpack.c.b16 %v3419, %v3418
    %v3435 = vpack.c.b16 %v3421, %v3420
    %v3436 = vpack.c.b16 %v3423, %v3422
    %v3437 = vpack.c.b16 %v3425, %v3424
    %v3438 = vpack.c.b16 %v3427, %v3426
    %v3439 = vpack.c.b16 %v3429, %v3428
    %v3440 = vpack.c.b16 %v3431, %v3430
    %v3441 = vpack.c.b16 %v3433, %v3432
    %3450 = vmatpush.bf16.msra.mxu0 %v3441
    %3451 = vmatpush.bf16.msra.mxu0 %v3440
    %3452 = vmatpush.bf16.msra.mxu0 %v3439
    %3453 = vmatpush.bf16.msra.mxu0 %v3438
    %3454 = vmatpush.bf16.msra.mxu0 %v3437
    %3455 = vmatpush.bf16.msra.mxu0 %v3436
    %3456 = vmatpush.bf16.msra.mxu0 %v3435
    %3457 = vmatpush.bf16.msra.mxu0 %v3434
    %3458 = vmatmul.bf16.gmra.mxu0 %v3381
    %v3459 = vpop.f32.mrf.mxu0
    %v3460 = vadd.f32 %v3400, %v3459
    %v3461 = vpop.f32.mrf.mxu0
    %3462 = vdwg.mxu0
    %v3463 = vmax.f32 %v3460, 0.0
    %v3464 = vpack.c.bf16 %v3463, %v3463
    %v3465 = vld [vmem:[#allocation6] sm:$0xff]
    %v3466 = vld [vmem:[#allocation6 + $0x8] sm:$0xff]
    %v3467 = vld [vmem:[#allocation6 + $0x10] sm:$0xff]
    %v3468 = vld [vmem:[#allocation6 + $0x18] sm:$0xff]
    %v3469 = vld [vmem:[#allocation6 + $0x20] sm:$0xff]
    %v3470 = vld [vmem:[#allocation6 + $0x28] sm:$0xff]
    %v3471 = vld [vmem:[#allocation6 + $0x30] sm:$0xff]
    %v3472 = vld [vmem:[#allocation6 + $0x38] sm:$0xff]
    %v3473 = vld [vmem:[#allocation6 + $0x40] sm:$0xff]
    %v3474 = vld [vmem:[#allocation6 + $0x48] sm:$0xff]
    %v3475 = vld [vmem:[#allocation6 + $0x50] sm:$0xff]
    %v3476 = vld [vmem:[#allocation6 + $0x58] sm:$0xff]
    %v3477 = vld [vmem:[#allocation6 + $0x60] sm:$0xff]
    %v3478 = vld [vmem:[#allocation6 + $0x68] sm:$0xff]
    %v3479 = vld [vmem:[#allocation6 + $0x70] sm:$0xff]
    %v3480 = vld [vmem:[#allocation6 + $0x78] sm:$0xff]
    %v3481 = vld [vmem:[%s11] sm:$0x3]
    %v3483 = vperm.slane %v3481, 0
    %v3484 = vperm.slane %v3481, 1
    %v3503 = vunpack.c.l.b16 %v3465
    %v3504 = vunpack.c.h.b16 %v3465
    %v3505 = vunpack.c.l.b16 %v3466
    %v3506 = vunpack.c.h.b16 %v3466
    %v3507 = vunpack.c.l.b16 %v3467
    %v3508 = vunpack.c.h.b16 %v3467
    %v3509 = vunpack.c.l.b16 %v3468
    %v3510 = vunpack.c.h.b16 %v3468
    %v3511 = vunpack.c.l.b16 %v3469
    %v3512 = vunpack.c.h.b16 %v3469
    %v3513 = vunpack.c.l.b16 %v3470
    %v3514 = vunpack.c.h.b16 %v3470
    %v3515 = vunpack.c.l.b16 %v3471
    %v3516 = vunpack.c.h.b16 %v3471
    %v3517 = vunpack.c.l.b16 %v3472
    %v3518 = vunpack.c.h.b16 %v3472
    %v3519 = vunpack.c.l.b16 %v3473
    %v3520 = vunpack.c.h.b16 %v3473
    %v3521 = vunpack.c.l.b16 %v3474
    %v3522 = vunpack.c.h.b16 %v3474
    %v3523 = vunpack.c.l.b16 %v3475
    %v3524 = vunpack.c.h.b16 %v3475
    %v3525 = vunpack.c.l.b16 %v3476
    %v3526 = vunpack.c.h.b16 %v3476
    %v3527 = vunpack.c.l.b16 %v3477
    %v3528 = vunpack.c.h.b16 %v3477
    %v3529 = vunpack.c.l.b16 %v3478
    %v3530 = vunpack.c.h.b16 %v3478
    %v3531 = vunpack.c.l.b16 %v3479
    %v3532 = vunpack.c.h.b16 %v3479
    %v3533 = vunpack.c.l.b16 %v3480
    %v3534 = vunpack.c.h.b16 %v3480
    %v3535 = vpack.c.b16 %v3505, %v3503
    %v3536 = vpack.c.b16 %v3506, %v3504
    %v3537 = vpack.c.b16 %v3509, %v3507
    %v3538 = vpack.c.b16 %v3510, %v3508
    %v3539 = vpack.c.b16 %v3513, %v3511
    %v3540 = vpack.c.b16 %v3514, %v3512
    %v3541 = vpack.c.b16 %v3517, %v3515
    %v3542 = vpack.c.b16 %v3518, %v3516
    %v3543 = vpack.c.b16 %v3521, %v3519
    %v3544 = vpack.c.b16 %v3522, %v3520
    %v3545 = vpack.c.b16 %v3525, %v3523
    %v3546 = vpack.c.b16 %v3526, %v3524
    %v3547 = vpack.c.b16 %v3529, %v3527
    %v3548 = vpack.c.b16 %v3530, %v3528
    %v3549 = vpack.c.b16 %v3533, %v3531
    %v3550 = vpack.c.b16 %v3534, %v3532
    %3567 = vmatpush.bf16.msra.mxu0 %v3549
    %3568 = vmatpush.bf16.msra.mxu0 %v3547
    %3569 = vmatpush.bf16.msra.mxu0 %v3545
    %3570 = vmatpush.bf16.msra.mxu0 %v3543
    %3571 = vmatpush.bf16.msra.mxu0 %v3541
    %3572 = vmatpush.bf16.msra.mxu0 %v3539
    %3573 = vmatpush.bf16.msra.mxu0 %v3537
    %3574 = vmatpush.bf16.msra.mxu0 %v3535
    %3575 = vmatmul.bf16.gmra.mxu0 %v3464
    %v3576 = vpop.f32.mrf.mxu0
    %v3577 = vadd.f32 %v3483, %v3576
    %v3578 = vpop.f32.mrf.mxu0
    %3579 = vdwg.mxu0
    %3580 = vmatpush.bf16.msra.mxu0 %v3550
    %3581 = vmatpush.bf16.msra.mxu0 %v3548
    %3582 = vmatpush.bf16.msra.mxu0 %v3546
    %3583 = vmatpush.bf16.msra.mxu0 %v3544
    %3584 = vmatpush.bf16.msra.mxu0 %v3542
    %3585 = vmatpush.bf16.msra.mxu0 %v3540
    %3586 = vmatpush.bf16.msra.mxu0 %v3538
    %3587 = vmatpush.bf16.msra.mxu0 %v3536
    %3588 = vmatmul.bf16.gmra.mxu0 %v3464
    %v3589 = vpop.f32.mrf.mxu0
    %v3590 = vadd.f32 %v3484, %v3589
    %v3591 = vpop.f32.mrf.mxu0
    %3592 = vdwg.mxu0
    %v3593 = vmul.f32 %v3590, 0.5
    %v3594 = vmul.f32 %v3593, 1.442695
    %v3595 = vpow.pop %v3594
    %v3596 = vld [vmem:[%s12] sm:$0xff]
    %v3597 = vmul.f32 %v3595, %v3596
    %v3598 = vadd.f32 %v3577, %v3597
    %3599 = vst [vmem:[%s13] sm:$0xff] %v3577
    %3600 = vst [vmem:[%s14] sm:$0xff] %v3590
    %3601 = vst [vmem:[%s15] sm:$0xff] %v3598
    // Predicated region
    $region66: #{encoder_forward.1} parent=1 // pred_check
      _
    $region67: #{encoder_forward.1} parent=1 // pred_check_branch
      %3603 = sbr.rel (0) target = $region69
    $region68: #{encoder_forward.1} parent=1 // pred_region
      _
    $region69: #{encoder_forward.1} parent=1 // pred_fallthru
      _
    // Predicated region
    $region70: #{encoder_forward.1} parent=1 // pred_check
      _
    $region71: #{encoder_forward.1} parent=1 // pred_check_branch
      %3605 = sbr.rel (0) target = $region73
    $region72: #{encoder_forward.1} parent=1 // pred_region
      _
    $region73: #{encoder_forward.1} parent=1 // pred_fallthru
      _
    // Predicated region
    $region74: #{encoder_forward.1} parent=1 // pred_check
      _
    $region75: #{encoder_forward.1} parent=1 // pred_check_branch
      %3607 = sbr.rel (0) target = $region77
    $region76: #{encoder_forward.1} parent=1 // pred_region
      _
    $region77: #{encoder_forward.1} parent=1 // pred_fallthru
      _
    // Predicated region
    $region78: #{encoder_forward.1} parent=1 // pred_check
      _
    $region79: #{encoder_forward.1} parent=1 // pred_check_branch
      %3609 = sbr.rel (0) target = $region81
    $region80: #{encoder_forward.1} parent=1 // pred_region
      _
    $region81: #{encoder_forward.1} parent=1 // pred_fallthru
      _
    // Predicated region
    $region82: #{encoder_forward.1} parent=1 // pred_check
      _
    $region83: #{encoder_forward.1} parent=1 // pred_check_branch
      %3611 = sbr.rel (0) target = $region85
    $region84: #{encoder_forward.1} parent=1 // pred_region
      _
    $region85: #{encoder_forward.1} parent=1 // pred_fallthru
      _
    // Predicated region
    $region86: #{encoder_forward.1} parent=1 // pred_check
      _
    $region87: #{encoder_forward.1} parent=1 // pred_check_branch
      %3613 = sbr.rel (0) target = $region89
    $region88: #{encoder_forward.1} parent=1 // pred_region
      _
    $region89: #{encoder_forward.1} parent=1 // pred_fallthru
      _
    %3614 = vsyncpa [#allocation3], 1
    %3615 = vsyncpa [#allocation5], 1

</llo_original>
